<compile_context>
chip_gen: v7x
topology: tpu7x:2x2x1
jax: 0.10.0
libtpu: 0.0.40
codegen_flags: <defaults>
</compile_context>

<pallas_src>
import math

import jax
import jax.numpy as jnp
from jax import lax
from jax.experimental import pallas as pl
from jax.experimental.pallas import tpu as pltpu


_COMPILER_PARAMS_CLS = (getattr(pltpu, "CompilerParams", None)
                        or getattr(pltpu, "TPUCompilerParams", None))
# Try single-buffered weight BlockSpecs; flip to False on first failure.
_SINGLE_BUFFER_WEIGHTS = [hasattr(pl, "Buffered")]


# ----------------------------- in-kernel math ------------------------------

def _layernorm(x, g, b, eps=1e-5):
    mu = jnp.mean(x, axis=-1, keepdims=True)
    var = jnp.mean((x - mu) ** 2, axis=-1, keepdims=True)
    return (x - mu) * lax.rsqrt(var + eps) * g + b


def _gelu_tanh(x):
    # tanh-approximate GELU: jnp.tanh lowers to the EUP, freeing VALU slots.
    # Max abs deviation from exact erf-GELU ~3e-3 (inside bf16 matmul noise).
    c = math.sqrt(2.0 / math.pi)
    return 0.5 * x * (1.0 + jnp.tanh(c * (x + 0.044715 * (x * x * x))))


# ------------------------------ block kernel -------------------------------

def block_kernel(x_ref,
                 ln1_g, ln1_b,
                 w_q, b_q, w_k, b_k, w_v, b_v, w_p, b_p,
                 ln2_g, ln2_b, w_fc1, b_fc1, w_fc2, b_fc2,
                 o_ref,
                 xn_scr, k_scr, v_scr):
    """One pre-norm transformer block on one (batch, query-tile) grid cell."""
    n_groups, D, gw = w_q.shape            # gw = heads_per_group * head_dim
    num_heads, N, hd = k_scr.shape
    gs = gw // hd                          # heads per group
    tq = o_ref.shape[1]
    i = pl.program_id(1)

    # ---- once per batch index: cache LN1(x) and K/V projections in VMEM ----
    @pl.when(i == 0)
    def _():
        xn = _layernorm(x_ref[0], ln1_g[...], ln1_b[...]).astype(jnp.bfloat16)
        xn_scr[...] = xn
        for g in range(n_groups):          # static; runs once per batch index
            kg = (jnp.dot(xn, w_k[g], preferred_element_type=jnp.float32)
                  + b_k[g]).astype(jnp.bfloat16)      # (N, gw) wide MXU matmul
            vg = (jnp.dot(xn, w_v[g], preferred_element_type=jnp.float32)
                  + b_v[g]).astype(jnp.bfloat16)
            for j in range(gs):            # per-head split paid once per batch
                k_scr[g * gs + j] = kg[:, j * hd:(j + 1) * hd]
                v_scr[g * gs + j] = vg[:, j * hd:(j + 1) * hd]

    row0 = i * tq
    if tq % 8 == 0:
        row0 = pl.multiple_of(row0, 8)
    x_q = x_ref[0, pl.ds(row0, tq), :]               # (tq, D) f32 residual rows
    xn_q = xn_scr[pl.ds(row0, tq), :]                # (tq, D) bf16 cached LN1

    # ---- attention: fori over head groups, out-proj folded into the loop ----
    def group_body(g, acc):
        qg = (jnp.dot(xn_q, w_q[g], preferred_element_type=jnp.float32)
              + b_q[g]).astype(jnp.bfloat16)         # (tq, gw) wide MXU matmul
        heads = []
        for j in range(gs):                          # static, gs <= 4
            qh = qg[:, j * hd:(j + 1) * hd]          # (tq, hd)
            kh = k_scr[g * gs + j]                   # (N, hd) bf16 (cached)
            vh = v_scr[g * gs + j]                   # (N, hd) bf16 (cached)
            # scores = (q * scale) @ k^T  (scale folded into w_q/b_q on host)
            s = lax.dot_general(qh, kh, (((1,), (1,)), ((), ())),
                                preferred_element_type=jnp.float32)  # (tq, N)
            s = s - jnp.max(s, axis=-1, keepdims=True)
            p = jnp.exp(s)
            p = p * pl.reciprocal(jnp.sum(p, axis=-1, keepdims=True),
                                  approx=True)
            heads.append(jnp.dot(p.astype(jnp.bfloat16), vh,
                                 preferred_element_type=jnp.float32))  # (tq,hd)
        ph = heads[0] if gs == 1 else jnp.concatenate(heads, axis=-1)  # (tq,gw)
        # concat_h(head_h) @ Wp  ==  sum_groups ph_group @ Wp[group]
        return acc + jnp.dot(ph.astype(jnp.bfloat16), w_p[g],
                             preferred_element_type=jnp.float32)       # (tq,D)

    attn = lax.fori_loop(0, n_groups, group_body,
                         jnp.zeros((tq, D), jnp.float32))
    x1 = x_q + attn + b_p[...]                       # (tq, D) f32 residual

    # ---- MLP branch: x + fc2(gelu(fc1(LN2(x)))) ----
    xn2 = _layernorm(x1, ln2_g[...], ln2_b[...]).astype(jnp.bfloat16)
    h1 = jnp.dot(xn2, w_fc1[...], preferred_element_type=jnp.float32) + b_fc1[...]
    h1 = _gelu_tanh(h1)
    h2 = jnp.dot(h1.astype(jnp.bfloat16), w_fc2[...],
                 preferred_element_type=jnp.float32) + b_fc2[...]

    o_ref[0] = (x1 + h2).astype(o_ref.dtype)


# ------------------------------- wrappers -----------------------------------

def _pick_query_tile(n):
    for t in (256, 128, 64, 32, 16, 8):
        if n % t == 0:
            return t
    return n


def _head_group_size(num_heads, head_dim):
    # Widest group (<= ~256 output lanes) dividing num_heads so the q/k/v and
    # out-proj matmuls use >=128 of the MXU width whenever the dims allow it.
    target = max(1, 256 // max(head_dim, 1))
    best = 1
    for g in range(1, num_heads + 1):
        if num_heads % g == 0 and g <= target:
            best = g
    return best


def _device_vmem_cap_bytes():
    try:
        return int(pltpu.get_tpu_info().vmem_capacity_bytes)
    except Exception:
        return 128 << 20


def _vmem_limit_bytes(N, D, hidden, tq, gw, num_heads, hd, single_buf_weights):
    bf, f4 = 2, 4
    hd_pad = ((hd + 127) // 128) * 128     # lane padding of per-head K/V cache
    # matmul weights (bf16) + biases / LN params (f32)
    w = ((3 * D * D + D * D + D * hidden + hidden * D) * bf
         + (3 * D + D + hidden + 5 * D) * f4)
    w *= 1 if single_buf_weights else 2
    # persistent scratch: cached LN1(x), K, V
    scr = N * D * bf + 2 * num_heads * N * hd_pad * bf
    # pipeline buffers: x block (full seq, double-buffered) + output tiles
    act = 2 * N * D * f4 + 2 * tq * D * f4
    # per-tile temporaries: q group, scores (f32 + bf16), head outs,
    # attention accumulator + residual, MLP hidden
    tmp = (tq * gw * (f4 + bf) + tq * N * (f4 + bf) + tq * gw * f4
           + 2 * tq * D * f4 + tq * hidden * (f4 + bf))
    est = int(1.25 * (w + scr + act + tmp)) + (4 << 20)
    cap = int(0.85 * _device_vmem_cap_bytes())
    return max(min(est, cap), min(32 << 20, cap))


def prepare_block_params(p, num_heads):
    """Torch-layout f32 params -> kernel layout: head-group bf16 matmul
    weights, f32 biases / LN params, softmax scale folded into q projection."""
    D = p["w_qkv"].shape[0]
    hd = D // num_heads
    gs = _head_group_size(num_heads, hd)
    n_groups = num_heads // gs
    gw = gs * hd
    scale = float(hd) ** -0.5
    bf16, f32 = jnp.bfloat16, jnp.float32

    def grouped_w(w):   # (D, D) -> (n_groups, D, gw)
        return w.reshape(D, n_groups, gw).transpose(1, 0, 2)

    def grouped_b(b):   # (1, D) -> (n_groups, 1, gw)
        return b.reshape(n_groups, 1, gw)

    w_qkv, b_qkv = p["w_qkv"], p["b_qkv"]
    wq, wk, wv = w_qkv[:, :D], w_qkv[:, D:2 * D], w_qkv[:, 2 * D:]
    bq, bk, bv = b_qkv[:, :D], b_qkv[:, D:2 * D], b_qkv[:, 2 * D:]
    return dict(
        ln1_g=p["ln1_g"].astype(f32), ln1_b=p["ln1_b"].astype(f32),
        w_q=(grouped_w(wq) * scale).astype(bf16),
        b_q=(grouped_b(bq) * scale).astype(f32),
        w_k=grouped_w(wk).astype(bf16), b_k=grouped_b(bk).astype(f32),
        w_v=grouped_w(wv).astype(bf16), b_v=grouped_b(bv).astype(f32),
        w_p=p["w_proj"].reshape(n_groups, gw, D).astype(bf16),
        b_proj=p["b_proj"].astype(f32),
        ln2_g=p["ln2_g"].astype(f32), ln2_b=p["ln2_b"].astype(f32),
        w_fc1=p["w_fc1"].astype(bf16), b_fc1=p["b_fc1"].astype(f32),
        w_fc2=p["w_fc2"].astype(bf16), b_fc2=p["b_fc2"].astype(f32),
    )


def transformer_block(x, kp, num_heads):
    B, N, D = x.shape
    hidden = kp["w_fc1"].shape[1]
    n_groups, _, gw = kp["w_q"].shape
    hd = D // num_heads
    tq = _pick_query_tile(N)
    n_q = N // tq

    def build_and_run(single_buf):
        buf_kw = {"pipeline_mode": pl.Buffered(1)} if single_buf else {}

        def const_spec(shape):
            zeros = (0,) * len(shape)
            return pl.BlockSpec(shape, lambda b, i, z=zeros: z, **buf_kw)

        in_specs = [
            pl.BlockSpec((1, N, D), lambda b, i: (b, 0, 0)),                 # x
            const_spec((1, D)), const_spec((1, D)),                          # ln1
            const_spec((n_groups, D, gw)), const_spec((n_groups, 1, gw)),    # q
            const_spec((n_groups, D, gw)), const_spec((n_groups, 1, gw)),    # k
            const_spec((n_groups, D, gw)), const_spec((n_groups, 1, gw)),    # v
            const_spec((n_groups, gw, D)), const_spec((1, D)),               # proj
            const_spec((1, D)), const_spec((1, D)),                          # ln2
            const_spec((D, hidden)), const_spec((1, hidden)),                # fc1
            const_spec((hidden, D)), const_spec((1, D)),                     # fc2
        ]
        scratch_shapes = [
            pltpu.VMEM((N, D), jnp.bfloat16),              # cached LN1(x)
            pltpu.VMEM((num_heads, N, hd), jnp.bfloat16),  # cached K per head
            pltpu.VMEM((num_heads, N, hd), jnp.bfloat16),  # cached V per head
        ]
        return pl.pallas_call(
            block_kernel,
            out_shape=jax.ShapeDtypeStruct((B, N, D), x.dtype),
            grid=(B, n_q),
            in_specs=in_specs,
            out_specs=pl.BlockSpec((1, tq, D), lambda b, i: (b, i, 0)),
            scratch_shapes=scratch_shapes,
            compiler_params=_COMPILER_PARAMS_CLS(
                # q-tile axis is "arbitrary" so the K/V scratch persists.
                dimension_semantics=("parallel", "arbitrary"),
                vmem_limit_bytes=_vmem_limit_bytes(
                    N, D, hidden, tq, gw, num_heads, hd, single_buf),
            ),
        )(x, kp["ln1_g"], kp["ln1_b"],
          kp["w_q"], kp["b_q"], kp["w_k"], kp["b_k"], kp["w_v"], kp["b_v"],
          kp["w_p"], kp["b_proj"],
          kp["ln2_g"], kp["ln2_b"],
          kp["w_fc1"], kp["b_fc1"], kp["w_fc2"], kp["b_fc2"])

    if _SINGLE_BUFFER_WEIGHTS[0]:
        try:
            return build_and_run(True)
        except Exception:
            _SINGLE_BUFFER_WEIGHTS[0] = False   # older JAX: fall back cleanly
    return build_and_run(False)


def transformer_forward(x, blocks, num_heads):
    prepped = [prepare_block_params(p, num_heads) for p in blocks]
    for kp in prepped:
        x = transformer_block(x, kp, num_heads)
    return x


def init_params(key, dim, depth, num_heads, mlp_ratio):
    hidden = int(dim * mlp_ratio)
    blocks = []
    for d in range(depth):
        k = jax.random.fold_in(key, d)
        k1, k2, k3, k4 = jax.random.split(k, 4)
        blocks.append(dict(
            ln1_g=jnp.ones((1, dim), jnp.float32),
            ln1_b=jnp.zeros((1, dim), jnp.float32),
            w_qkv=0.02 * jax.random.normal(k1, (dim, 3 * dim), jnp.float32),
            b_qkv=jnp.zeros((1, 3 * dim), jnp.float32),
            w_proj=0.02 * jax.random.normal(k2, (dim, dim), jnp.float32),
            b_proj=jnp.zeros((1, dim), jnp.float32),
            ln2_g=jnp.ones((1, dim), jnp.float32),
            ln2_b=jnp.zeros((1, dim), jnp.float32),
            w_fc1=0.02 * jax.random.normal(k3, (dim, hidden), jnp.float32),
            b_fc1=jnp.zeros((1, hidden), jnp.float32),
            w_fc2=0.02 * jax.random.normal(k4, (hidden, dim), jnp.float32),
            b_fc2=jnp.zeros((1, dim), jnp.float32),
        ))
    return blocks


if __name__ == "__main__":
    B, N, D = 2, 8, 32
    depth, num_heads, mlp_ratio = 2, 4, 4.0

    key = jax.random.PRNGKey(0)
    kx, kp = jax.random.split(key)
    x = jax.random.normal(kx, (B, N, D), jnp.float32)
    blocks = init_params(kp, D, depth, num_heads, mlp_ratio)

    out = transformer_forward(x, blocks, num_heads)
    out = jax.block_until_ready(out)
    assert out.shape == (B, N, D)
    assert bool(jnp.all(jnp.isfinite(out)))
    print("KERNEL_OK")
</pallas_src>

<mosaic_0001>
module attributes {stable_mosaic.version = 11 : i64} {
  func.func @block_kernel(%arg0: i32, %arg1: i32, %arg2: memref<1x8x32xf32, #tpu.memory_space<vmem>>, %arg3: memref<1x32xf32, #tpu.memory_space<vmem>>, %arg4: memref<1x32xf32, #tpu.memory_space<vmem>>, %arg5: memref<1x32x32xbf16, #tpu.memory_space<vmem>>, %arg6: memref<1x1x32xf32, #tpu.memory_space<vmem>>, %arg7: memref<1x32x32xbf16, #tpu.memory_space<vmem>>, %arg8: memref<1x1x32xf32, #tpu.memory_space<vmem>>, %arg9: memref<1x32x32xbf16, #tpu.memory_space<vmem>>, %arg10: memref<1x1x32xf32, #tpu.memory_space<vmem>>, %arg11: memref<1x32x32xbf16, #tpu.memory_space<vmem>>, %arg12: memref<1x32xf32, #tpu.memory_space<vmem>>, %arg13: memref<1x32xf32, #tpu.memory_space<vmem>>, %arg14: memref<1x32xf32, #tpu.memory_space<vmem>>, %arg15: memref<32x128xbf16, #tpu.memory_space<vmem>>, %arg16: memref<1x128xf32, #tpu.memory_space<vmem>>, %arg17: memref<128x32xbf16, #tpu.memory_space<vmem>>, %arg18: memref<1x32xf32, #tpu.memory_space<vmem>>, %arg19: memref<1x8x32xf32, #tpu.memory_space<vmem>>, %arg20: memref<8x32xbf16, #tpu.memory_space<vmem>>, %arg21: memref<4x8x8xbf16, #tpu.memory_space<vmem>>, %arg22: memref<4x8x8xbf16, #tpu.memory_space<vmem>>) attributes {dimension_semantics = [#tpu.dimension_semantics<parallel>, #tpu.dimension_semantics<arbitrary>], iteration_bounds = array<i64: 2, 1>, scalar_prefetch = 0 : i64, scratch_operands = 3 : i64, tpu.core_type = #tpu.core_type<tc>, window_params = [{transform_indices = @transform_0, window_bounds = array<i64: 1, 8, 32>}, {pipeline_mode = #tpu.pipeline_mode<synchronous>, transform_indices = @transform_1, window_bounds = array<i64: 1, 32>}, {pipeline_mode = #tpu.pipeline_mode<synchronous>, transform_indices = @transform_2, window_bounds = array<i64: 1, 32>}, {pipeline_mode = #tpu.pipeline_mode<synchronous>, transform_indices = @transform_3, window_bounds = array<i64: 1, 32, 32>}, {pipeline_mode = #tpu.pipeline_mode<synchronous>, transform_indices = @transform_4, window_bounds = array<i64: 1, 1, 32>}, {pipeline_mode = #tpu.pipeline_mode<synchronous>, transform_indices = @transform_5, window_bounds = array<i64: 1, 32, 32>}, {pipeline_mode = #tpu.pipeline_mode<synchronous>, transform_indices = @transform_6, window_bounds = array<i64: 1, 1, 32>}, {pipeline_mode = #tpu.pipeline_mode<synchronous>, transform_indices = @transform_7, window_bounds = array<i64: 1, 32, 32>}, {pipeline_mode = #tpu.pipeline_mode<synchronous>, transform_indices = @transform_8, window_bounds = array<i64: 1, 1, 32>}, {pipeline_mode = #tpu.pipeline_mode<synchronous>, transform_indices = @transform_9, window_bounds = array<i64: 1, 32, 32>}, {pipeline_mode = #tpu.pipeline_mode<synchronous>, transform_indices = @transform_10, window_bounds = array<i64: 1, 32>}, {pipeline_mode = #tpu.pipeline_mode<synchronous>, transform_indices = @transform_11, window_bounds = array<i64: 1, 32>}, {pipeline_mode = #tpu.pipeline_mode<synchronous>, transform_indices = @transform_12, window_bounds = array<i64: 1, 32>}, {pipeline_mode = #tpu.pipeline_mode<synchronous>, transform_indices = @transform_13, window_bounds = array<i64: 32, 128>}, {pipeline_mode = #tpu.pipeline_mode<synchronous>, transform_indices = @transform_14, window_bounds = array<i64: 1, 128>}, {pipeline_mode = #tpu.pipeline_mode<synchronous>, transform_indices = @transform_15, window_bounds = array<i64: 128, 32>}, {pipeline_mode = #tpu.pipeline_mode<synchronous>, transform_indices = @transform_16, window_bounds = array<i64: 1, 32>}, {transform_indices = @transform_17, window_bounds = array<i64: 1, 8, 32>}]} {
    %c0_i32 = arith.constant 0 : i32
    %0 = arith.cmpi eq, %arg1, %c0_i32 : i32
    %1 = arith.extui %0 : i1 to i32
    %c0_i32_0 = arith.constant 0 : i32
    %2 = arith.cmpi ne, %1, %c0_i32_0 : i32
    scf.if %2 {
      %c0_85 = arith.constant 0 : index
      %c0_86 = arith.constant 0 : index
      %c0_87 = arith.constant 0 : index
      %181 = vector.load %arg2[%c0_85, %c0_86, %c0_87] : memref<1x8x32xf32, #tpu.memory_space<vmem>>, vector<1x8x32xf32>
      %182 = vector.shape_cast %181 : vector<1x8x32xf32> to vector<8x32xf32>
      %c0_88 = arith.constant 0 : index
      %c0_89 = arith.constant 0 : index
      %183 = vector.load %arg3[%c0_88, %c0_89] : memref<1x32xf32, #tpu.memory_space<vmem>>, vector<1x32xf32>
      %c0_90 = arith.constant 0 : index
      %c0_91 = arith.constant 0 : index
      %184 = vector.load %arg4[%c0_90, %c0_91] : memref<1x32xf32, #tpu.memory_space<vmem>>, vector<1x32xf32>
      %cst_92 = arith.constant dense<0.000000e+00> : vector<8xf32>
      %185 = vector.multi_reduction <add>, %182, %cst_92 [1] : vector<8x32xf32> to vector<8xf32>
      %186 = vector.shape_cast %185 : vector<8xf32> to vector<8x1xf32>
      %cst_93 = arith.constant 3.200000e+01 : f32
      %187 = vector.broadcast %cst_93 : f32 to vector<8x1xf32>
      %188 = arith.divf %186, %187 : vector<8x1xf32>
      %189 = vector.broadcast %188 : vector<8x1xf32> to vector<8x32xf32>
      %190 = arith.subf %182, %189 : vector<8x32xf32>
      %191 = arith.mulf %190, %190 : vector<8x32xf32>
      %cst_94 = arith.constant dense<0.000000e+00> : vector<8xf32>
      %192 = vector.multi_reduction <add>, %191, %cst_94 [1] : vector<8x32xf32> to vector<8xf32>
      %193 = vector.shape_cast %192 : vector<8xf32> to vector<8x1xf32>
      %cst_95 = arith.constant 3.200000e+01 : f32
      %194 = vector.broadcast %cst_95 : f32 to vector<8x1xf32>
      %195 = arith.divf %193, %194 : vector<8x1xf32>
      %196 = vector.broadcast %188 : vector<8x1xf32> to vector<8x32xf32>
      %197 = arith.subf %182, %196 : vector<8x32xf32>
      %cst_96 = arith.constant 9.99999974E-6 : f32
      %198 = vector.broadcast %cst_96 : f32 to vector<8x1xf32>
      %199 = arith.addf %195, %198 : vector<8x1xf32>
      %200 = math.rsqrt %199 : vector<8x1xf32>
      %201 = vector.broadcast %200 : vector<8x1xf32> to vector<8x32xf32>
      %202 = arith.mulf %197, %201 : vector<8x32xf32>
      %203 = vector.broadcast %183 : vector<1x32xf32> to vector<8x32xf32>
      %204 = arith.mulf %202, %203 : vector<8x32xf32>
      %205 = vector.broadcast %184 : vector<1x32xf32> to vector<8x32xf32>
      %206 = arith.addf %204, %205 : vector<8x32xf32>
      %207 = arith.truncf %206 : vector<8x32xf32> to vector<8x32xbf16>
      %c0_97 = arith.constant 0 : index
      %c0_98 = arith.constant 0 : index
      %208 = vector.load %arg20[%c0_97, %c0_98] : memref<8x32xbf16, #tpu.memory_space<vmem>>, vector<8x32xbf16>
      tpu.vector_store %arg20[%c0_97, %c0_98], %207 {strides = array<i32>} : memref<8x32xbf16, #tpu.memory_space<vmem>>, vector<8x32xbf16>,
      %c0_99 = arith.constant 0 : index
      %c0_100 = arith.constant 0 : index
      %c0_101 = arith.constant 0 : index
      %209 = vector.load %arg7[%c0_99, %c0_100, %c0_101] : memref<1x32x32xbf16, #tpu.memory_space<vmem>>, vector<1x32x32xbf16>
      %210 = vector.shape_cast %209 : vector<1x32x32xbf16> to vector<32x32xbf16>
      %cst_102 = arith.constant dense<0.000000e+00> : vector<8x32xf32>
      %211 = tpu.matmul %207, %210, %cst_102 {dimension_numbers = #tpu.dot_dimension_numbers<[1], [0], [0], [1], [0, 0, 1, 1], [], []>} : vector<8x32xbf16>, vector<32x32xbf16>, vector<8x32xf32> -> vector<8x32xf32>
      %c0_103 = arith.constant 0 : index
      %c0_104 = arith.constant 0 : index
      %c0_105 = arith.constant 0 : index
      %212 = vector.load %arg8[%c0_103, %c0_104, %c0_105] : memref<1x1x32xf32, #tpu.memory_space<vmem>>, vector<1x1x32xf32>
      %213 = vector.shape_cast %212 : vector<1x1x32xf32> to vector<1x32xf32>
      %214 = vector.broadcast %213 : vector<1x32xf32> to vector<8x32xf32>
      %215 = arith.addf %211, %214 : vector<8x32xf32>
      %216 = arith.truncf %215 : vector<8x32xf32> to vector<8x32xbf16>
      %c0_106 = arith.constant 0 : index
      %c0_107 = arith.constant 0 : index
      %c0_108 = arith.constant 0 : index
      %217 = vector.load %arg9[%c0_106, %c0_107, %c0_108] : memref<1x32x32xbf16, #tpu.memory_space<vmem>>, vector<1x32x32xbf16>
      %218 = vector.shape_cast %217 : vector<1x32x32xbf16> to vector<32x32xbf16>
      %cst_109 = arith.constant dense<0.000000e+00> : vector<8x32xf32>
      %219 = tpu.matmul %207, %218, %cst_109 {dimension_numbers = #tpu.dot_dimension_numbers<[1], [0], [0], [1], [0, 0, 1, 1], [], []>} : vector<8x32xbf16>, vector<32x32xbf16>, vector<8x32xf32> -> vector<8x32xf32>
      %c0_110 = arith.constant 0 : index
      %c0_111 = arith.constant 0 : index
      %c0_112 = arith.constant 0 : index
      %220 = vector.load %arg10[%c0_110, %c0_111, %c0_112] : memref<1x1x32xf32, #tpu.memory_space<vmem>>, vector<1x1x32xf32>
      %221 = vector.shape_cast %220 : vector<1x1x32xf32> to vector<1x32xf32>
      %222 = vector.broadcast %221 : vector<1x32xf32> to vector<8x32xf32>
      %223 = arith.addf %219, %222 : vector<8x32xf32>
      %224 = arith.truncf %223 : vector<8x32xf32> to vector<8x32xbf16>
      %225 = vector.extract_strided_slice %216 {offsets = [0, 0], sizes = [8, 8], strides = [1, 1]} : vector<8x32xbf16> to vector<8x8xbf16>
      %c0_113 = arith.constant 0 : index
      %c0_114 = arith.constant 0 : index
      %c0_115 = arith.constant 0 : index
      %226 = vector.load %arg21[%c0_113, %c0_114, %c0_115] : memref<4x8x8xbf16, #tpu.memory_space<vmem>>, vector<1x8x8xbf16>
      %227 = vector.shape_cast %226 : vector<1x8x8xbf16> to vector<8x8xbf16>
      %228 = vector.shape_cast %225 : vector<8x8xbf16> to vector<1x8x8xbf16>
      tpu.vector_store %arg21[%c0_113, %c0_114, %c0_115], %228 {strides = array<i32>} : memref<4x8x8xbf16, #tpu.memory_space<vmem>>, vector<1x8x8xbf16>,
      %229 = vector.extract_strided_slice %224 {offsets = [0, 0], sizes = [8, 8], strides = [1, 1]} : vector<8x32xbf16> to vector<8x8xbf16>
      %c0_116 = arith.constant 0 : index
      %c0_117 = arith.constant 0 : index
      %c0_118 = arith.constant 0 : index
      %230 = vector.load %arg22[%c0_116, %c0_117, %c0_118] : memref<4x8x8xbf16, #tpu.memory_space<vmem>>, vector<1x8x8xbf16>
      %231 = vector.shape_cast %230 : vector<1x8x8xbf16> to vector<8x8xbf16>
      %232 = vector.shape_cast %229 : vector<8x8xbf16> to vector<1x8x8xbf16>
      tpu.vector_store %arg22[%c0_116, %c0_117, %c0_118], %232 {strides = array<i32>} : memref<4x8x8xbf16, #tpu.memory_space<vmem>>, vector<1x8x8xbf16>,
      %233 = vector.extract_strided_slice %216 {offsets = [0, 8], sizes = [8, 8], strides = [1, 1]} : vector<8x32xbf16> to vector<8x8xbf16>
      %c1 = arith.constant 1 : index
      %c0_119 = arith.constant 0 : index
      %c0_120 = arith.constant 0 : index
      %234 = vector.load %arg21[%c1, %c0_119, %c0_120] : memref<4x8x8xbf16, #tpu.memory_space<vmem>>, vector<1x8x8xbf16>
      %235 = vector.shape_cast %234 : vector<1x8x8xbf16> to vector<8x8xbf16>
      %236 = vector.shape_cast %233 : vector<8x8xbf16> to vector<1x8x8xbf16>
      tpu.vector_store %arg21[%c1, %c0_119, %c0_120], %236 {strides = array<i32>} : memref<4x8x8xbf16, #tpu.memory_space<vmem>>, vector<1x8x8xbf16>,
      %237 = vector.extract_strided_slice %224 {offsets = [0, 8], sizes = [8, 8], strides = [1, 1]} : vector<8x32xbf16> to vector<8x8xbf16>
      %c1_121 = arith.constant 1 : index
      %c0_122 = arith.constant 0 : index
      %c0_123 = arith.constant 0 : index
      %238 = vector.load %arg22[%c1_121, %c0_122, %c0_123] : memref<4x8x8xbf16, #tpu.memory_space<vmem>>, vector<1x8x8xbf16>
      %239 = vector.shape_cast %238 : vector<1x8x8xbf16> to vector<8x8xbf16>
      %240 = vector.shape_cast %237 : vector<8x8xbf16> to vector<1x8x8xbf16>
      tpu.vector_store %arg22[%c1_121, %c0_122, %c0_123], %240 {strides = array<i32>} : memref<4x8x8xbf16, #tpu.memory_space<vmem>>, vector<1x8x8xbf16>,
      %241 = vector.extract_strided_slice %216 {offsets = [0, 16], sizes = [8, 8], strides = [1, 1]} : vector<8x32xbf16> to vector<8x8xbf16>
      %c2 = arith.constant 2 : index
      %c0_124 = arith.constant 0 : index
      %c0_125 = arith.constant 0 : index
      %242 = vector.load %arg21[%c2, %c0_124, %c0_125] : memref<4x8x8xbf16, #tpu.memory_space<vmem>>, vector<1x8x8xbf16>
      %243 = vector.shape_cast %242 : vector<1x8x8xbf16> to vector<8x8xbf16>
      %244 = vector.shape_cast %241 : vector<8x8xbf16> to vector<1x8x8xbf16>
      tpu.vector_store %arg21[%c2, %c0_124, %c0_125], %244 {strides = array<i32>} : memref<4x8x8xbf16, #tpu.memory_space<vmem>>, vector<1x8x8xbf16>,
      %245 = vector.extract_strided_slice %224 {offsets = [0, 16], sizes = [8, 8], strides = [1, 1]} : vector<8x32xbf16> to vector<8x8xbf16>
      %c2_126 = arith.constant 2 : index
      %c0_127 = arith.constant 0 : index
      %c0_128 = arith.constant 0 : index
      %246 = vector.load %arg22[%c2_126, %c0_127, %c0_128] : memref<4x8x8xbf16, #tpu.memory_space<vmem>>, vector<1x8x8xbf16>
      %247 = vector.shape_cast %246 : vector<1x8x8xbf16> to vector<8x8xbf16>
      %248 = vector.shape_cast %245 : vector<8x8xbf16> to vector<1x8x8xbf16>
      tpu.vector_store %arg22[%c2_126, %c0_127, %c0_128], %248 {strides = array<i32>} : memref<4x8x8xbf16, #tpu.memory_space<vmem>>, vector<1x8x8xbf16>,
      %249 = vector.extract_strided_slice %216 {offsets = [0, 24], sizes = [8, 8], strides = [1, 1]} : vector<8x32xbf16> to vector<8x8xbf16>
      %c3 = arith.constant 3 : index
      %c0_129 = arith.constant 0 : index
      %c0_130 = arith.constant 0 : index
      %250 = vector.load %arg21[%c3, %c0_129, %c0_130] : memref<4x8x8xbf16, #tpu.memory_space<vmem>>, vector<1x8x8xbf16>
      %251 = vector.shape_cast %250 : vector<1x8x8xbf16> to vector<8x8xbf16>
      %252 = vector.shape_cast %249 : vector<8x8xbf16> to vector<1x8x8xbf16>
      tpu.vector_store %arg21[%c3, %c0_129, %c0_130], %252 {strides = array<i32>} : memref<4x8x8xbf16, #tpu.memory_space<vmem>>, vector<1x8x8xbf16>,
      %253 = vector.extract_strided_slice %224 {offsets = [0, 24], sizes = [8, 8], strides = [1, 1]} : vector<8x32xbf16> to vector<8x8xbf16>
      %c3_131 = arith.constant 3 : index
      %c0_132 = arith.constant 0 : index
      %c0_133 = arith.constant 0 : index
      %254 = vector.load %arg22[%c3_131, %c0_132, %c0_133] : memref<4x8x8xbf16, #tpu.memory_space<vmem>>, vector<1x8x8xbf16>
      %255 = vector.shape_cast %254 : vector<1x8x8xbf16> to vector<8x8xbf16>
      %256 = vector.shape_cast %253 : vector<8x8xbf16> to vector<1x8x8xbf16>
      tpu.vector_store %arg22[%c3_131, %c0_132, %c0_133], %256 {strides = array<i32>} : memref<4x8x8xbf16, #tpu.memory_space<vmem>>, vector<1x8x8xbf16>,
    } else {
    }
    %c8_i32 = arith.constant 8 : i32
    %3 = arith.muli %arg1, %c8_i32 : i32
    %4 = tpu.assume_multiple %3, 8 : i32
    %c0 = arith.constant 0 : index
    %5 = arith.index_cast %4 : i32 to index
    %c0_1 = arith.constant 0 : index
    %6 = vector.load %arg2[%c0, %5, %c0_1] : memref<1x8x32xf32, #tpu.memory_space<vmem>>, vector<1x8x32xf32>
    %7 = vector.shape_cast %6 : vector<1x8x32xf32> to vector<8x32xf32>
    %8 = arith.index_cast %4 : i32 to index
    %c0_2 = arith.constant 0 : index
    %9 = vector.load %arg20[%8, %c0_2] : memref<8x32xbf16, #tpu.memory_space<vmem>>, vector<8x32xbf16>
    %cst = arith.constant 0.000000e+00 : f32
    %10 = vector.broadcast %cst : f32 to vector<8x32xf32>
    %c0_i32_3 = arith.constant 0 : i32
    %11 = arith.index_cast %c0_i32_3 : i32 to index
    %c0_4 = arith.constant 0 : index
    %c0_5 = arith.constant 0 : index
    %12 = vector.load %arg5[%11, %c0_4, %c0_5] : memref<1x32x32xbf16, #tpu.memory_space<vmem>>, vector<1x32x32xbf16>
    %13 = vector.shape_cast %12 : vector<1x32x32xbf16> to vector<32x32xbf16>
    %cst_6 = arith.constant dense<0.000000e+00> : vector<8x32xf32>
    %14 = tpu.matmul %9, %13, %cst_6 {dimension_numbers = #tpu.dot_dimension_numbers<[1], [0], [0], [1], [0, 0, 1, 1], [], []>} : vector<8x32xbf16>, vector<32x32xbf16>, vector<8x32xf32> -> vector<8x32xf32>
    %15 = arith.index_cast %c0_i32_3 : i32 to index
    %c0_7 = arith.constant 0 : index
    %c0_8 = arith.constant 0 : index
    %16 = vector.load %arg6[%15, %c0_7, %c0_8] : memref<1x1x32xf32, #tpu.memory_space<vmem>>, vector<1x1x32xf32>
    %17 = vector.shape_cast %16 : vector<1x1x32xf32> to vector<1x32xf32>
    %18 = vector.broadcast %17 : vector<1x32xf32> to vector<8x32xf32>
    %19 = arith.addf %14, %18 : vector<8x32xf32>
    %20 = arith.truncf %19 : vector<8x32xf32> to vector<8x32xbf16>
    %21 = vector.extract_strided_slice %20 {offsets = [0, 0], sizes = [8, 8], strides = [1, 1]} : vector<8x32xbf16> to vector<8x8xbf16>
    %c4_i32 = arith.constant 4 : i32
    %22 = arith.muli %c0_i32_3, %c4_i32 : i32
    %c0_i32_9 = arith.constant 0 : i32
    %23 = arith.addi %22, %c0_i32_9 : i32
    %24 = arith.index_cast %23 : i32 to index
    %c0_10 = arith.constant 0 : index
    %c0_11 = arith.constant 0 : index
    %25 = vector.load %arg21[%24, %c0_10, %c0_11] : memref<4x8x8xbf16, #tpu.memory_space<vmem>>, vector<1x8x8xbf16>
    %26 = vector.shape_cast %25 : vector<1x8x8xbf16> to vector<8x8xbf16>
    %c4_i32_12 = arith.constant 4 : i32
    %27 = arith.muli %c0_i32_3, %c4_i32_12 : i32
    %c0_i32_13 = arith.constant 0 : i32
    %28 = arith.addi %27, %c0_i32_13 : i32
    %29 = arith.index_cast %28 : i32 to index
    %c0_14 = arith.constant 0 : index
    %c0_15 = arith.constant 0 : index
    %30 = vector.load %arg22[%29, %c0_14, %c0_15] : memref<4x8x8xbf16, #tpu.memory_space<vmem>>, vector<1x8x8xbf16>
    %31 = vector.shape_cast %30 : vector<1x8x8xbf16> to vector<8x8xbf16>
    %cst_16 = arith.constant dense<0.000000e+00> : vector<8x8xf32>
    %32 = tpu.matmul %21, %26, %cst_16 {dimension_numbers = #tpu.dot_dimension_numbers<[1], [1], [0], [0], [0, 0, 1, 0], [], []>} : vector<8x8xbf16>, vector<8x8xbf16>, vector<8x8xf32> -> vector<8x8xf32>
    %cst_17 = arith.constant dense<0xFF800000> : vector<8xf32>
    %33 = vector.multi_reduction <maximumf>, %32, %cst_17 [1] : vector<8x8xf32> to vector<8xf32>
    %34 = vector.shape_cast %33 : vector<8xf32> to vector<8x1xf32>
    %35 = vector.broadcast %34 : vector<8x1xf32> to vector<8x8xf32>
    %36 = arith.subf %32, %35 : vector<8x8xf32>
    %37 = math.exp %36 : vector<8x8xf32>
    %cst_18 = arith.constant dense<0.000000e+00> : vector<8xf32>
    %38 = vector.multi_reduction <add>, %37, %cst_18 [1] : vector<8x8xf32> to vector<8xf32>
    %39 = vector.shape_cast %38 : vector<8xf32> to vector<8x1xf32>
    %40 = tpu.reciprocal %39 {approx = true} : vector<8x1xf32> -> vector<8x1xf32>
    %41 = vector.broadcast %40 : vector<8x1xf32> to vector<8x8xf32>
    %42 = arith.mulf %37, %41 : vector<8x8xf32>
    %43 = arith.truncf %42 : vector<8x8xf32> to vector<8x8xbf16>
    %cst_19 = arith.constant dense<0.000000e+00> : vector<8x8xf32>
    %44 = tpu.matmul %43, %31, %cst_19 {dimension_numbers = #tpu.dot_dimension_numbers<[1], [0], [0], [1], [0, 0, 1, 1], [], []>} : vector<8x8xbf16>, vector<8x8xbf16>, vector<8x8xf32> -> vector<8x8xf32>
    %45 = vector.extract_strided_slice %20 {offsets = [0, 8], sizes = [8, 8], strides = [1, 1]} : vector<8x32xbf16> to vector<8x8xbf16>
    %c4_i32_20 = arith.constant 4 : i32
    %46 = arith.muli %c0_i32_3, %c4_i32_20 : i32
    %c1_i32 = arith.constant 1 : i32
    %47 = arith.addi %46, %c1_i32 : i32
    %48 = arith.index_cast %47 : i32 to index
    %c0_21 = arith.constant 0 : index
    %c0_22 = arith.constant 0 : index
    %49 = vector.load %arg21[%48, %c0_21, %c0_22] : memref<4x8x8xbf16, #tpu.memory_space<vmem>>, vector<1x8x8xbf16>
    %50 = vector.shape_cast %49 : vector<1x8x8xbf16> to vector<8x8xbf16>
    %c4_i32_23 = arith.constant 4 : i32
    %51 = arith.muli %c0_i32_3, %c4_i32_23 : i32
    %c1_i32_24 = arith.constant 1 : i32
    %52 = arith.addi %51, %c1_i32_24 : i32
    %53 = arith.index_cast %52 : i32 to index
    %c0_25 = arith.constant 0 : index
    %c0_26 = arith.constant 0 : index
    %54 = vector.load %arg22[%53, %c0_25, %c0_26] : memref<4x8x8xbf16, #tpu.memory_space<vmem>>, vector<1x8x8xbf16>
    %55 = vector.shape_cast %54 : vector<1x8x8xbf16> to vector<8x8xbf16>
    %cst_27 = arith.constant dense<0.000000e+00> : vector<8x8xf32>
    %56 = tpu.matmul %45, %50, %cst_27 {dimension_numbers = #tpu.dot_dimension_numbers<[1], [1], [0], [0], [0, 0, 1, 0], [], []>} : vector<8x8xbf16>, vector<8x8xbf16>, vector<8x8xf32> -> vector<8x8xf32>
    %cst_28 = arith.constant dense<0xFF800000> : vector<8xf32>
    %57 = vector.multi_reduction <maximumf>, %56, %cst_28 [1] : vector<8x8xf32> to vector<8xf32>
    %58 = vector.shape_cast %57 : vector<8xf32> to vector<8x1xf32>
    %59 = vector.broadcast %58 : vector<8x1xf32> to vector<8x8xf32>
    %60 = arith.subf %56, %59 : vector<8x8xf32>
    %61 = math.exp %60 : vector<8x8xf32>
    %cst_29 = arith.constant dense<0.000000e+00> : vector<8xf32>
    %62 = vector.multi_reduction <add>, %61, %cst_29 [1] : vector<8x8xf32> to vector<8xf32>
    %63 = vector.shape_cast %62 : vector<8xf32> to vector<8x1xf32>
    %64 = tpu.reciprocal %63 {approx = true} : vector<8x1xf32> -> vector<8x1xf32>
    %65 = vector.broadcast %64 : vector<8x1xf32> to vector<8x8xf32>
    %66 = arith.mulf %61, %65 : vector<8x8xf32>
    %67 = arith.truncf %66 : vector<8x8xf32> to vector<8x8xbf16>
    %cst_30 = arith.constant dense<0.000000e+00> : vector<8x8xf32>
    %68 = tpu.matmul %67, %55, %cst_30 {dimension_numbers = #tpu.dot_dimension_numbers<[1], [0], [0], [1], [0, 0, 1, 1], [], []>} : vector<8x8xbf16>, vector<8x8xbf16>, vector<8x8xf32> -> vector<8x8xf32>
    %69 = vector.extract_strided_slice %20 {offsets = [0, 16], sizes = [8, 8], strides = [1, 1]} : vector<8x32xbf16> to vector<8x8xbf16>
    %c4_i32_31 = arith.constant 4 : i32
    %70 = arith.muli %c0_i32_3, %c4_i32_31 : i32
    %c2_i32 = arith.constant 2 : i32
    %71 = arith.addi %70, %c2_i32 : i32
    %72 = arith.index_cast %71 : i32 to index
    %c0_32 = arith.constant 0 : index
    %c0_33 = arith.constant 0 : index
    %73 = vector.load %arg21[%72, %c0_32, %c0_33] : memref<4x8x8xbf16, #tpu.memory_space<vmem>>, vector<1x8x8xbf16>
    %74 = vector.shape_cast %73 : vector<1x8x8xbf16> to vector<8x8xbf16>
    %c4_i32_34 = arith.constant 4 : i32
    %75 = arith.muli %c0_i32_3, %c4_i32_34 : i32
    %c2_i32_35 = arith.constant 2 : i32
    %76 = arith.addi %75, %c2_i32_35 : i32
    %77 = arith.index_cast %76 : i32 to index
    %c0_36 = arith.constant 0 : index
    %c0_37 = arith.constant 0 : index
    %78 = vector.load %arg22[%77, %c0_36, %c0_37] : memref<4x8x8xbf16, #tpu.memory_space<vmem>>, vector<1x8x8xbf16>
    %79 = vector.shape_cast %78 : vector<1x8x8xbf16> to vector<8x8xbf16>
    %cst_38 = arith.constant dense<0.000000e+00> : vector<8x8xf32>
    %80 = tpu.matmul %69, %74, %cst_38 {dimension_numbers = #tpu.dot_dimension_numbers<[1], [1], [0], [0], [0, 0, 1, 0], [], []>} : vector<8x8xbf16>, vector<8x8xbf16>, vector<8x8xf32> -> vector<8x8xf32>
    %cst_39 = arith.constant dense<0xFF800000> : vector<8xf32>
    %81 = vector.multi_reduction <maximumf>, %80, %cst_39 [1] : vector<8x8xf32> to vector<8xf32>
    %82 = vector.shape_cast %81 : vector<8xf32> to vector<8x1xf32>
    %83 = vector.broadcast %82 : vector<8x1xf32> to vector<8x8xf32>
    %84 = arith.subf %80, %83 : vector<8x8xf32>
    %85 = math.exp %84 : vector<8x8xf32>
    %cst_40 = arith.constant dense<0.000000e+00> : vector<8xf32>
    %86 = vector.multi_reduction <add>, %85, %cst_40 [1] : vector<8x8xf32> to vector<8xf32>
    %87 = vector.shape_cast %86 : vector<8xf32> to vector<8x1xf32>
    %88 = tpu.reciprocal %87 {approx = true} : vector<8x1xf32> -> vector<8x1xf32>
    %89 = vector.broadcast %88 : vector<8x1xf32> to vector<8x8xf32>
    %90 = arith.mulf %85, %89 : vector<8x8xf32>
    %91 = arith.truncf %90 : vector<8x8xf32> to vector<8x8xbf16>
    %cst_41 = arith.constant dense<0.000000e+00> : vector<8x8xf32>
    %92 = tpu.matmul %91, %79, %cst_41 {dimension_numbers = #tpu.dot_dimension_numbers<[1], [0], [0], [1], [0, 0, 1, 1], [], []>} : vector<8x8xbf16>, vector<8x8xbf16>, vector<8x8xf32> -> vector<8x8xf32>
    %93 = vector.extract_strided_slice %20 {offsets = [0, 24], sizes = [8, 8], strides = [1, 1]} : vector<8x32xbf16> to vector<8x8xbf16>
    %c4_i32_42 = arith.constant 4 : i32
    %94 = arith.muli %c0_i32_3, %c4_i32_42 : i32
    %c3_i32 = arith.constant 3 : i32
    %95 = arith.addi %94, %c3_i32 : i32
    %96 = arith.index_cast %95 : i32 to index
    %c0_43 = arith.constant 0 : index
    %c0_44 = arith.constant 0 : index
    %97 = vector.load %arg21[%96, %c0_43, %c0_44] : memref<4x8x8xbf16, #tpu.memory_space<vmem>>, vector<1x8x8xbf16>
    %98 = vector.shape_cast %97 : vector<1x8x8xbf16> to vector<8x8xbf16>
    %c4_i32_45 = arith.constant 4 : i32
    %99 = arith.muli %c0_i32_3, %c4_i32_45 : i32
    %c3_i32_46 = arith.constant 3 : i32
    %100 = arith.addi %99, %c3_i32_46 : i32
    %101 = arith.index_cast %100 : i32 to index
    %c0_47 = arith.constant 0 : index
    %c0_48 = arith.constant 0 : index
    %102 = vector.load %arg22[%101, %c0_47, %c0_48] : memref<4x8x8xbf16, #tpu.memory_space<vmem>>, vector<1x8x8xbf16>
    %103 = vector.shape_cast %102 : vector<1x8x8xbf16> to vector<8x8xbf16>
    %cst_49 = arith.constant dense<0.000000e+00> : vector<8x8xf32>
    %104 = tpu.matmul %93, %98, %cst_49 {dimension_numbers = #tpu.dot_dimension_numbers<[1], [1], [0], [0], [0, 0, 1, 0], [], []>} : vector<8x8xbf16>, vector<8x8xbf16>, vector<8x8xf32> -> vector<8x8xf32>
    %cst_50 = arith.constant dense<0xFF800000> : vector<8xf32>
    %105 = vector.multi_reduction <maximumf>, %104, %cst_50 [1] : vector<8x8xf32> to vector<8xf32>
    %106 = vector.shape_cast %105 : vector<8xf32> to vector<8x1xf32>
    %107 = vector.broadcast %106 : vector<8x1xf32> to vector<8x8xf32>
    %108 = arith.subf %104, %107 : vector<8x8xf32>
    %109 = math.exp %108 : vector<8x8xf32>
    %cst_51 = arith.constant dense<0.000000e+00> : vector<8xf32>
    %110 = vector.multi_reduction <add>, %109, %cst_51 [1] : vector<8x8xf32> to vector<8xf32>
    %111 = vector.shape_cast %110 : vector<8xf32> to vector<8x1xf32>
    %112 = tpu.reciprocal %111 {approx = true} : vector<8x1xf32> -> vector<8x1xf32>
    %113 = vector.broadcast %112 : vector<8x1xf32> to vector<8x8xf32>
    %114 = arith.mulf %109, %113 : vector<8x8xf32>
    %115 = arith.truncf %114 : vector<8x8xf32> to vector<8x8xbf16>
    %cst_52 = arith.constant dense<0.000000e+00> : vector<8x8xf32>
    %116 = tpu.matmul %115, %103, %cst_52 {dimension_numbers = #tpu.dot_dimension_numbers<[1], [0], [0], [1], [0, 0, 1, 1], [], []>} : vector<8x8xbf16>, vector<8x8xbf16>, vector<8x8xf32> -> vector<8x8xf32>
    %117 = tpu.concatenate %44, %68, %92, %116 in 1 : vector<8x8xf32>, vector<8x8xf32>, vector<8x8xf32>, vector<8x8xf32> -> vector<8x32xf32>
    %118 = arith.truncf %117 : vector<8x32xf32> to vector<8x32xbf16>
    %119 = arith.index_cast %c0_i32_3 : i32 to index
    %c0_53 = arith.constant 0 : index
    %c0_54 = arith.constant 0 : index
    %120 = vector.load %arg11[%119, %c0_53, %c0_54] : memref<1x32x32xbf16, #tpu.memory_space<vmem>>, vector<1x32x32xbf16>
    %121 = vector.shape_cast %120 : vector<1x32x32xbf16> to vector<32x32xbf16>
    %cst_55 = arith.constant dense<0.000000e+00> : vector<8x32xf32>
    %122 = tpu.matmul %118, %121, %cst_55 {dimension_numbers = #tpu.dot_dimension_numbers<[1], [0], [0], [1], [0, 0, 1, 1], [], []>} : vector<8x32xbf16>, vector<32x32xbf16>, vector<8x32xf32> -> vector<8x32xf32>
    %123 = arith.addf %10, %122 : vector<8x32xf32>
    %c1_i32_56 = arith.constant 1 : i32
    %124 = arith.addf %7, %123 : vector<8x32xf32>
    %c0_57 = arith.constant 0 : index
    %c0_58 = arith.constant 0 : index
    %125 = vector.load %arg12[%c0_57, %c0_58] : memref<1x32xf32, #tpu.memory_space<vmem>>, vector<1x32xf32>
    %126 = vector.broadcast %125 : vector<1x32xf32> to vector<8x32xf32>
    %127 = arith.addf %124, %126 : vector<8x32xf32>
    %c0_59 = arith.constant 0 : index
    %c0_60 = arith.constant 0 : index
    %128 = vector.load %arg13[%c0_59, %c0_60] : memref<1x32xf32, #tpu.memory_space<vmem>>, vector<1x32xf32>
    %c0_61 = arith.constant 0 : index
    %c0_62 = arith.constant 0 : index
    %129 = vector.load %arg14[%c0_61, %c0_62] : memref<1x32xf32, #tpu.memory_space<vmem>>, vector<1x32xf32>
    %cst_63 = arith.constant dense<0.000000e+00> : vector<8xf32>
    %130 = vector.multi_reduction <add>, %127, %cst_63 [1] : vector<8x32xf32> to vector<8xf32>
    %131 = vector.shape_cast %130 : vector<8xf32> to vector<8x1xf32>
    %cst_64 = arith.constant 3.200000e+01 : f32
    %132 = vector.broadcast %cst_64 : f32 to vector<8x1xf32>
    %133 = arith.divf %131, %132 : vector<8x1xf32>
    %134 = vector.broadcast %133 : vector<8x1xf32> to vector<8x32xf32>
    %135 = arith.subf %127, %134 : vector<8x32xf32>
    %136 = arith.mulf %135, %135 : vector<8x32xf32>
    %cst_65 = arith.constant dense<0.000000e+00> : vector<8xf32>
    %137 = vector.multi_reduction <add>, %136, %cst_65 [1] : vector<8x32xf32> to vector<8xf32>
    %138 = vector.shape_cast %137 : vector<8xf32> to vector<8x1xf32>
    %cst_66 = arith.constant 3.200000e+01 : f32
    %139 = vector.broadcast %cst_66 : f32 to vector<8x1xf32>
    %140 = arith.divf %138, %139 : vector<8x1xf32>
    %141 = vector.broadcast %133 : vector<8x1xf32> to vector<8x32xf32>
    %142 = arith.subf %127, %141 : vector<8x32xf32>
    %cst_67 = arith.constant 9.99999974E-6 : f32
    %143 = vector.broadcast %cst_67 : f32 to vector<8x1xf32>
    %144 = arith.addf %140, %143 : vector<8x1xf32>
    %145 = math.rsqrt %144 : vector<8x1xf32>
    %146 = vector.broadcast %145 : vector<8x1xf32> to vector<8x32xf32>
    %147 = arith.mulf %142, %146 : vector<8x32xf32>
    %148 = vector.broadcast %128 : vector<1x32xf32> to vector<8x32xf32>
    %149 = arith.mulf %147, %148 : vector<8x32xf32>
    %150 = vector.broadcast %129 : vector<1x32xf32> to vector<8x32xf32>
    %151 = arith.addf %149, %150 : vector<8x32xf32>
    %152 = arith.truncf %151 : vector<8x32xf32> to vector<8x32xbf16>
    %c0_68 = arith.constant 0 : index
    %c0_69 = arith.constant 0 : index
    %153 = vector.load %arg15[%c0_68, %c0_69] : memref<32x128xbf16, #tpu.memory_space<vmem>>, vector<32x128xbf16>
    %cst_70 = arith.constant dense<0.000000e+00> : vector<8x128xf32>
    %154 = tpu.matmul %152, %153, %cst_70 {dimension_numbers = #tpu.dot_dimension_numbers<[1], [0], [0], [1], [0, 0, 1, 1], [], []>} : vector<8x32xbf16>, vector<32x128xbf16>, vector<8x128xf32> -> vector<8x128xf32>
    %c0_71 = arith.constant 0 : index
    %c0_72 = arith.constant 0 : index
    %155 = vector.load %arg16[%c0_71, %c0_72] : memref<1x128xf32, #tpu.memory_space<vmem>>, vector<1x128xf32>
    %156 = vector.broadcast %155 : vector<1x128xf32> to vector<8x128xf32>
    %157 = arith.addf %154, %156 : vector<8x128xf32>
    %cst_73 = arith.constant 5.000000e-01 : f32
    %158 = vector.broadcast %cst_73 : f32 to vector<8x128xf32>
    %159 = arith.mulf %158, %157 : vector<8x128xf32>
    %160 = arith.mulf %157, %157 : vector<8x128xf32>
    %161 = arith.mulf %160, %157 : vector<8x128xf32>
    %cst_74 = arith.constant 4.471500e-02 : f32
    %162 = vector.broadcast %cst_74 : f32 to vector<8x128xf32>
    %163 = arith.mulf %162, %161 : vector<8x128xf32>
    %164 = arith.addf %157, %163 : vector<8x128xf32>
    %cst_75 = arith.constant 0.797884583 : f32
    %165 = vector.broadcast %cst_75 : f32 to vector<8x128xf32>
    %166 = arith.mulf %165, %164 : vector<8x128xf32>
    %167 = math.tanh %166 : vector<8x128xf32>
    %cst_76 = arith.constant 1.000000e+00 : f32
    %168 = vector.broadcast %cst_76 : f32 to vector<8x128xf32>
    %169 = arith.addf %168, %167 : vector<8x128xf32>
    %170 = arith.mulf %159, %169 : vector<8x128xf32>
    %171 = arith.truncf %170 : vector<8x128xf32> to vector<8x128xbf16>
    %c0_77 = arith.constant 0 : index
    %c0_78 = arith.constant 0 : index
    %172 = vector.load %arg17[%c0_77, %c0_78] : memref<128x32xbf16, #tpu.memory_space<vmem>>, vector<128x32xbf16>
    %cst_79 = arith.constant dense<0.000000e+00> : vector<8x32xf32>
    %173 = tpu.matmul %171, %172, %cst_79 {dimension_numbers = #tpu.dot_dimension_numbers<[1], [0], [0], [1], [0, 0, 1, 1], [], []>} : vector<8x128xbf16>, vector<128x32xbf16>, vector<8x32xf32> -> vector<8x32xf32>
    %c0_80 = arith.constant 0 : index
    %c0_81 = arith.constant 0 : index
    %174 = vector.load %arg18[%c0_80, %c0_81] : memref<1x32xf32, #tpu.memory_space<vmem>>, vector<1x32xf32>
    %175 = vector.broadcast %174 : vector<1x32xf32> to vector<8x32xf32>
    %176 = arith.addf %173, %175 : vector<8x32xf32>
    %177 = arith.addf %127, %176 : vector<8x32xf32>
    %c0_82 = arith.constant 0 : index
    %c0_83 = arith.constant 0 : index
    %c0_84 = arith.constant 0 : index
    %178 = vector.load %arg19[%c0_82, %c0_83, %c0_84] : memref<1x8x32xf32, #tpu.memory_space<vmem>>, vector<1x8x32xf32>
    %179 = vector.shape_cast %178 : vector<1x8x32xf32> to vector<8x32xf32>
    %180 = vector.shape_cast %177 : vector<8x32xf32> to vector<1x8x32xf32>
    tpu.vector_store %arg19[%c0_82, %c0_83, %c0_84], %180 {strides = array<i32>} : memref<1x8x32xf32, #tpu.memory_space<vmem>>, vector<1x8x32xf32>,
    return
  }
  func.func @transform_0(%arg0: i32, %arg1: i32) -> (i32, i32, i32) {
    %c0_i32 = arith.constant 0 : i32
    %c0_i32_0 = arith.constant 0 : i32
    %c0_i32_1 = arith.constant 0 : i32
    return %arg0, %c0_i32, %c0_i32_0 : i32, i32, i32
  }
  func.func @transform_1(%arg0: i32, %arg1: i32) -> (i32, i32) {
    %c0_i32 = arith.constant 0 : i32
    %c0_i32_0 = arith.constant 0 : i32
    %c0_i32_1 = arith.constant 0 : i32
    return %c0_i32, %c0_i32_0 : i32, i32
  }
  func.func @transform_2(%arg0: i32, %arg1: i32) -> (i32, i32) {
    %c0_i32 = arith.constant 0 : i32
    %c0_i32_0 = arith.constant 0 : i32
    %c0_i32_1 = arith.constant 0 : i32
    return %c0_i32, %c0_i32_0 : i32, i32
  }
  func.func @transform_3(%arg0: i32, %arg1: i32) -> (i32, i32, i32) {
    %c0_i32 = arith.constant 0 : i32
    %c0_i32_0 = arith.constant 0 : i32
    %c0_i32_1 = arith.constant 0 : i32
    %c0_i32_2 = arith.constant 0 : i32
    return %c0_i32, %c0_i32_0, %c0_i32_1 : i32, i32, i32
  }
  func.func @transform_4(%arg0: i32, %arg1: i32) -> (i32, i32, i32) {
    %c0_i32 = arith.constant 0 : i32
    %c0_i32_0 = arith.constant 0 : i32
    %c0_i32_1 = arith.constant 0 : i32
    %c0_i32_2 = arith.constant 0 : i32
    return %c0_i32, %c0_i32_0, %c0_i32_1 : i32, i32, i32
  }
  func.func @transform_5(%arg0: i32, %arg1: i32) -> (i32, i32, i32) {
    %c0_i32 = arith.constant 0 : i32
    %c0_i32_0 = arith.constant 0 : i32
    %c0_i32_1 = arith.constant 0 : i32
    %c0_i32_2 = arith.constant 0 : i32
    return %c0_i32, %c0_i32_0, %c0_i32_1 : i32, i32, i32
  }
  func.func @transform_6(%arg0: i32, %arg1: i32) -> (i32, i32, i32) {
    %c0_i32 = arith.constant 0 : i32
    %c0_i32_0 = arith.constant 0 : i32
    %c0_i32_1 = arith.constant 0 : i32
    %c0_i32_2 = arith.constant 0 : i32
    return %c0_i32, %c0_i32_0, %c0_i32_1 : i32, i32, i32
  }
  func.func @transform_7(%arg0: i32, %arg1: i32) -> (i32, i32, i32) {
    %c0_i32 = arith.constant 0 : i32
    %c0_i32_0 = arith.constant 0 : i32
    %c0_i32_1 = arith.constant 0 : i32
    %c0_i32_2 = arith.constant 0 : i32
    return %c0_i32, %c0_i32_0, %c0_i32_1 : i32, i32, i32
  }
  func.func @transform_8(%arg0: i32, %arg1: i32) -> (i32, i32, i32) {
    %c0_i32 = arith.constant 0 : i32
    %c0_i32_0 = arith.constant 0 : i32
    %c0_i32_1 = arith.constant 0 : i32
    %c0_i32_2 = arith.constant 0 : i32
    return %c0_i32, %c0_i32_0, %c0_i32_1 : i32, i32, i32
  }
  func.func @transform_9(%arg0: i32, %arg1: i32) -> (i32, i32, i32) {
    %c0_i32 = arith.constant 0 : i32
    %c0_i32_0 = arith.constant 0 : i32
    %c0_i32_1 = arith.constant 0 : i32
    %c0_i32_2 = arith.constant 0 : i32
    return %c0_i32, %c0_i32_0, %c0_i32_1 : i32, i32, i32
  }
  func.func @transform_10(%arg0: i32, %arg1: i32) -> (i32, i32) {
    %c0_i32 = arith.constant 0 : i32
    %c0_i32_0 = arith.constant 0 : i32
    %c0_i32_1 = arith.constant 0 : i32
    return %c0_i32, %c0_i32_0 : i32, i32
  }
  func.func @transform_11(%arg0: i32, %arg1: i32) -> (i32, i32) {
    %c0_i32 = arith.constant 0 : i32
    %c0_i32_0 = arith.constant 0 : i32
    %c0_i32_1 = arith.constant 0 : i32
    return %c0_i32, %c0_i32_0 : i32, i32
  }
  func.func @transform_12(%arg0: i32, %arg1: i32) -> (i32, i32) {
    %c0_i32 = arith.constant 0 : i32
    %c0_i32_0 = arith.constant 0 : i32
    %c0_i32_1 = arith.constant 0 : i32
    return %c0_i32, %c0_i32_0 : i32, i32
  }
  func.func @transform_13(%arg0: i32, %arg1: i32) -> (i32, i32) {
    %c0_i32 = arith.constant 0 : i32
    %c0_i32_0 = arith.constant 0 : i32
    %c0_i32_1 = arith.constant 0 : i32
    return %c0_i32, %c0_i32_0 : i32, i32
  }
  func.func @transform_14(%arg0: i32, %arg1: i32) -> (i32, i32) {
    %c0_i32 = arith.constant 0 : i32
    %c0_i32_0 = arith.constant 0 : i32
    %c0_i32_1 = arith.constant 0 : i32
    return %c0_i32, %c0_i32_0 : i32, i32
  }
  func.func @transform_15(%arg0: i32, %arg1: i32) -> (i32, i32) {
    %c0_i32 = arith.constant 0 : i32
    %c0_i32_0 = arith.constant 0 : i32
    %c0_i32_1 = arith.constant 0 : i32
    return %c0_i32, %c0_i32_0 : i32, i32
  }
  func.func @transform_16(%arg0: i32, %arg1: i32) -> (i32, i32) {
    %c0_i32 = arith.constant 0 : i32
    %c0_i32_0 = arith.constant 0 : i32
    %c0_i32_1 = arith.constant 0 : i32
    return %c0_i32, %c0_i32_0 : i32, i32
  }
  func.func @transform_17(%arg0: i32, %arg1: i32) -> (i32, i32, i32) {
    %c0_i32 = arith.constant 0 : i32
    %c0_i32_0 = arith.constant 0 : i32
    return %arg0, %arg1, %c0_i32 : i32, i32, i32
  }
}

module attributes {stable_mosaic.version = 11 : i64} {
  func.func @block_kernel(%arg0: i32, %arg1: i32, %arg2: memref<1x8x32xf32, #tpu.memory_space<vmem>>, %arg3: memref<1x32xf32, #tpu.memory_space<vmem>>, %arg4: memref<1x32xf32, #tpu.memory_space<vmem>>, %arg5: memref<1x32x32xbf16, #tpu.memory_space<vmem>>, %arg6: memref<1x1x32xf32, #tpu.memory_space<vmem>>, %arg7: memref<1x32x32xbf16, #tpu.memory_space<vmem>>, %arg8: memref<1x1x32xf32, #tpu.memory_space<vmem>>, %arg9: memref<1x32x32xbf16, #tpu.memory_space<vmem>>, %arg10: memref<1x1x32xf32, #tpu.memory_space<vmem>>, %arg11: memref<1x32x32xbf16, #tpu.memory_space<vmem>>, %arg12: memref<1x32xf32, #tpu.memory_space<vmem>>, %arg13: memref<1x32xf32, #tpu.memory_space<vmem>>, %arg14: memref<1x32xf32, #tpu.memory_space<vmem>>, %arg15: memref<32x128xbf16, #tpu.memory_space<vmem>>, %arg16: memref<1x128xf32, #tpu.memory_space<vmem>>, %arg17: memref<128x32xbf16, #tpu.memory_space<vmem>>, %arg18: memref<1x32xf32, #tpu.memory_space<vmem>>, %arg19: memref<1x8x32xf32, #tpu.memory_space<vmem>>, %arg20: memref<8x32xbf16, #tpu.memory_space<vmem>>, %arg21: memref<4x8x8xbf16, #tpu.memory_space<vmem>>, %arg22: memref<4x8x8xbf16, #tpu.memory_space<vmem>>) attributes {dimension_semantics = [#tpu.dimension_semantics<parallel>, #tpu.dimension_semantics<arbitrary>], iteration_bounds = array<i64: 2, 1>, scalar_prefetch = 0 : i64, scratch_operands = 3 : i64, tpu.core_type = #tpu.core_type<tc>, window_params = [{transform_indices = @transform_0, window_bounds = array<i64: 1, 8, 32>}, {pipeline_mode = #tpu.pipeline_mode<synchronous>, transform_indices = @transform_1, window_bounds = array<i64: 1, 32>}, {pipeline_mode = #tpu.pipeline_mode<synchronous>, transform_indices = @transform_2, window_bounds = array<i64: 1, 32>}, {pipeline_mode = #tpu.pipeline_mode<synchronous>, transform_indices = @transform_3, window_bounds = array<i64: 1, 32, 32>}, {pipeline_mode = #tpu.pipeline_mode<synchronous>, transform_indices = @transform_4, window_bounds = array<i64: 1, 1, 32>}, {pipeline_mode = #tpu.pipeline_mode<synchronous>, transform_indices = @transform_5, window_bounds = array<i64: 1, 32, 32>}, {pipeline_mode = #tpu.pipeline_mode<synchronous>, transform_indices = @transform_6, window_bounds = array<i64: 1, 1, 32>}, {pipeline_mode = #tpu.pipeline_mode<synchronous>, transform_indices = @transform_7, window_bounds = array<i64: 1, 32, 32>}, {pipeline_mode = #tpu.pipeline_mode<synchronous>, transform_indices = @transform_8, window_bounds = array<i64: 1, 1, 32>}, {pipeline_mode = #tpu.pipeline_mode<synchronous>, transform_indices = @transform_9, window_bounds = array<i64: 1, 32, 32>}, {pipeline_mode = #tpu.pipeline_mode<synchronous>, transform_indices = @transform_10, window_bounds = array<i64: 1, 32>}, {pipeline_mode = #tpu.pipeline_mode<synchronous>, transform_indices = @transform_11, window_bounds = array<i64: 1, 32>}, {pipeline_mode = #tpu.pipeline_mode<synchronous>, transform_indices = @transform_12, window_bounds = array<i64: 1, 32>}, {pipeline_mode = #tpu.pipeline_mode<synchronous>, transform_indices = @transform_13, window_bounds = array<i64: 32, 128>}, {pipeline_mode = #tpu.pipeline_mode<synchronous>, transform_indices = @transform_14, window_bounds = array<i64: 1, 128>}, {pipeline_mode = #tpu.pipeline_mode<synchronous>, transform_indices = @transform_15, window_bounds = array<i64: 128, 32>}, {pipeline_mode = #tpu.pipeline_mode<synchronous>, transform_indices = @transform_16, window_bounds = array<i64: 1, 32>}, {transform_indices = @transform_17, window_bounds = array<i64: 1, 8, 32>}]} {
    %c0_i32 = arith.constant 0 : i32
    %0 = arith.cmpi eq, %arg1, %c0_i32 : i32
    %1 = arith.extui %0 : i1 to i32
    %c0_i32_0 = arith.constant 0 : i32
    %2 = arith.cmpi ne, %1, %c0_i32_0 : i32
    scf.if %2 {
      %c0_85 = arith.constant 0 : index
      %c0_86 = arith.constant 0 : index
      %c0_87 = arith.constant 0 : index
      %181 = vector.load %arg2[%c0_85, %c0_86, %c0_87] : memref<1x8x32xf32, #tpu.memory_space<vmem>>, vector<1x8x32xf32>
      %182 = vector.shape_cast %181 : vector<1x8x32xf32> to vector<8x32xf32>
      %c0_88 = arith.constant 0 : index
      %c0_89 = arith.constant 0 : index
      %183 = vector.load %arg3[%c0_88, %c0_89] : memref<1x32xf32, #tpu.memory_space<vmem>>, vector<1x32xf32>
      %c0_90 = arith.constant 0 : index
      %c0_91 = arith.constant 0 : index
      %184 = vector.load %arg4[%c0_90, %c0_91] : memref<1x32xf32, #tpu.memory_space<vmem>>, vector<1x32xf32>
      %cst_92 = arith.constant dense<0.000000e+00> : vector<8xf32>
      %185 = vector.multi_reduction <add>, %182, %cst_92 [1] : vector<8x32xf32> to vector<8xf32>
      %186 = vector.shape_cast %185 : vector<8xf32> to vector<8x1xf32>
      %cst_93 = arith.constant 3.200000e+01 : f32
      %187 = vector.broadcast %cst_93 : f32 to vector<8x1xf32>
      %188 = arith.divf %186, %187 : vector<8x1xf32>
      %189 = vector.broadcast %188 : vector<8x1xf32> to vector<8x32xf32>
      %190 = arith.subf %182, %189 : vector<8x32xf32>
      %191 = arith.mulf %190, %190 : vector<8x32xf32>
      %cst_94 = arith.constant dense<0.000000e+00> : vector<8xf32>
      %192 = vector.multi_reduction <add>, %191, %cst_94 [1] : vector<8x32xf32> to vector<8xf32>
      %193 = vector.shape_cast %192 : vector<8xf32> to vector<8x1xf32>
      %cst_95 = arith.constant 3.200000e+01 : f32
      %194 = vector.broadcast %cst_95 : f32 to vector<8x1xf32>
      %195 = arith.divf %193, %194 : vector<8x1xf32>
      %196 = vector.broadcast %188 : vector<8x1xf32> to vector<8x32xf32>
      %197 = arith.subf %182, %196 : vector<8x32xf32>
      %cst_96 = arith.constant 9.99999974E-6 : f32
      %198 = vector.broadcast %cst_96 : f32 to vector<8x1xf32>
      %199 = arith.addf %195, %198 : vector<8x1xf32>
      %200 = math.rsqrt %199 : vector<8x1xf32>
      %201 = vector.broadcast %200 : vector<8x1xf32> to vector<8x32xf32>
      %202 = arith.mulf %197, %201 : vector<8x32xf32>
      %203 = vector.broadcast %183 : vector<1x32xf32> to vector<8x32xf32>
      %204 = arith.mulf %202, %203 : vector<8x32xf32>
      %205 = vector.broadcast %184 : vector<1x32xf32> to vector<8x32xf32>
      %206 = arith.addf %204, %205 : vector<8x32xf32>
      %207 = arith.truncf %206 : vector<8x32xf32> to vector<8x32xbf16>
      %c0_97 = arith.constant 0 : index
      %c0_98 = arith.constant 0 : index
      %208 = vector.load %arg20[%c0_97, %c0_98] : memref<8x32xbf16, #tpu.memory_space<vmem>>, vector<8x32xbf16>
      tpu.vector_store %arg20[%c0_97, %c0_98], %207 {strides = array<i32>} : memref<8x32xbf16, #tpu.memory_space<vmem>>, vector<8x32xbf16>,
      %c0_99 = arith.constant 0 : index
      %c0_100 = arith.constant 0 : index
      %c0_101 = arith.constant 0 : index
      %209 = vector.load %arg7[%c0_99, %c0_100, %c0_101] : memref<1x32x32xbf16, #tpu.memory_space<vmem>>, vector<1x32x32xbf16>
      %210 = vector.shape_cast %209 : vector<1x32x32xbf16> to vector<32x32xbf16>
      %cst_102 = arith.constant dense<0.000000e+00> : vector<8x32xf32>
      %211 = tpu.matmul %207, %210, %cst_102 {dimension_numbers = #tpu.dot_dimension_numbers<[1], [0], [0], [1], [0, 0, 1, 1], [], []>} : vector<8x32xbf16>, vector<32x32xbf16>, vector<8x32xf32> -> vector<8x32xf32>
      %c0_103 = arith.constant 0 : index
      %c0_104 = arith.constant 0 : index
      %c0_105 = arith.constant 0 : index
      %212 = vector.load %arg8[%c0_103, %c0_104, %c0_105] : memref<1x1x32xf32, #tpu.memory_space<vmem>>, vector<1x1x32xf32>
      %213 = vector.shape_cast %212 : vector<1x1x32xf32> to vector<1x32xf32>
      %214 = vector.broadcast %213 : vector<1x32xf32> to vector<8x32xf32>
      %215 = arith.addf %211, %214 : vector<8x32xf32>
      %216 = arith.truncf %215 : vector<8x32xf32> to vector<8x32xbf16>
      %c0_106 = arith.constant 0 : index
      %c0_107 = arith.constant 0 : index
      %c0_108 = arith.constant 0 : index
      %217 = vector.load %arg9[%c0_106, %c0_107, %c0_108] : memref<1x32x32xbf16, #tpu.memory_space<vmem>>, vector<1x32x32xbf16>
      %218 = vector.shape_cast %217 : vector<1x32x32xbf16> to vector<32x32xbf16>
      %cst_109 = arith.constant dense<0.000000e+00> : vector<8x32xf32>
      %219 = tpu.matmul %207, %218, %cst_109 {dimension_numbers = #tpu.dot_dimension_numbers<[1], [0], [0], [1], [0, 0, 1, 1], [], []>} : vector<8x32xbf16>, vector<32x32xbf16>, vector<8x32xf32> -> vector<8x32xf32>
      %c0_110 = arith.constant 0 : index
      %c0_111 = arith.constant 0 : index
      %c0_112 = arith.constant 0 : index
      %220 = vector.load %arg10[%c0_110, %c0_111, %c0_112] : memref<1x1x32xf32, #tpu.memory_space<vmem>>, vector<1x1x32xf32>
      %221 = vector.shape_cast %220 : vector<1x1x32xf32> to vector<1x32xf32>
      %222 = vector.broadcast %221 : vector<1x32xf32> to vector<8x32xf32>
      %223 = arith.addf %219, %222 : vector<8x32xf32>
      %224 = arith.truncf %223 : vector<8x32xf32> to vector<8x32xbf16>
      %225 = vector.extract_strided_slice %216 {offsets = [0, 0], sizes = [8, 8], strides = [1, 1]} : vector<8x32xbf16> to vector<8x8xbf16>
      %c0_113 = arith.constant 0 : index
      %c0_114 = arith.constant 0 : index
      %c0_115 = arith.constant 0 : index
      %226 = vector.load %arg21[%c0_113, %c0_114, %c0_115] : memref<4x8x8xbf16, #tpu.memory_space<vmem>>, vector<1x8x8xbf16>
      %227 = vector.shape_cast %226 : vector<1x8x8xbf16> to vector<8x8xbf16>
      %228 = vector.shape_cast %225 : vector<8x8xbf16> to vector<1x8x8xbf16>
      tpu.vector_store %arg21[%c0_113, %c0_114, %c0_115], %228 {strides = array<i32>} : memref<4x8x8xbf16, #tpu.memory_space<vmem>>, vector<1x8x8xbf16>,
      %229 = vector.extract_strided_slice %224 {offsets = [0, 0], sizes = [8, 8], strides = [1, 1]} : vector<8x32xbf16> to vector<8x8xbf16>
      %c0_116 = arith.constant 0 : index
      %c0_117 = arith.constant 0 : index
      %c0_118 = arith.constant 0 : index
      %230 = vector.load %arg22[%c0_116, %c0_117, %c0_118] : memref<4x8x8xbf16, #tpu.memory_space<vmem>>, vector<1x8x8xbf16>
      %231 = vector.shape_cast %230 : vector<1x8x8xbf16> to vector<8x8xbf16>
      %232 = vector.shape_cast %229 : vector<8x8xbf16> to vector<1x8x8xbf16>
      tpu.vector_store %arg22[%c0_116, %c0_117, %c0_118], %232 {strides = array<i32>} : memref<4x8x8xbf16, #tpu.memory_space<vmem>>, vector<1x8x8xbf16>,
      %233 = vector.extract_strided_slice %216 {offsets = [0, 8], sizes = [8, 8], strides = [1, 1]} : vector<8x32xbf16> to vector<8x8xbf16>
      %c1 = arith.constant 1 : index
      %c0_119 = arith.constant 0 : index
      %c0_120 = arith.constant 0 : index
      %234 = vector.load %arg21[%c1, %c0_119, %c0_120] : memref<4x8x8xbf16, #tpu.memory_space<vmem>>, vector<1x8x8xbf16>
      %235 = vector.shape_cast %234 : vector<1x8x8xbf16> to vector<8x8xbf16>
      %236 = vector.shape_cast %233 : vector<8x8xbf16> to vector<1x8x8xbf16>
      tpu.vector_store %arg21[%c1, %c0_119, %c0_120], %236 {strides = array<i32>} : memref<4x8x8xbf16, #tpu.memory_space<vmem>>, vector<1x8x8xbf16>,
      %237 = vector.extract_strided_slice %224 {offsets = [0, 8], sizes = [8, 8], strides = [1, 1]} : vector<8x32xbf16> to vector<8x8xbf16>
      %c1_121 = arith.constant 1 : index
      %c0_122 = arith.constant 0 : index
      %c0_123 = arith.constant 0 : index
      %238 = vector.load %arg22[%c1_121, %c0_122, %c0_123] : memref<4x8x8xbf16, #tpu.memory_space<vmem>>, vector<1x8x8xbf16>
      %239 = vector.shape_cast %238 : vector<1x8x8xbf16> to vector<8x8xbf16>
      %240 = vector.shape_cast %237 : vector<8x8xbf16> to vector<1x8x8xbf16>
      tpu.vector_store %arg22[%c1_121, %c0_122, %c0_123], %240 {strides = array<i32>} : memref<4x8x8xbf16, #tpu.memory_space<vmem>>, vector<1x8x8xbf16>,
      %241 = vector.extract_strided_slice %216 {offsets = [0, 16], sizes = [8, 8], strides = [1, 1]} : vector<8x32xbf16> to vector<8x8xbf16>
      %c2 = arith.constant 2 : index
      %c0_124 = arith.constant 0 : index
      %c0_125 = arith.constant 0 : index
      %242 = vector.load %arg21[%c2, %c0_124, %c0_125] : memref<4x8x8xbf16, #tpu.memory_space<vmem>>, vector<1x8x8xbf16>
      %243 = vector.shape_cast %242 : vector<1x8x8xbf16> to vector<8x8xbf16>
      %244 = vector.shape_cast %241 : vector<8x8xbf16> to vector<1x8x8xbf16>
      tpu.vector_store %arg21[%c2, %c0_124, %c0_125], %244 {strides = array<i32>} : memref<4x8x8xbf16, #tpu.memory_space<vmem>>, vector<1x8x8xbf16>,
      %245 = vector.extract_strided_slice %224 {offsets = [0, 16], sizes = [8, 8], strides = [1, 1]} : vector<8x32xbf16> to vector<8x8xbf16>
      %c2_126 = arith.constant 2 : index
      %c0_127 = arith.constant 0 : index
      %c0_128 = arith.constant 0 : index
      %246 = vector.load %arg22[%c2_126, %c0_127, %c0_128] : memref<4x8x8xbf16, #tpu.memory_space<vmem>>, vector<1x8x8xbf16>
      %247 = vector.shape_cast %246 : vector<1x8x8xbf16> to vector<8x8xbf16>
      %248 = vector.shape_cast %245 : vector<8x8xbf16> to vector<1x8x8xbf16>
      tpu.vector_store %arg22[%c2_126, %c0_127, %c0_128], %248 {strides = array<i32>} : memref<4x8x8xbf16, #tpu.memory_space<vmem>>, vector<1x8x8xbf16>,
      %249 = vector.extract_strided_slice %216 {offsets = [0, 24], sizes = [8, 8], strides = [1, 1]} : vector<8x32xbf16> to vector<8x8xbf16>
      %c3 = arith.constant 3 : index
      %c0_129 = arith.constant 0 : index
      %c0_130 = arith.constant 0 : index
      %250 = vector.load %arg21[%c3, %c0_129, %c0_130] : memref<4x8x8xbf16, #tpu.memory_space<vmem>>, vector<1x8x8xbf16>
      %251 = vector.shape_cast %250 : vector<1x8x8xbf16> to vector<8x8xbf16>
      %252 = vector.shape_cast %249 : vector<8x8xbf16> to vector<1x8x8xbf16>
      tpu.vector_store %arg21[%c3, %c0_129, %c0_130], %252 {strides = array<i32>} : memref<4x8x8xbf16, #tpu.memory_space<vmem>>, vector<1x8x8xbf16>,
      %253 = vector.extract_strided_slice %224 {offsets = [0, 24], sizes = [8, 8], strides = [1, 1]} : vector<8x32xbf16> to vector<8x8xbf16>
      %c3_131 = arith.constant 3 : index
      %c0_132 = arith.constant 0 : index
      %c0_133 = arith.constant 0 : index
      %254 = vector.load %arg22[%c3_131, %c0_132, %c0_133] : memref<4x8x8xbf16, #tpu.memory_space<vmem>>, vector<1x8x8xbf16>
      %255 = vector.shape_cast %254 : vector<1x8x8xbf16> to vector<8x8xbf16>
      %256 = vector.shape_cast %253 : vector<8x8xbf16> to vector<1x8x8xbf16>
      tpu.vector_store %arg22[%c3_131, %c0_132, %c0_133], %256 {strides = array<i32>} : memref<4x8x8xbf16, #tpu.memory_space<vmem>>, vector<1x8x8xbf16>,
    } else {
    }
    %c8_i32 = arith.constant 8 : i32
    %3 = arith.muli %arg1, %c8_i32 : i32
    %4 = tpu.assume_multiple %3, 8 : i32
    %c0 = arith.constant 0 : index
    %5 = arith.index_cast %4 : i32 to index
    %c0_1 = arith.constant 0 : index
    %6 = vector.load %arg2[%c0, %5, %c0_1] : memref<1x8x32xf32, #tpu.memory_space<vmem>>, vector<1x8x32xf32>
    %7 = vector.shape_cast %6 : vector<1x8x32xf32> to vector<8x32xf32>
    %8 = arith.index_cast %4 : i32 to index
    %c0_2 = arith.constant 0 : index
    %9 = vector.load %arg20[%8, %c0_2] : memref<8x32xbf16, #tpu.memory_space<vmem>>, vector<8x32xbf16>
    %cst = arith.constant 0.000000e+00 : f32
    %10 = vector.broadcast %cst : f32 to vector<8x32xf32>
    %c0_i32_3 = arith.constant 0 : i32
    %11 = arith.index_cast %c0_i32_3 : i32 to index
    %c0_4 = arith.constant 0 : index
    %c0_5 = arith.constant 0 : index
    %12 = vector.load %arg5[%11, %c0_4, %c0_5] : memref<1x32x32xbf16, #tpu.memory_space<vmem>>, vector<1x32x32xbf16>
    %13 = vector.shape_cast %12 : vector<1x32x32xbf16> to vector<32x32xbf16>
    %cst_6 = arith.constant dense<0.000000e+00> : vector<8x32xf32>
    %14 = tpu.matmul %9, %13, %cst_6 {dimension_numbers = #tpu.dot_dimension_numbers<[1], [0], [0], [1], [0, 0, 1, 1], [], []>} : vector<8x32xbf16>, vector<32x32xbf16>, vector<8x32xf32> -> vector<8x32xf32>
    %15 = arith.index_cast %c0_i32_3 : i32 to index
    %c0_7 = arith.constant 0 : index
    %c0_8 = arith.constant 0 : index
    %16 = vector.load %arg6[%15, %c0_7, %c0_8] : memref<1x1x32xf32, #tpu.memory_space<vmem>>, vector<1x1x32xf32>
    %17 = vector.shape_cast %16 : vector<1x1x32xf32> to vector<1x32xf32>
    %18 = vector.broadcast %17 : vector<1x32xf32> to vector<8x32xf32>
    %19 = arith.addf %14, %18 : vector<8x32xf32>
    %20 = arith.truncf %19 : vector<8x32xf32> to vector<8x32xbf16>
    %21 = vector.extract_strided_slice %20 {offsets = [0, 0], sizes = [8, 8], strides = [1, 1]} : vector<8x32xbf16> to vector<8x8xbf16>
    %c4_i32 = arith.constant 4 : i32
    %22 = arith.muli %c0_i32_3, %c4_i32 : i32
    %c0_i32_9 = arith.constant 0 : i32
    %23 = arith.addi %22, %c0_i32_9 : i32
    %24 = arith.index_cast %23 : i32 to index
    %c0_10 = arith.constant 0 : index
    %c0_11 = arith.constant 0 : index
    %25 = vector.load %arg21[%24, %c0_10, %c0_11] : memref<4x8x8xbf16, #tpu.memory_space<vmem>>, vector<1x8x8xbf16>
    %26 = vector.shape_cast %25 : vector<1x8x8xbf16> to vector<8x8xbf16>
    %c4_i32_12 = arith.constant 4 : i32
    %27 = arith.muli %c0_i32_3, %c4_i32_12 : i32
    %c0_i32_13 = arith.constant 0 : i32
    %28 = arith.addi %27, %c0_i32_13 : i32
    %29 = arith.index_cast %28 : i32 to index
    %c0_14 = arith.constant 0 : index
    %c0_15 = arith.constant 0 : index
    %30 = vector.load %arg22[%29, %c0_14, %c0_15] : memref<4x8x8xbf16, #tpu.memory_space<vmem>>, vector<1x8x8xbf16>
    %31 = vector.shape_cast %30 : vector<1x8x8xbf16> to vector<8x8xbf16>
    %cst_16 = arith.constant dense<0.000000e+00> : vector<8x8xf32>
    %32 = tpu.matmul %21, %26, %cst_16 {dimension_numbers = #tpu.dot_dimension_numbers<[1], [1], [0], [0], [0, 0, 1, 0], [], []>} : vector<8x8xbf16>, vector<8x8xbf16>, vector<8x8xf32> -> vector<8x8xf32>
    %cst_17 = arith.constant dense<0xFF800000> : vector<8xf32>
    %33 = vector.multi_reduction <maximumf>, %32, %cst_17 [1] : vector<8x8xf32> to vector<8xf32>
    %34 = vector.shape_cast %33 : vector<8xf32> to vector<8x1xf32>
    %35 = vector.broadcast %34 : vector<8x1xf32> to vector<8x8xf32>
    %36 = arith.subf %32, %35 : vector<8x8xf32>
    %37 = math.exp %36 : vector<8x8xf32>
    %cst_18 = arith.constant dense<0.000000e+00> : vector<8xf32>
    %38 = vector.multi_reduction <add>, %37, %cst_18 [1] : vector<8x8xf32> to vector<8xf32>
    %39 = vector.shape_cast %38 : vector<8xf32> to vector<8x1xf32>
    %40 = tpu.reciprocal %39 {approx = true} : vector<8x1xf32> -> vector<8x1xf32>
    %41 = vector.broadcast %40 : vector<8x1xf32> to vector<8x8xf32>
    %42 = arith.mulf %37, %41 : vector<8x8xf32>
    %43 = arith.truncf %42 : vector<8x8xf32> to vector<8x8xbf16>
    %cst_19 = arith.constant dense<0.000000e+00> : vector<8x8xf32>
    %44 = tpu.matmul %43, %31, %cst_19 {dimension_numbers = #tpu.dot_dimension_numbers<[1], [0], [0], [1], [0, 0, 1, 1], [], []>} : vector<8x8xbf16>, vector<8x8xbf16>, vector<8x8xf32> -> vector<8x8xf32>
    %45 = vector.extract_strided_slice %20 {offsets = [0, 8], sizes = [8, 8], strides = [1, 1]} : vector<8x32xbf16> to vector<8x8xbf16>
    %c4_i32_20 = arith.constant 4 : i32
    %46 = arith.muli %c0_i32_3, %c4_i32_20 : i32
    %c1_i32 = arith.constant 1 : i32
    %47 = arith.addi %46, %c1_i32 : i32
    %48 = arith.index_cast %47 : i32 to index
    %c0_21 = arith.constant 0 : index
    %c0_22 = arith.constant 0 : index
    %49 = vector.load %arg21[%48, %c0_21, %c0_22] : memref<4x8x8xbf16, #tpu.memory_space<vmem>>, vector<1x8x8xbf16>
    %50 = vector.shape_cast %49 : vector<1x8x8xbf16> to vector<8x8xbf16>
    %c4_i32_23 = arith.constant 4 : i32
    %51 = arith.muli %c0_i32_3, %c4_i32_23 : i32
    %c1_i32_24 = arith.constant 1 : i32
    %52 = arith.addi %51, %c1_i32_24 : i32
    %53 = arith.index_cast %52 : i32 to index
    %c0_25 = arith.constant 0 : index
    %c0_26 = arith.constant 0 : index
    %54 = vector.load %arg22[%53, %c0_25, %c0_26] : memref<4x8x8xbf16, #tpu.memory_space<vmem>>, vector<1x8x8xbf16>
    %55 = vector.shape_cast %54 : vector<1x8x8xbf16> to vector<8x8xbf16>
    %cst_27 = arith.constant dense<0.000000e+00> : vector<8x8xf32>
    %56 = tpu.matmul %45, %50, %cst_27 {dimension_numbers = #tpu.dot_dimension_numbers<[1], [1], [0], [0], [0, 0, 1, 0], [], []>} : vector<8x8xbf16>, vector<8x8xbf16>, vector<8x8xf32> -> vector<8x8xf32>
    %cst_28 = arith.constant dense<0xFF800000> : vector<8xf32>
    %57 = vector.multi_reduction <maximumf>, %56, %cst_28 [1] : vector<8x8xf32> to vector<8xf32>
    %58 = vector.shape_cast %57 : vector<8xf32> to vector<8x1xf32>
    %59 = vector.broadcast %58 : vector<8x1xf32> to vector<8x8xf32>
    %60 = arith.subf %56, %59 : vector<8x8xf32>
    %61 = math.exp %60 : vector<8x8xf32>
    %cst_29 = arith.constant dense<0.000000e+00> : vector<8xf32>
    %62 = vector.multi_reduction <add>, %61, %cst_29 [1] : vector<8x8xf32> to vector<8xf32>
    %63 = vector.shape_cast %62 : vector<8xf32> to vector<8x1xf32>
    %64 = tpu.reciprocal %63 {approx = true} : vector<8x1xf32> -> vector<8x1xf32>
    %65 = vector.broadcast %64 : vector<8x1xf32> to vector<8x8xf32>
    %66 = arith.mulf %61, %65 : vector<8x8xf32>
    %67 = arith.truncf %66 : vector<8x8xf32> to vector<8x8xbf16>
    %cst_30 = arith.constant dense<0.000000e+00> : vector<8x8xf32>
    %68 = tpu.matmul %67, %55, %cst_30 {dimension_numbers = #tpu.dot_dimension_numbers<[1], [0], [0], [1], [0, 0, 1, 1], [], []>} : vector<8x8xbf16>, vector<8x8xbf16>, vector<8x8xf32> -> vector<8x8xf32>
    %69 = vector.extract_strided_slice %20 {offsets = [0, 16], sizes = [8, 8], strides = [1, 1]} : vector<8x32xbf16> to vector<8x8xbf16>
    %c4_i32_31 = arith.constant 4 : i32
    %70 = arith.muli %c0_i32_3, %c4_i32_31 : i32
    %c2_i32 = arith.constant 2 : i32
    %71 = arith.addi %70, %c2_i32 : i32
    %72 = arith.index_cast %71 : i32 to index
    %c0_32 = arith.constant 0 : index
    %c0_33 = arith.constant 0 : index
    %73 = vector.load %arg21[%72, %c0_32, %c0_33] : memref<4x8x8xbf16, #tpu.memory_space<vmem>>, vector<1x8x8xbf16>
    %74 = vector.shape_cast %73 : vector<1x8x8xbf16> to vector<8x8xbf16>
    %c4_i32_34 = arith.constant 4 : i32
    %75 = arith.muli %c0_i32_3, %c4_i32_34 : i32
    %c2_i32_35 = arith.constant 2 : i32
    %76 = arith.addi %75, %c2_i32_35 : i32
    %77 = arith.index_cast %76 : i32 to index
    %c0_36 = arith.constant 0 : index
    %c0_37 = arith.constant 0 : index
    %78 = vector.load %arg22[%77, %c0_36, %c0_37] : memref<4x8x8xbf16, #tpu.memory_space<vmem>>, vector<1x8x8xbf16>
    %79 = vector.shape_cast %78 : vector<1x8x8xbf16> to vector<8x8xbf16>
    %cst_38 = arith.constant dense<0.000000e+00> : vector<8x8xf32>
    %80 = tpu.matmul %69, %74, %cst_38 {dimension_numbers = #tpu.dot_dimension_numbers<[1], [1], [0], [0], [0, 0, 1, 0], [], []>} : vector<8x8xbf16>, vector<8x8xbf16>, vector<8x8xf32> -> vector<8x8xf32>
    %cst_39 = arith.constant dense<0xFF800000> : vector<8xf32>
    %81 = vector.multi_reduction <maximumf>, %80, %cst_39 [1] : vector<8x8xf32> to vector<8xf32>
    %82 = vector.shape_cast %81 : vector<8xf32> to vector<8x1xf32>
    %83 = vector.broadcast %82 : vector<8x1xf32> to vector<8x8xf32>
    %84 = arith.subf %80, %83 : vector<8x8xf32>
    %85 = math.exp %84 : vector<8x8xf32>
    %cst_40 = arith.constant dense<0.000000e+00> : vector<8xf32>
    %86 = vector.multi_reduction <add>, %85, %cst_40 [1] : vector<8x8xf32> to vector<8xf32>
    %87 = vector.shape_cast %86 : vector<8xf32> to vector<8x1xf32>
    %88 = tpu.reciprocal %87 {approx = true} : vector<8x1xf32> -> vector<8x1xf32>
    %89 = vector.broadcast %88 : vector<8x1xf32> to vector<8x8xf32>
    %90 = arith.mulf %85, %89 : vector<8x8xf32>
    %91 = arith.truncf %90 : vector<8x8xf32> to vector<8x8xbf16>
    %cst_41 = arith.constant dense<0.000000e+00> : vector<8x8xf32>
    %92 = tpu.matmul %91, %79, %cst_41 {dimension_numbers = #tpu.dot_dimension_numbers<[1], [0], [0], [1], [0, 0, 1, 1], [], []>} : vector<8x8xbf16>, vector<8x8xbf16>, vector<8x8xf32> -> vector<8x8xf32>
    %93 = vector.extract_strided_slice %20 {offsets = [0, 24], sizes = [8, 8], strides = [1, 1]} : vector<8x32xbf16> to vector<8x8xbf16>
    %c4_i32_42 = arith.constant 4 : i32
    %94 = arith.muli %c0_i32_3, %c4_i32_42 : i32
    %c3_i32 = arith.constant 3 : i32
    %95 = arith.addi %94, %c3_i32 : i32
    %96 = arith.index_cast %95 : i32 to index
    %c0_43 = arith.constant 0 : index
    %c0_44 = arith.constant 0 : index
    %97 = vector.load %arg21[%96, %c0_43, %c0_44] : memref<4x8x8xbf16, #tpu.memory_space<vmem>>, vector<1x8x8xbf16>
    %98 = vector.shape_cast %97 : vector<1x8x8xbf16> to vector<8x8xbf16>
    %c4_i32_45 = arith.constant 4 : i32
    %99 = arith.muli %c0_i32_3, %c4_i32_45 : i32
    %c3_i32_46 = arith.constant 3 : i32
    %100 = arith.addi %99, %c3_i32_46 : i32
    %101 = arith.index_cast %100 : i32 to index
    %c0_47 = arith.constant 0 : index
    %c0_48 = arith.constant 0 : index
    %102 = vector.load %arg22[%101, %c0_47, %c0_48] : memref<4x8x8xbf16, #tpu.memory_space<vmem>>, vector<1x8x8xbf16>
    %103 = vector.shape_cast %102 : vector<1x8x8xbf16> to vector<8x8xbf16>
    %cst_49 = arith.constant dense<0.000000e+00> : vector<8x8xf32>
    %104 = tpu.matmul %93, %98, %cst_49 {dimension_numbers = #tpu.dot_dimension_numbers<[1], [1], [0], [0], [0, 0, 1, 0], [], []>} : vector<8x8xbf16>, vector<8x8xbf16>, vector<8x8xf32> -> vector<8x8xf32>
    %cst_50 = arith.constant dense<0xFF800000> : vector<8xf32>
    %105 = vector.multi_reduction <maximumf>, %104, %cst_50 [1] : vector<8x8xf32> to vector<8xf32>
    %106 = vector.shape_cast %105 : vector<8xf32> to vector<8x1xf32>
    %107 = vector.broadcast %106 : vector<8x1xf32> to vector<8x8xf32>
    %108 = arith.subf %104, %107 : vector<8x8xf32>
    %109 = math.exp %108 : vector<8x8xf32>
    %cst_51 = arith.constant dense<0.000000e+00> : vector<8xf32>
    %110 = vector.multi_reduction <add>, %109, %cst_51 [1] : vector<8x8xf32> to vector<8xf32>
    %111 = vector.shape_cast %110 : vector<8xf32> to vector<8x1xf32>
    %112 = tpu.reciprocal %111 {approx = true} : vector<8x1xf32> -> vector<8x1xf32>
    %113 = vector.broadcast %112 : vector<8x1xf32> to vector<8x8xf32>
    %114 = arith.mulf %109, %113 : vector<8x8xf32>
    %115 = arith.truncf %114 : vector<8x8xf32> to vector<8x8xbf16>
    %cst_52 = arith.constant dense<0.000000e+00> : vector<8x8xf32>
    %116 = tpu.matmul %115, %103, %cst_52 {dimension_numbers = #tpu.dot_dimension_numbers<[1], [0], [0], [1], [0, 0, 1, 1], [], []>} : vector<8x8xbf16>, vector<8x8xbf16>, vector<8x8xf32> -> vector<8x8xf32>
    %117 = tpu.concatenate %44, %68, %92, %116 in 1 : vector<8x8xf32>, vector<8x8xf32>, vector<8x8xf32>, vector<8x8xf32> -> vector<8x32xf32>
    %118 = arith.truncf %117 : vector<8x32xf32> to vector<8x32xbf16>
    %119 = arith.index_cast %c0_i32_3 : i32 to index
    %c0_53 = arith.constant 0 : index
    %c0_54 = arith.constant 0 : index
    %120 = vector.load %arg11[%119, %c0_53, %c0_54] : memref<1x32x32xbf16, #tpu.memory_space<vmem>>, vector<1x32x32xbf16>
    %121 = vector.shape_cast %120 : vector<1x32x32xbf16> to vector<32x32xbf16>
    %cst_55 = arith.constant dense<0.000000e+00> : vector<8x32xf32>
    %122 = tpu.matmul %118, %121, %cst_55 {dimension_numbers = #tpu.dot_dimension_numbers<[1], [0], [0], [1], [0, 0, 1, 1], [], []>} : vector<8x32xbf16>, vector<32x32xbf16>, vector<8x32xf32> -> vector<8x32xf32>
    %123 = arith.addf %10, %122 : vector<8x32xf32>
    %c1_i32_56 = arith.constant 1 : i32
    %124 = arith.addf %7, %123 : vector<8x32xf32>
    %c0_57 = arith.constant 0 : index
    %c0_58 = arith.constant 0 : index
    %125 = vector.load %arg12[%c0_57, %c0_58] : memref<1x32xf32, #tpu.memory_space<vmem>>, vector<1x32xf32>
    %126 = vector.broadcast %125 : vector<1x32xf32> to vector<8x32xf32>
    %127 = arith.addf %124, %126 : vector<8x32xf32>
    %c0_59 = arith.constant 0 : index
    %c0_60 = arith.constant 0 : index
    %128 = vector.load %arg13[%c0_59, %c0_60] : memref<1x32xf32, #tpu.memory_space<vmem>>, vector<1x32xf32>
    %c0_61 = arith.constant 0 : index
    %c0_62 = arith.constant 0 : index
    %129 = vector.load %arg14[%c0_61, %c0_62] : memref<1x32xf32, #tpu.memory_space<vmem>>, vector<1x32xf32>
    %cst_63 = arith.constant dense<0.000000e+00> : vector<8xf32>
    %130 = vector.multi_reduction <add>, %127, %cst_63 [1] : vector<8x32xf32> to vector<8xf32>
    %131 = vector.shape_cast %130 : vector<8xf32> to vector<8x1xf32>
    %cst_64 = arith.constant 3.200000e+01 : f32
    %132 = vector.broadcast %cst_64 : f32 to vector<8x1xf32>
    %133 = arith.divf %131, %132 : vector<8x1xf32>
    %134 = vector.broadcast %133 : vector<8x1xf32> to vector<8x32xf32>
    %135 = arith.subf %127, %134 : vector<8x32xf32>
    %136 = arith.mulf %135, %135 : vector<8x32xf32>
    %cst_65 = arith.constant dense<0.000000e+00> : vector<8xf32>
    %137 = vector.multi_reduction <add>, %136, %cst_65 [1] : vector<8x32xf32> to vector<8xf32>
    %138 = vector.shape_cast %137 : vector<8xf32> to vector<8x1xf32>
    %cst_66 = arith.constant 3.200000e+01 : f32
    %139 = vector.broadcast %cst_66 : f32 to vector<8x1xf32>
    %140 = arith.divf %138, %139 : vector<8x1xf32>
    %141 = vector.broadcast %133 : vector<8x1xf32> to vector<8x32xf32>
    %142 = arith.subf %127, %141 : vector<8x32xf32>
    %cst_67 = arith.constant 9.99999974E-6 : f32
    %143 = vector.broadcast %cst_67 : f32 to vector<8x1xf32>
    %144 = arith.addf %140, %143 : vector<8x1xf32>
    %145 = math.rsqrt %144 : vector<8x1xf32>
    %146 = vector.broadcast %145 : vector<8x1xf32> to vector<8x32xf32>
    %147 = arith.mulf %142, %146 : vector<8x32xf32>
    %148 = vector.broadcast %128 : vector<1x32xf32> to vector<8x32xf32>
    %149 = arith.mulf %147, %148 : vector<8x32xf32>
    %150 = vector.broadcast %129 : vector<1x32xf32> to vector<8x32xf32>
    %151 = arith.addf %149, %150 : vector<8x32xf32>
    %152 = arith.truncf %151 : vector<8x32xf32> to vector<8x32xbf16>
    %c0_68 = arith.constant 0 : index
    %c0_69 = arith.constant 0 : index
    %153 = vector.load %arg15[%c0_68, %c0_69] : memref<32x128xbf16, #tpu.memory_space<vmem>>, vector<32x128xbf16>
    %cst_70 = arith.constant dense<0.000000e+00> : vector<8x128xf32>
    %154 = tpu.matmul %152, %153, %cst_70 {dimension_numbers = #tpu.dot_dimension_numbers<[1], [0], [0], [1], [0, 0, 1, 1], [], []>} : vector<8x32xbf16>, vector<32x128xbf16>, vector<8x128xf32> -> vector<8x128xf32>
    %c0_71 = arith.constant 0 : index
    %c0_72 = arith.constant 0 : index
    %155 = vector.load %arg16[%c0_71, %c0_72] : memref<1x128xf32, #tpu.memory_space<vmem>>, vector<1x128xf32>
    %156 = vector.broadcast %155 : vector<1x128xf32> to vector<8x128xf32>
    %157 = arith.addf %154, %156 : vector<8x128xf32>
    %cst_73 = arith.constant 5.000000e-01 : f32
    %158 = vector.broadcast %cst_73 : f32 to vector<8x128xf32>
    %159 = arith.mulf %158, %157 : vector<8x128xf32>
    %160 = arith.mulf %157, %157 : vector<8x128xf32>
    %161 = arith.mulf %160, %157 : vector<8x128xf32>
    %cst_74 = arith.constant 4.471500e-02 : f32
    %162 = vector.broadcast %cst_74 : f32 to vector<8x128xf32>
    %163 = arith.mulf %162, %161 : vector<8x128xf32>
    %164 = arith.addf %157, %163 : vector<8x128xf32>
    %cst_75 = arith.constant 0.797884583 : f32
    %165 = vector.broadcast %cst_75 : f32 to vector<8x128xf32>
    %166 = arith.mulf %165, %164 : vector<8x128xf32>
    %167 = math.tanh %166 : vector<8x128xf32>
    %cst_76 = arith.constant 1.000000e+00 : f32
    %168 = vector.broadcast %cst_76 : f32 to vector<8x128xf32>
    %169 = arith.addf %168, %167 : vector<8x128xf32>
    %170 = arith.mulf %159, %169 : vector<8x128xf32>
    %171 = arith.truncf %170 : vector<8x128xf32> to vector<8x128xbf16>
    %c0_77 = arith.constant 0 : index
    %c0_78 = arith.constant 0 : index
    %172 = vector.load %arg17[%c0_77, %c0_78] : memref<128x32xbf16, #tpu.memory_space<vmem>>, vector<128x32xbf16>
    %cst_79 = arith.constant dense<0.000000e+00> : vector<8x32xf32>
    %173 = tpu.matmul %171, %172, %cst_79 {dimension_numbers = #tpu.dot_dimension_numbers<[1], [0], [0], [1], [0, 0, 1, 1], [], []>} : vector<8x128xbf16>, vector<128x32xbf16>, vector<8x32xf32> -> vector<8x32xf32>
    %c0_80 = arith.constant 0 : index
    %c0_81 = arith.constant 0 : index
    %174 = vector.load %arg18[%c0_80, %c0_81] : memref<1x32xf32, #tpu.memory_space<vmem>>, vector<1x32xf32>
    %175 = vector.broadcast %174 : vector<1x32xf32> to vector<8x32xf32>
    %176 = arith.addf %173, %175 : vector<8x32xf32>
    %177 = arith.addf %127, %176 : vector<8x32xf32>
    %c0_82 = arith.constant 0 : index
    %c0_83 = arith.constant 0 : index
    %c0_84 = arith.constant 0 : index
    %178 = vector.load %arg19[%c0_82, %c0_83, %c0_84] : memref<1x8x32xf32, #tpu.memory_space<vmem>>, vector<1x8x32xf32>
    %179 = vector.shape_cast %178 : vector<1x8x32xf32> to vector<8x32xf32>
    %180 = vector.shape_cast %177 : vector<8x32xf32> to vector<1x8x32xf32>
    tpu.vector_store %arg19[%c0_82, %c0_83, %c0_84], %180 {strides = array<i32>} : memref<1x8x32xf32, #tpu.memory_space<vmem>>, vector<1x8x32xf32>,
    return
  }
  func.func @transform_0(%arg0: i32, %arg1: i32) -> (i32, i32, i32) {
    %c0_i32 = arith.constant 0 : i32
    %c0_i32_0 = arith.constant 0 : i32
    %c0_i32_1 = arith.constant 0 : i32
    return %arg0, %c0_i32, %c0_i32_0 : i32, i32, i32
  }
  func.func @transform_1(%arg0: i32, %arg1: i32) -> (i32, i32) {
    %c0_i32 = arith.constant 0 : i32
    %c0_i32_0 = arith.constant 0 : i32
    %c0_i32_1 = arith.constant 0 : i32
    return %c0_i32, %c0_i32_0 : i32, i32
  }
  func.func @transform_2(%arg0: i32, %arg1: i32) -> (i32, i32) {
    %c0_i32 = arith.constant 0 : i32
    %c0_i32_0 = arith.constant 0 : i32
    %c0_i32_1 = arith.constant 0 : i32
    return %c0_i32, %c0_i32_0 : i32, i32
  }
  func.func @transform_3(%arg0: i32, %arg1: i32) -> (i32, i32, i32) {
    %c0_i32 = arith.constant 0 : i32
    %c0_i32_0 = arith.constant 0 : i32
    %c0_i32_1 = arith.constant 0 : i32
    %c0_i32_2 = arith.constant 0 : i32
    return %c0_i32, %c0_i32_0, %c0_i32_1 : i32, i32, i32
  }
  func.func @transform_4(%arg0: i32, %arg1: i32) -> (i32, i32, i32) {
    %c0_i32 = arith.constant 0 : i32
    %c0_i32_0 = arith.constant 0 : i32
    %c0_i32_1 = arith.constant 0 : i32
    %c0_i32_2 = arith.constant 0 : i32
    return %c0_i32, %c0_i32_0, %c0_i32_1 : i32, i32, i32
  }
  func.func @transform_5(%arg0: i32, %arg1: i32) -> (i32, i32, i32) {
    %c0_i32 = arith.constant 0 : i32
    %c0_i32_0 = arith.constant 0 : i32
    %c0_i32_1 = arith.constant 0 : i32
    %c0_i32_2 = arith.constant 0 : i32
    return %c0_i32, %c0_i32_0, %c0_i32_1 : i32, i32, i32
  }
  func.func @transform_6(%arg0: i32, %arg1: i32) -> (i32, i32, i32) {
    %c0_i32 = arith.constant 0 : i32
    %c0_i32_0 = arith.constant 0 : i32
    %c0_i32_1 = arith.constant 0 : i32
    %c0_i32_2 = arith.constant 0 : i32
    return %c0_i32, %c0_i32_0, %c0_i32_1 : i32, i32, i32
  }
  func.func @transform_7(%arg0: i32, %arg1: i32) -> (i32, i32, i32) {
    %c0_i32 = arith.constant 0 : i32
    %c0_i32_0 = arith.constant 0 : i32
    %c0_i32_1 = arith.constant 0 : i32
    %c0_i32_2 = arith.constant 0 : i32
    return %c0_i32, %c0_i32_0, %c0_i32_1 : i32, i32, i32
  }
  func.func @transform_8(%arg0: i32, %arg1: i32) -> (i32, i32, i32) {
    %c0_i32 = arith.constant 0 : i32
    %c0_i32_0 = arith.constant 0 : i32
    %c0_i32_1 = arith.constant 0 : i32
    %c0_i32_2 = arith.constant 0 : i32
    return %c0_i32, %c0_i32_0, %c0_i32_1 : i32, i32, i32
  }
  func.func @transform_9(%arg0: i32, %arg1: i32) -> (i32, i32, i32) {
    %c0_i32 = arith.constant 0 : i32
    %c0_i32_0 = arith.constant 0 : i32
    %c0_i32_1 = arith.constant 0 : i32
    %c0_i32_2 = arith.constant 0 : i32
    return %c0_i32, %c0_i32_0, %c0_i32_1 : i32, i32, i32
  }
  func.func @transform_10(%arg0: i32, %arg1: i32) -> (i32, i32) {
    %c0_i32 = arith.constant 0 : i32
    %c0_i32_0 = arith.constant 0 : i32
    %c0_i32_1 = arith.constant 0 : i32
    return %c0_i32, %c0_i32_0 : i32, i32
  }
  func.func @transform_11(%arg0: i32, %arg1: i32) -> (i32, i32) {
    %c0_i32 = arith.constant 0 : i32
    %c0_i32_0 = arith.constant 0 : i32
    %c0_i32_1 = arith.constant 0 : i32
    return %c0_i32, %c0_i32_0 : i32, i32
  }
  func.func @transform_12(%arg0: i32, %arg1: i32) -> (i32, i32) {
    %c0_i32 = arith.constant 0 : i32
    %c0_i32_0 = arith.constant 0 : i32
    %c0_i32_1 = arith.constant 0 : i32
    return %c0_i32, %c0_i32_0 : i32, i32
  }
  func.func @transform_13(%arg0: i32, %arg1: i32) -> (i32, i32) {
    %c0_i32 = arith.constant 0 : i32
    %c0_i32_0 = arith.constant 0 : i32
    %c0_i32_1 = arith.constant 0 : i32
    return %c0_i32, %c0_i32_0 : i32, i32
  }
  func.func @transform_14(%arg0: i32, %arg1: i32) -> (i32, i32) {
    %c0_i32 = arith.constant 0 : i32
    %c0_i32_0 = arith.constant 0 : i32
    %c0_i32_1 = arith.constant 0 : i32
    return %c0_i32, %c0_i32_0 : i32, i32
  }
  func.func @transform_15(%arg0: i32, %arg1: i32) -> (i32, i32) {
    %c0_i32 = arith.constant 0 : i32
    %c0_i32_0 = arith.constant 0 : i32
    %c0_i32_1 = arith.constant 0 : i32
    return %c0_i32, %c0_i32_0 : i32, i32
  }
  func.func @transform_16(%arg0: i32, %arg1: i32) -> (i32, i32) {
    %c0_i32 = arith.constant 0 : i32
    %c0_i32_0 = arith.constant 0 : i32
    %c0_i32_1 = arith.constant 0 : i32
    return %c0_i32, %c0_i32_0 : i32, i32
  }
  func.func @transform_17(%arg0: i32, %arg1: i32) -> (i32, i32, i32) {
    %c0_i32 = arith.constant 0 : i32
    %c0_i32_0 = arith.constant 0 : i32
    return %arg0, %arg1, %c0_i32 : i32, i32, i32
  }
}

</mosaic_0001>

<llo_original>
// kernel: tpu_custom_call.1
$region0: #{tpu_custom_call.1}
  #allocation0 [shape = 'u32[]', space=smem, size = 0x4, offset = 0x4, fixed_abs, tag = 'smem constant byte address 0x4 - core index']
  #allocation1 [shape = 'u32[144,128]{1,0:T(1,128)}', space=vmem, size = 0x12000, scoped, tag = 'internal scratch']
  #allocation2 [shape = 'bf16[8,32]{1,0:T(8,128)(2,1)}', space=vmem, size = 0x800, scoped, tag = 'scratch operand']
  #allocation3 [shape = 'bf16[4,8,8]{2,1,0:T(8,128)(2,1)}', space=vmem, size = 0x2000, scoped, tag = 'scratch operand']
  #allocation4 [shape = 'bf16[4,8,8]{2,1,0:T(8,128)(2,1)}', space=vmem, size = 0x2000, scoped, tag = 'scratch operand']
  %s0 = inlined_call_operand.vmem [shape: f32[2,8,32], index: 0, kind: input, shape index: {}]
  %s1 = inlined_call_operand.vmem [shape: f32[1,32], index: 1, kind: input, shape index: {}]
  %s2 = inlined_call_operand.vmem [shape: f32[1,32], index: 2, kind: input, shape index: {}]
  %s3 = inlined_call_operand.vmem [shape: bf16[1,32,32], index: 3, kind: input, shape index: {}]
  %s4 = inlined_call_operand.hbm [shape: f32[1,1,32], index: 4, kind: input, shape index: {}]
  %s5 = inlined_call_operand.vmem [shape: bf16[1,32,32], index: 5, kind: input, shape index: {}]
  %s6 = inlined_call_operand.hbm [shape: f32[1,1,32], index: 6, kind: input, shape index: {}]
  %s7 = inlined_call_operand.vmem [shape: bf16[1,32,32], index: 7, kind: input, shape index: {}]
  %s8 = inlined_call_operand.hbm [shape: f32[1,1,32], index: 8, kind: input, shape index: {}]
  %s9 = inlined_call_operand.vmem [shape: bf16[1,32,32], index: 9, kind: input, shape index: {}]
  %s10 = inlined_call_operand.vmem [shape: f32[1,32], index: 10, kind: input, shape index: {}]
  %s11 = inlined_call_operand.vmem [shape: f32[1,32], index: 11, kind: input, shape index: {}]
  %s12 = inlined_call_operand.vmem [shape: f32[1,32], index: 12, kind: input, shape index: {}]
  %s13 = inlined_call_operand.vmem [shape: bf16[32,128], index: 13, kind: input, shape index: {}]
  %s14 = inlined_call_operand.vmem [shape: f32[1,128], index: 14, kind: input, shape index: {}]
  %s15 = inlined_call_operand.vmem [shape: bf16[128,32], index: 15, kind: input, shape index: {}]
  %s16 = inlined_call_operand.vmem [shape: f32[1,32], index: 16, kind: input, shape index: {}]
  %s17 = inlined_call_operand.hbm [shape: f32[2,8,32], index: 17, kind: output, shape index: {}]
  %s18 = sld [smem:[#allocation0]]
  $region117: #{tpu_custom_call.1} parent=0
    _
  %s20 = ssub.s32 1, %s18
  %s21 = scalar_select 0, %s20, %s18
  $region1: #{tpu_custom_call.1} parent=0
    #allocation5 [shape = 'u8[512]{0}', space=vmem, size = 0x400, scoped, tag = 'input window, operand 4, single buffered']
    #allocation6 [shape = 's32[2]{0}', space=sflag, size = 0x8, scoped, tag = 'scoped memory for tpu_custom_call.1']
    #allocation7 [shape = 's32[2]{0}', space=sflag, size = 0x8, scoped, tag = 'scoped memory for tpu_custom_call.1']
    #allocation8 [shape = 'u8[512]{0}', space=vmem, size = 0x400, scoped, tag = 'input window, operand 6, single buffered']
    #allocation9 [shape = 's32[1]{0}', space=sflag, size = 0x4, scoped, tag = 'scoped memory for tpu_custom_call.1']
    #allocation10 [shape = 'u8[512]{0}', space=vmem, size = 0x400, scoped, tag = 'input window, operand 8, single buffered']
    #allocation11 [shape = 'u8[8192]{0}', space=vmem, size = 0x2000, scoped, tag = 'output window, operand 0']
    %22 = vsyncpa [#allocation6], 0
    %23 = vsyncpa [#allocation9], 0
    %24 = vsyncpa [#allocation7], 0
    %s25 = scalar_lea.sflag [#allocation7], 1
    %26 = vsyncpa %s25, 0
    loop: start=0, step=1, limit=4
    $region2: #{tpu_custom_call.1} parent=1 // loop_pre_header
      _
    $region3: #{tpu_custom_call.1} parent=1 // loop_header
      %s28 = sphi 0, %s32
      %p29 = scmp.ge.s32.totalorder %s28, 4
      %s35 = sphi 0, %s47
      %s36 = sphi 0, %s43
      %s37 = sphi 0, %s35
      %s38 = sphi 0, %s36
      %s39 = sphi 0, %s37
      %s40 = sphi 0, %s38
      %s50 = sphi 0, %s52
      %s53 = sphi 0, %s50
      %s54 = sphi 0, %s53
      %s70 = sphi 0, %s54
      %s74 = sphi 0, %s74
      %s76 = sphi 0, %s74
      %s77 = sphi 0, %s76
      %s91 = sphi 0, %s77
      %s95 = sphi 0, %s95
      %s97 = sphi 0, %s95
      %s98 = sphi 0, %s97
      %s112 = sphi 0, %s98
      %s116 = sphi 0, %s116
      %s118 = sphi 0, %s116
      %s119 = sphi 0, %s118
      %s133 = sphi 0, %s119
      %s137 = sphi 0, %s137
      %s139 = sphi 0, %s137
      %s140 = sphi 0, %s139
      %s154 = sphi 0, %s140
      %s158 = sphi 0, %s158
      %s160 = sphi 0, %s158
      %s161 = sphi 0, %s160
      %s175 = sphi 0, %s161
      %s179 = sphi 0, %s179
      %s181 = sphi 0, %s179
      %s182 = sphi 0, %s181
      %s196 = sphi 0, %s182
      %s200 = sphi 0, %s200
      %s202 = sphi 0, %s200
      %s203 = sphi 0, %s202
      %s217 = sphi 0, %s203
      %s221 = sphi 0, %s221
      %s223 = sphi 0, %s221
      %s224 = sphi 0, %s223
      %s238 = sphi 0, %s224
      %s242 = sphi 0, %s242
      %s244 = sphi 0, %s242
      %s245 = sphi 0, %s244
      %s259 = sphi 0, %s245
      %s263 = sphi 0, %s263
      %s265 = sphi 0, %s263
      %s266 = sphi 0, %s265
      %s280 = sphi 0, %s266
      %s284 = sphi 0, %s284
      %s286 = sphi 0, %s284
      %s287 = sphi 0, %s286
      %s301 = sphi 0, %s287
      %s305 = sphi 0, %s305
      %s307 = sphi 0, %s305
      %s308 = sphi 0, %s307
      %s322 = sphi 0, %s308
      %s326 = sphi 0, %s326
      %s328 = sphi 0, %s326
      %s329 = sphi 0, %s328
      %s343 = sphi 0, %s329
      %s347 = sphi 0, %s347
      %s349 = sphi 0, %s347
      %s350 = sphi 0, %s349
      %s364 = sphi 0, %s350
      %s368 = sphi 0, %s368
      %s370 = sphi 0, %s368
      %s371 = sphi 0, %s370
      %s385 = sphi 0, %s371
      %s389 = sphi 0, %s389
      %s391 = sphi 0, %s389
      %s392 = sphi 0, %s391
      %s406 = sphi 0, %s392
      %s414 = sphi 0, %s416
      %s417 = sphi 0, %s414
      %s418 = sphi 0, %s417
      %s434 = sphi 0, %s418
    $region4: #{tpu_custom_call.1} parent=1 // loop_header_branch
      %31 = sbr.rel (%p29) target = $region8
    $region5: #{tpu_custom_call.1} parent=1 // loop_body
      %s33 = ssub.s32 %s28, 1
      %s34 = ssub.s32 %s28, 2
      %s41 = sadd.s32 1, %s36
      %p42 = scmp.ge.s32.totalorder %s41, 1
      %s43 = scalar_select %p42, 0, %s41
      %s44 = sadd.s32 1, %s35
      %s45 = scalar_select %p42, %s44, %s35
      %p46 = scmp.ge.s32.totalorder %s45, 2
      %s47 = scalar_select %p46, 0, %s45
      %s48 = ssub.s32 %s35, %s47
      %p49 = scmp.eq.s32.totalorder %s48, 0
      %s51 = sadd.s32 %s50, 1
      %s52 = scalar_select %p49, %s50, %s51
      %p55 = pneg %p49
      %p56 = scmp.eq.s32.totalorder %s28, 1
      %p57 = por %p55, %p56
      %p58 = scmp.ne.s32.totalorder %s50, %s53
      %p59 = scmp.eq.s32.totalorder %s28, 0
      %p60 = por %p58, %p59
      %p61 = scmp.ne.s32.totalorder %s50, %s53
      %p62 = scmp.eq.s32.totalorder %s33, 1
      %p63 = por %p61, %p62
      %p64 = scmp.ne.s32.totalorder %s53, %s54
      %p65 = scmp.eq.s32.totalorder %s33, 0
      %p66 = por %p64, %p65
      %p67 = scmp.ne.s32.totalorder %s53, %s54
      %p68 = scmp.eq.s32.totalorder %s34, 1
      %p69 = por %p67, %p68
      %p71 = scmp.ne.s32.totalorder %s54, %s70
      %p72 = scmp.eq.s32.totalorder %s34, 0
      %p73 = por %p71, %p72
      %s75 = sadd.s32 %s74, 1
      %p78 = scmp.eq.s32.totalorder %s28, 1
      %p79 = scmp.ne.s32.totalorder %s74, %s76
      %p80 = scmp.eq.s32.totalorder %s28, 0
      %p81 = por %p79, %p80
      %p82 = scmp.ne.s32.totalorder %s74, %s76
      %p83 = scmp.eq.s32.totalorder %s33, 1
      %p84 = por %p82, %p83
      %p85 = scmp.ne.s32.totalorder %s76, %s77
      %p86 = scmp.eq.s32.totalorder %s33, 0
      %p87 = por %p85, %p86
      %p88 = scmp.ne.s32.totalorder %s76, %s77
      %p89 = scmp.eq.s32.totalorder %s34, 1
      %p90 = por %p88, %p89
      %p92 = scmp.ne.s32.totalorder %s77, %s91
      %p93 = scmp.eq.s32.totalorder %s34, 0
      %p94 = por %p92, %p93
      %s96 = sadd.s32 %s95, 1
      %p99 = scmp.eq.s32.totalorder %s28, 1
      %p100 = scmp.ne.s32.totalorder %s95, %s97
      %p101 = scmp.eq.s32.totalorder %s28, 0
      %p102 = por %p100, %p101
      %p103 = scmp.ne.s32.totalorder %s95, %s97
      %p104 = scmp.eq.s32.totalorder %s33, 1
      %p105 = por %p103, %p104
      %p106 = scmp.ne.s32.totalorder %s97, %s98
      %p107 = scmp.eq.s32.totalorder %s33, 0
      %p108 = por %p106, %p107
      %p109 = scmp.ne.s32.totalorder %s97, %s98
      %p110 = scmp.eq.s32.totalorder %s34, 1
      %p111 = por %p109, %p110
      %p113 = scmp.ne.s32.totalorder %s98, %s112
      %p114 = scmp.eq.s32.totalorder %s34, 0
      %p115 = por %p113, %p114
      %s117 = sadd.s32 %s116, 1
      %p120 = scmp.eq.s32.totalorder %s28, 1
      %p121 = scmp.ne.s32.totalorder %s116, %s118
      %p122 = scmp.eq.s32.totalorder %s28, 0
      %p123 = por %p121, %p122
      %p124 = scmp.ne.s32.totalorder %s116, %s118
      %p125 = scmp.eq.s32.totalorder %s33, 1
      %p126 = por %p124, %p125
      %p127 = scmp.ne.s32.totalorder %s118, %s119
      %p128 = scmp.eq.s32.totalorder %s33, 0
      %p129 = por %p127, %p128
      %p130 = scmp.ne.s32.totalorder %s118, %s119
      %p131 = scmp.eq.s32.totalorder %s34, 1
      %p132 = por %p130, %p131
      %p134 = scmp.ne.s32.totalorder %s119, %s133
      %p135 = scmp.eq.s32.totalorder %s34, 0
      %p136 = por %p134, %p135
      %s138 = sadd.s32 %s137, 1
      %p141 = scmp.eq.s32.totalorder %s28, 1
      %p142 = scmp.ne.s32.totalorder %s137, %s139
      %p143 = scmp.eq.s32.totalorder %s28, 0
      %p144 = por %p142, %p143
      %p145 = scmp.ne.s32.totalorder %s137, %s139
      %p146 = scmp.eq.s32.totalorder %s33, 1
      %p147 = por %p145, %p146
      %p148 = scmp.ne.s32.totalorder %s139, %s140
      %p149 = scmp.eq.s32.totalorder %s33, 0
      %p150 = por %p148, %p149
      %p151 = scmp.ne.s32.totalorder %s139, %s140
      %p152 = scmp.eq.s32.totalorder %s34, 1
      %p153 = por %p151, %p152
      %p155 = scmp.ne.s32.totalorder %s140, %s154
      %p156 = scmp.eq.s32.totalorder %s34, 0
      %p157 = por %p155, %p156
      %s159 = sadd.s32 %s158, 1
      %p162 = scmp.eq.s32.totalorder %s28, 1
      %p163 = scmp.ne.s32.totalorder %s158, %s160
      %p164 = scmp.eq.s32.totalorder %s28, 0
      %p165 = por %p163, %p164
      %p166 = scmp.ne.s32.totalorder %s158, %s160
      %p167 = scmp.eq.s32.totalorder %s33, 1
      %p168 = por %p166, %p167
      %p169 = scmp.ne.s32.totalorder %s160, %s161
      %p170 = scmp.eq.s32.totalorder %s33, 0
      %p171 = por %p169, %p170
      %p172 = scmp.ne.s32.totalorder %s160, %s161
      %p173 = scmp.eq.s32.totalorder %s34, 1
      %p174 = por %p172, %p173
      %p176 = scmp.ne.s32.totalorder %s161, %s175
      %p177 = scmp.eq.s32.totalorder %s34, 0
      %p178 = por %p176, %p177
      %s180 = sadd.s32 %s179, 1
      %p183 = scmp.eq.s32.totalorder %s28, 1
      %p184 = scmp.ne.s32.totalorder %s179, %s181
      %p185 = scmp.eq.s32.totalorder %s28, 0
      %p186 = por %p184, %p185
      %p187 = scmp.ne.s32.totalorder %s179, %s181
      %p188 = scmp.eq.s32.totalorder %s33, 1
      %p189 = por %p187, %p188
      %p190 = scmp.ne.s32.totalorder %s181, %s182
      %p191 = scmp.eq.s32.totalorder %s33, 0
      %p192 = por %p190, %p191
      %p193 = scmp.ne.s32.totalorder %s181, %s182
      %p194 = scmp.eq.s32.totalorder %s34, 1
      %p195 = por %p193, %p194
      %p197 = scmp.ne.s32.totalorder %s182, %s196
      %p198 = scmp.eq.s32.totalorder %s34, 0
      %p199 = por %p197, %p198
      %s201 = sadd.s32 %s200, 1
      %p204 = scmp.eq.s32.totalorder %s28, 1
      %p205 = scmp.ne.s32.totalorder %s200, %s202
      %p206 = scmp.eq.s32.totalorder %s28, 0
      %p207 = por %p205, %p206
      %p208 = scmp.ne.s32.totalorder %s200, %s202
      %p209 = scmp.eq.s32.totalorder %s33, 1
      %p210 = por %p208, %p209
      %p211 = scmp.ne.s32.totalorder %s202, %s203
      %p212 = scmp.eq.s32.totalorder %s33, 0
      %p213 = por %p211, %p212
      %p214 = scmp.ne.s32.totalorder %s202, %s203
      %p215 = scmp.eq.s32.totalorder %s34, 1
      %p216 = por %p214, %p215
      %p218 = scmp.ne.s32.totalorder %s203, %s217
      %p219 = scmp.eq.s32.totalorder %s34, 0
      %p220 = por %p218, %p219
      %s222 = sadd.s32 %s221, 1
      %p225 = scmp.eq.s32.totalorder %s28, 1
      %p226 = scmp.ne.s32.totalorder %s221, %s223
      %p227 = scmp.eq.s32.totalorder %s28, 0
      %p228 = por %p226, %p227
      %p229 = scmp.ne.s32.totalorder %s221, %s223
      %p230 = scmp.eq.s32.totalorder %s33, 1
      %p231 = por %p229, %p230
      %p232 = scmp.ne.s32.totalorder %s223, %s224
      %p233 = scmp.eq.s32.totalorder %s33, 0
      %p234 = por %p232, %p233
      %p235 = scmp.ne.s32.totalorder %s223, %s224
      %p236 = scmp.eq.s32.totalorder %s34, 1
      %p237 = por %p235, %p236
      %p239 = scmp.ne.s32.totalorder %s224, %s238
      %p240 = scmp.eq.s32.totalorder %s34, 0
      %p241 = por %p239, %p240
      %s243 = sadd.s32 %s242, 1
      %p246 = scmp.eq.s32.totalorder %s28, 1
      %p247 = scmp.ne.s32.totalorder %s242, %s244
      %p248 = scmp.eq.s32.totalorder %s28, 0
      %p249 = por %p247, %p248
      %p250 = scmp.ne.s32.totalorder %s242, %s244
      %p251 = scmp.eq.s32.totalorder %s33, 1
      %p252 = por %p250, %p251
      %p253 = scmp.ne.s32.totalorder %s244, %s245
      %p254 = scmp.eq.s32.totalorder %s33, 0
      %p255 = por %p253, %p254
      %p256 = scmp.ne.s32.totalorder %s244, %s245
      %p257 = scmp.eq.s32.totalorder %s34, 1
      %p258 = por %p256, %p257
      %p260 = scmp.ne.s32.totalorder %s245, %s259
      %p261 = scmp.eq.s32.totalorder %s34, 0
      %p262 = por %p260, %p261
      %s264 = sadd.s32 %s263, 1
      %p267 = scmp.eq.s32.totalorder %s28, 1
      %p268 = scmp.ne.s32.totalorder %s263, %s265
      %p269 = scmp.eq.s32.totalorder %s28, 0
      %p270 = por %p268, %p269
      %p271 = scmp.ne.s32.totalorder %s263, %s265
      %p272 = scmp.eq.s32.totalorder %s33, 1
      %p273 = por %p271, %p272
      %p274 = scmp.ne.s32.totalorder %s265, %s266
      %p275 = scmp.eq.s32.totalorder %s33, 0
      %p276 = por %p274, %p275
      %p277 = scmp.ne.s32.totalorder %s265, %s266
      %p278 = scmp.eq.s32.totalorder %s34, 1
      %p279 = por %p277, %p278
      %p281 = scmp.ne.s32.totalorder %s266, %s280
      %p282 = scmp.eq.s32.totalorder %s34, 0
      %p283 = por %p281, %p282
      %s285 = sadd.s32 %s284, 1
      %p288 = scmp.eq.s32.totalorder %s28, 1
      %p289 = scmp.ne.s32.totalorder %s284, %s286
      %p290 = scmp.eq.s32.totalorder %s28, 0
      %p291 = por %p289, %p290
      %p292 = scmp.ne.s32.totalorder %s284, %s286
      %p293 = scmp.eq.s32.totalorder %s33, 1
      %p294 = por %p292, %p293
      %p295 = scmp.ne.s32.totalorder %s286, %s287
      %p296 = scmp.eq.s32.totalorder %s33, 0
      %p297 = por %p295, %p296
      %p298 = scmp.ne.s32.totalorder %s286, %s287
      %p299 = scmp.eq.s32.totalorder %s34, 1
      %p300 = por %p298, %p299
      %p302 = scmp.ne.s32.totalorder %s287, %s301
      %p303 = scmp.eq.s32.totalorder %s34, 0
      %p304 = por %p302, %p303
      %s306 = sadd.s32 %s305, 1
      %p309 = scmp.eq.s32.totalorder %s28, 1
      %p310 = scmp.ne.s32.totalorder %s305, %s307
      %p311 = scmp.eq.s32.totalorder %s28, 0
      %p312 = por %p310, %p311
      %p313 = scmp.ne.s32.totalorder %s305, %s307
      %p314 = scmp.eq.s32.totalorder %s33, 1
      %p315 = por %p313, %p314
      %p316 = scmp.ne.s32.totalorder %s307, %s308
      %p317 = scmp.eq.s32.totalorder %s33, 0
      %p318 = por %p316, %p317
      %p319 = scmp.ne.s32.totalorder %s307, %s308
      %p320 = scmp.eq.s32.totalorder %s34, 1
      %p321 = por %p319, %p320
      %p323 = scmp.ne.s32.totalorder %s308, %s322
      %p324 = scmp.eq.s32.totalorder %s34, 0
      %p325 = por %p323, %p324
      %s327 = sadd.s32 %s326, 1
      %p330 = scmp.eq.s32.totalorder %s28, 1
      %p331 = scmp.ne.s32.totalorder %s326, %s328
      %p332 = scmp.eq.s32.totalorder %s28, 0
      %p333 = por %p331, %p332
      %p334 = scmp.ne.s32.totalorder %s326, %s328
      %p335 = scmp.eq.s32.totalorder %s33, 1
      %p336 = por %p334, %p335
      %p337 = scmp.ne.s32.totalorder %s328, %s329
      %p338 = scmp.eq.s32.totalorder %s33, 0
      %p339 = por %p337, %p338
      %p340 = scmp.ne.s32.totalorder %s328, %s329
      %p341 = scmp.eq.s32.totalorder %s34, 1
      %p342 = por %p340, %p341
      %p344 = scmp.ne.s32.totalorder %s329, %s343
      %p345 = scmp.eq.s32.totalorder %s34, 0
      %p346 = por %p344, %p345
      %s348 = sadd.s32 %s347, 1
      %p351 = scmp.eq.s32.totalorder %s28, 1
      %p352 = scmp.ne.s32.totalorder %s347, %s349
      %p353 = scmp.eq.s32.totalorder %s28, 0
      %p354 = por %p352, %p353
      %p355 = scmp.ne.s32.totalorder %s347, %s349
      %p356 = scmp.eq.s32.totalorder %s33, 1
      %p357 = por %p355, %p356
      %p358 = scmp.ne.s32.totalorder %s349, %s350
      %p359 = scmp.eq.s32.totalorder %s33, 0
      %p360 = por %p358, %p359
      %p361 = scmp.ne.s32.totalorder %s349, %s350
      %p362 = scmp.eq.s32.totalorder %s34, 1
      %p363 = por %p361, %p362
      %p365 = scmp.ne.s32.totalorder %s350, %s364
      %p366 = scmp.eq.s32.totalorder %s34, 0
      %p367 = por %p365, %p366
      %s369 = sadd.s32 %s368, 1
      %p372 = scmp.eq.s32.totalorder %s28, 1
      %p373 = scmp.ne.s32.totalorder %s368, %s370
      %p374 = scmp.eq.s32.totalorder %s28, 0
      %p375 = por %p373, %p374
      %p376 = scmp.ne.s32.totalorder %s368, %s370
      %p377 = scmp.eq.s32.totalorder %s33, 1
      %p378 = por %p376, %p377
      %p379 = scmp.ne.s32.totalorder %s370, %s371
      %p380 = scmp.eq.s32.totalorder %s33, 0
      %p381 = por %p379, %p380
      %p382 = scmp.ne.s32.totalorder %s370, %s371
      %p383 = scmp.eq.s32.totalorder %s34, 1
      %p384 = por %p382, %p383
      %p386 = scmp.ne.s32.totalorder %s371, %s385
      %p387 = scmp.eq.s32.totalorder %s34, 0
      %p388 = por %p386, %p387
      %s390 = sadd.s32 %s389, 1
      %p393 = scmp.eq.s32.totalorder %s28, 1
      %p394 = scmp.ne.s32.totalorder %s389, %s391
      %p395 = scmp.eq.s32.totalorder %s28, 0
      %p396 = por %p394, %p395
      %p397 = scmp.ne.s32.totalorder %s389, %s391
      %p398 = scmp.eq.s32.totalorder %s33, 1
      %p399 = por %p397, %p398
      %p400 = scmp.ne.s32.totalorder %s391, %s392
      %p401 = scmp.eq.s32.totalorder %s33, 0
      %p402 = por %p400, %p401
      %p403 = scmp.ne.s32.totalorder %s391, %s392
      %p404 = scmp.eq.s32.totalorder %s34, 1
      %p405 = por %p403, %p404
      %p407 = scmp.ne.s32.totalorder %s392, %s406
      %p408 = scmp.eq.s32.totalorder %s34, 0
      %p409 = por %p407, %p408
      %s410 = ssub.s32 %s35, %s47
      %s411 = ssub.s32 %s36, %s43
      %s412 = sor.u32 %s410, %s411
      %p413 = scmp.eq.s32.totalorder %s412, 0
      %s415 = sadd.s32 %s414, 1
      %s416 = scalar_select %p413, %s414, %s415
      %p419 = pneg %p413
      %p420 = scmp.eq.s32.totalorder %s28, 1
      %p421 = por %p419, %p420
      %p422 = scmp.ne.s32.totalorder %s414, %s417
      %p423 = scmp.eq.s32.totalorder %s28, 0
      %p424 = por %p422, %p423
      %p425 = scmp.ne.s32.totalorder %s414, %s417
      %p426 = scmp.eq.s32.totalorder %s33, 1
      %p427 = por %p425, %p426
      %p428 = scmp.ne.s32.totalorder %s417, %s418
      %p429 = scmp.eq.s32.totalorder %s33, 0
      %p430 = por %p428, %p429
      %p431 = scmp.ne.s32.totalorder %s417, %s418
      %p432 = scmp.eq.s32.totalorder %s34, 1
      %p433 = por %p431, %p432
      %p435 = scmp.ne.s32.totalorder %s418, %s434
      %p436 = scmp.eq.s32.totalorder %s34, 0
      %p437 = por %p435, %p436
      %p438 = scmp.le.s32.totalorder 1, %s28
      %p439 = scmp.lt.s32.totalorder %s28, 3
      %p440 = pnand %p438, %p439
      %p441 = pneg %p440
      // Predicated region
      $region9: #{tpu_custom_call.1} parent=5 // pred_check
        _
      $region10: #{tpu_custom_call.1} parent=5 // pred_check_branch
        %443 = sbr.rel (%p440) target = $region12
      $region11: #{tpu_custom_call.1} parent=5 // pred_region
        %s444 = ssub.s32 %s28, 1
        // Predicated region
        $region13: #{tpu_custom_call.1} parent=11 // pred_check
          %p445 = pneg %p87
        $region14: #{tpu_custom_call.1} parent=11 // pred_check_branch
          %447 = sbr.rel (%p445) target = $region16
        $region15: #{tpu_custom_call.1} parent=11 // pred_region
          _
        $region16: #{tpu_custom_call.1} parent=11 // pred_fallthru
          _
        // Predicated region
        $region17: #{tpu_custom_call.1} parent=11 // pred_check
          %p448 = pneg %p108
        $region18: #{tpu_custom_call.1} parent=11 // pred_check_branch
          %450 = sbr.rel (%p448) target = $region20
        $region19: #{tpu_custom_call.1} parent=11 // pred_region
          _
        $region20: #{tpu_custom_call.1} parent=11 // pred_fallthru
          _
        // Predicated region
        $region21: #{tpu_custom_call.1} parent=11 // pred_check
          %p451 = pneg %p129
        $region22: #{tpu_custom_call.1} parent=11 // pred_check_branch
          %453 = sbr.rel (%p451) target = $region24
        $region23: #{tpu_custom_call.1} parent=11 // pred_region
          _
        $region24: #{tpu_custom_call.1} parent=11 // pred_fallthru
          _
        // Predicated region
        $region25: #{tpu_custom_call.1} parent=11 // pred_check
          %p454 = pneg %p150
        $region26: #{tpu_custom_call.1} parent=11 // pred_check_branch
          %456 = sbr.rel (%p454) target = $region28
        $region27: #{tpu_custom_call.1} parent=11 // pred_region
          %s458 = ssub.s32 16, 16
          %459 = vsyncadd [#allocation6], %s458
          %s461 = sshll.u32 [#allocation5], 4
          %s462 = int_to_ptr.vmem [resolvable:$true] %s461
          %464 = dma.hbm_to_vmem [thread:$0]  %s4, 16, %s462, [#allocation6]
        $region28: #{tpu_custom_call.1} parent=11 // pred_fallthru
          _
        // Predicated region
        $region29: #{tpu_custom_call.1} parent=11 // pred_check
          %p465 = pneg %p171
        $region30: #{tpu_custom_call.1} parent=11 // pred_check_branch
          %467 = sbr.rel (%p465) target = $region32
        $region31: #{tpu_custom_call.1} parent=11 // pred_region
          _
        $region32: #{tpu_custom_call.1} parent=11 // pred_fallthru
          _
        // Predicated region
        $region33: #{tpu_custom_call.1} parent=11 // pred_check
          %p468 = pneg %p192
        $region34: #{tpu_custom_call.1} parent=11 // pred_check_branch
          %470 = sbr.rel (%p468) target = $region36
        $region35: #{tpu_custom_call.1} parent=11 // pred_region
          %s472 = ssub.s32 16, 16
          %473 = vsyncadd [#allocation9], %s472
          %s475 = sshll.u32 [#allocation8], 4
          %s476 = int_to_ptr.vmem [resolvable:$true] %s475
          %478 = dma.hbm_to_vmem [thread:$0]  %s6, 16, %s476, [#allocation9]
        $region36: #{tpu_custom_call.1} parent=11 // pred_fallthru
          _
        // Predicated region
        $region37: #{tpu_custom_call.1} parent=11 // pred_check
          %p479 = pneg %p213
        $region38: #{tpu_custom_call.1} parent=11 // pred_check_branch
          %481 = sbr.rel (%p479) target = $region40
        $region39: #{tpu_custom_call.1} parent=11 // pred_region
          _
        $region40: #{tpu_custom_call.1} parent=11 // pred_fallthru
          _
        // Predicated region
        $region41: #{tpu_custom_call.1} parent=11 // pred_check
          %p482 = pneg %p234
        $region42: #{tpu_custom_call.1} parent=11 // pred_check_branch
          %484 = sbr.rel (%p482) target = $region44
        $region43: #{tpu_custom_call.1} parent=11 // pred_region
          %s486 = ssub.s32 16, 16
          %487 = vsyncadd [#allocation9], %s486
          %s489 = sshll.u32 [#allocation10], 4
          %s490 = int_to_ptr.vmem [resolvable:$true] %s489
          %492 = dma.hbm_to_vmem [thread:$0]  %s8, 16, %s490, [#allocation9]
        $region44: #{tpu_custom_call.1} parent=11 // pred_fallthru
          _
        // Predicated region
        $region45: #{tpu_custom_call.1} parent=11 // pred_check
          %p493 = pneg %p255
        $region46: #{tpu_custom_call.1} parent=11 // pred_check_branch
          %495 = sbr.rel (%p493) target = $region48
        $region47: #{tpu_custom_call.1} parent=11 // pred_region
          _
        $region48: #{tpu_custom_call.1} parent=11 // pred_fallthru
          _
        // Predicated region
        $region49: #{tpu_custom_call.1} parent=11 // pred_check
          %p496 = pneg %p276
        $region50: #{tpu_custom_call.1} parent=11 // pred_check_branch
          %498 = sbr.rel (%p496) target = $region52
        $region51: #{tpu_custom_call.1} parent=11 // pred_region
          _
        $region52: #{tpu_custom_call.1} parent=11 // pred_fallthru
          _
        // Predicated region
        $region53: #{tpu_custom_call.1} parent=11 // pred_check
          %p499 = pneg %p297
        $region54: #{tpu_custom_call.1} parent=11 // pred_check_branch
          %501 = sbr.rel (%p499) target = $region56
        $region55: #{tpu_custom_call.1} parent=11 // pred_region
          _
        $region56: #{tpu_custom_call.1} parent=11 // pred_fallthru
          _
        // Predicated region
        $region57: #{tpu_custom_call.1} parent=11 // pred_check
          %p502 = pneg %p318
        $region58: #{tpu_custom_call.1} parent=11 // pred_check_branch
          %504 = sbr.rel (%p502) target = $region60
        $region59: #{tpu_custom_call.1} parent=11 // pred_region
          _
        $region60: #{tpu_custom_call.1} parent=11 // pred_fallthru
          _
        // Predicated region
        $region61: #{tpu_custom_call.1} parent=11 // pred_check
          %p505 = pneg %p339
        $region62: #{tpu_custom_call.1} parent=11 // pred_check_branch
          %507 = sbr.rel (%p505) target = $region64
        $region63: #{tpu_custom_call.1} parent=11 // pred_region
          _
        $region64: #{tpu_custom_call.1} parent=11 // pred_fallthru
          _
        // Predicated region
        $region65: #{tpu_custom_call.1} parent=11 // pred_check
          %p508 = pneg %p360
        $region66: #{tpu_custom_call.1} parent=11 // pred_check_branch
          %510 = sbr.rel (%p508) target = $region68
        $region67: #{tpu_custom_call.1} parent=11 // pred_region
          _
        $region68: #{tpu_custom_call.1} parent=11 // pred_fallthru
          _
        // Predicated region
        $region69: #{tpu_custom_call.1} parent=11 // pred_check
          %p511 = pneg %p381
        $region70: #{tpu_custom_call.1} parent=11 // pred_check_branch
          %513 = sbr.rel (%p511) target = $region72
        $region71: #{tpu_custom_call.1} parent=11 // pred_region
          _
        $region72: #{tpu_custom_call.1} parent=11 // pred_fallthru
          _
        // Predicated region
        $region73: #{tpu_custom_call.1} parent=11 // pred_check
          %p514 = pneg %p402
        $region74: #{tpu_custom_call.1} parent=11 // pred_check_branch
          %516 = sbr.rel (%p514) target = $region76
        $region75: #{tpu_custom_call.1} parent=11 // pred_region
          _
        $region76: #{tpu_custom_call.1} parent=11 // pred_fallthru
          _
      $region12: #{tpu_custom_call.1} parent=5 // pred_fallthru
        _
      %p517 = scmp.lt.s32.totalorder %s28, 2
      // Predicated region
      $region77: #{tpu_custom_call.1} parent=5 // pred_check
        %p518 = pneg %p517
      $region78: #{tpu_custom_call.1} parent=5 // pred_check_branch
        %520 = sbr.rel (%p518) target = $region80
      $region79: #{tpu_custom_call.1} parent=5 // pred_region
        // Predicated region
        $region81: #{tpu_custom_call.1} parent=79 // pred_check
          %p521 = pneg %p60
        $region82: #{tpu_custom_call.1} parent=79 // pred_check_branch
          %523 = sbr.rel (%p521) target = $region84
        $region83: #{tpu_custom_call.1} parent=79 // pred_region
          %p524 = scmp.lt.s32.totalorder %s35, 1
          %s525 = scalar_select %p524, %s35, 1
          %s526 = smul.addr %s525, 8
          %s527 = scalar_lea.vmem %s0, %s526
        $region84: #{tpu_custom_call.1} parent=79 // pred_fallthru
          _
      $region80: #{tpu_custom_call.1} parent=5 // pred_fallthru
        _
      %p528 = scmp.le.s32.totalorder 1, %s28
      %p529 = scmp.lt.s32.totalorder %s28, 3
      %p530 = pnand %p528, %p529
      %p531 = pneg %p530
      // Predicated region
      $region85: #{tpu_custom_call.1} parent=5 // pred_check
        _
      $region86: #{tpu_custom_call.1} parent=5 // pred_check_branch
        %533 = sbr.rel (%p530) target = $region88
      $region87: #{tpu_custom_call.1} parent=5 // pred_region
        %s534 = ssub.s32 %s28, 1
        // Predicated region
        $region89: #{tpu_custom_call.1} parent=87 // pred_check
          %p535 = pneg %p150
        $region90: #{tpu_custom_call.1} parent=87 // pred_check_branch
          %537 = sbr.rel (%p535) target = $region92
        $region91: #{tpu_custom_call.1} parent=87 // pred_region
          %538 = dma.done [#allocation6], 16
        $region92: #{tpu_custom_call.1} parent=87 // pred_fallthru
          _
        // Predicated region
        $region93: #{tpu_custom_call.1} parent=87 // pred_check
          %p539 = pneg %p192
        $region94: #{tpu_custom_call.1} parent=87 // pred_check_branch
          %541 = sbr.rel (%p539) target = $region96
        $region95: #{tpu_custom_call.1} parent=87 // pred_region
          %542 = dma.done [#allocation9], 16
        $region96: #{tpu_custom_call.1} parent=87 // pred_fallthru
          _
        // Predicated region
        $region97: #{tpu_custom_call.1} parent=87 // pred_check
          %p543 = pneg %p234
        $region98: #{tpu_custom_call.1} parent=87 // pred_check_branch
          %545 = sbr.rel (%p543) target = $region100
        $region99: #{tpu_custom_call.1} parent=87 // pred_region
          %546 = dma.done [#allocation9], 16
        $region100: #{tpu_custom_call.1} parent=87 // pred_fallthru
          _
        %p547 = scmp.lt.s32.totalorder %s37, 1
        %s548 = scalar_select %p547, %s37, 1
        %s549 = smul.addr %s548, 8
        %s550 = scalar_lea.vmem %s0, %s549
        %p551 = pneg %p66
        %p552 = pneg %p63
        %p553 = pneg %p87
        %p554 = pneg %p84
        %p555 = pneg %p108
        %p556 = pneg %p105
        %p557 = pneg %p129
        %p558 = pneg %p126
        %p559 = pneg %p150
        %p560 = pneg %p147
        %p561 = pneg %p171
        %p562 = pneg %p168
        %p563 = pneg %p192
        %p564 = pneg %p189
        %p565 = pneg %p213
        %p566 = pneg %p210
        %p567 = pneg %p234
        %p568 = pneg %p231
        %p569 = pneg %p255
        %p570 = pneg %p252
        %p571 = pneg %p276
        %p572 = pneg %p273
        %p573 = pneg %p297
        %p574 = pneg %p294
        %p575 = pneg %p318
        %p576 = pneg %p315
        %p577 = pneg %p339
        %p578 = pneg %p336
        %p579 = pneg %p360
        %p580 = pneg %p357
        %p581 = pneg %p381
        %p582 = pneg %p378
        %p583 = pneg %p402
        %p584 = pneg %p399
        %p585 = pneg %p430
        %p586 = pneg %p427
        %s587 = sand.u32 %s417, 1
        %s588 = scalar_lea.sflag [#allocation7], %s587
        %s589 = sand.u32 %s417, 1
        %s590 = smul.addr %s589, 8
        %s591 = scalar_lea.vmem [#allocation11], %s590
        %p592 = scmp.lt.s32.totalorder %s37, 1
        %s593 = scalar_select %p592, %s37, 1
        %s594 = smul.addr %s593, 8
        %s595 = scalar_lea.vmem %s0, %s594
        %p597 = scmp.eq.s32.totalorder %s38, 0
        // Predicated region
        $region101: #{tpu_custom_call.1} parent=87 // pred_check
          %p598 = pneg %p597
        $region102: #{tpu_custom_call.1} parent=87 // pred_check_branch
          %600 = sbr.rel (%p598) target = $region104
        $region103: #{tpu_custom_call.1} parent=87 // pred_region
          %v601 = vld [vmem:[%s595] sm:$0xff]
          %v602 = vld [vmem:[%s1] sm:$0x1]
          %v603 = vld [vmem:[%s2] sm:$0x1]
          %vm604 = vcmask 261120
          %v605 = vsel %vm604, %v601, 0.0
          %606 = vadd.xlane.f32.xlu0 %v605
          %v607 = vpop.xlane.xlu0 %606
          %v608 = vrcp.pop 32.0
          %v609 = vmul.f32 %v607, %v608
          %v610 = vsub.f32 %v601, %v609
          %v611 = vmul.f32 %v610, %v610
          %v612 = vsel %vm604, %v611, 0.0
          %613 = vadd.xlane.f32.xlu0 %v612
          %v614 = vpop.xlane.xlu0 %613
          %v615 = vmul.f32 %v614, %v608
          %v616 = vadd.f32 %v615, 1e-05
          %v617 = vrsqrt.pop %v616
          %v618 = vmul.f32 %v610, %v617
          %v620 = vlaneseq
          %v621 = vshrl.u32 %v620, 7
          %v622 = vsub.s32 0, %v621
          %v623 = vrot.slane %v602, %v622
          %v625 = vmul.f32 %v618, %v623
          %v627 = vlaneseq
          %v628 = vshrl.u32 %v627, 7
          %v629 = vsub.s32 0, %v628
          %v630 = vrot.slane %v603, %v629
          %v632 = vadd.f32 %v625, %v630
          %v633 = vpack.c.bf16 %v632, %v632
          %vm634 = vcmask 257024
          %635 = vst.msk [vmem:[#allocation2] sm:$0xf] %vm634, %v633
          %v636 = vld [vmem:[%s5] sm:$0xf]
          %v637 = vld [vmem:[%s5 + $0x4] sm:$0xf]
          %v638 = vld [vmem:[%s5 + $0x8] sm:$0xf]
          %v639 = vld [vmem:[%s5 + $0xc] sm:$0xf]
          %v640 = vld [vmem:[#allocation8] sm:$0x1]
          %v642 = vlaneseq
          %v643 = vshrl.u32 %v642, 7
          %v644 = vsub.s32 0, %v643
          %v645 = vrot.slane %v640, %v644
          %v651 = vunpack.c.l.b16 %v636
          %v652 = vunpack.c.l.b16 %v637
          %v653 = vunpack.c.l.b16 %v638
          %v654 = vunpack.c.l.b16 %v639
          %v655 = vpack.c.b16 %v652, %v651
          %v656 = vpack.c.b16 %v654, %v653
          %v660 = vsel %vm604, %v633, 0
          %662 = vmatprep.subr.bf16.mxu0 0
          %663 = vmatpush1.bf16.msra.mxu0 %v655
          %664 = vmatprep.subr.bf16.mxu0 0
          %665 = vmatpush1.bf16.msra.mxu0 %v656
          %666 = vmatprep.subr.bf16.mxu0 0
          %667 = vmatpush1.bf16.msra.mxu0 0
          %668 = vmatprep.subr.bf16.mxu0 0
          %669 = vmatpush1.bf16.msra.mxu0 0
          %670 = vmatprep.subr.bf16.mxu0 0
          %671 = vmatpush1.bf16.msra.mxu0 0
          %672 = vmatprep.subr.bf16.mxu0 0
          %673 = vmatpush1.bf16.msra.mxu0 0
          %674 = vmatprep.subr.bf16.mxu0 0
          %675 = vmatpush1.bf16.msra.mxu0 0
          %676 = vmatprep.subr.bf16.mxu0 0
          %677 = vmatpush1.bf16.msra.mxu0 0
          %678 = vmatprep.subr.bf16.mxu0 0
          %679 = vmatpush1.bf16.msra.mxu0 0
          %680 = vmatprep.subr.bf16.mxu0 0
          %681 = vmatpush1.bf16.msra.mxu0 0
          %682 = vmatprep.subr.bf16.mxu0 0
          %683 = vmatpush1.bf16.msra.mxu0 0
          %684 = vmatprep.subr.bf16.mxu0 0
          %685 = vmatpush1.bf16.msra.mxu0 0
          %686 = vmatprep.subr.bf16.mxu0 0
          %687 = vmatpush1.bf16.msra.mxu0 0
          %688 = vmatprep.subr.bf16.mxu0 0
          %689 = vmatpush1.bf16.msra.mxu0 0
          %690 = vmatprep.subr.bf16.mxu0 0
          %691 = vmatpush1.bf16.msra.mxu0 0
          %692 = vmatprep.subr.bf16.mxu0 0
          %693 = vmatpush1.bf16.msra.mxu0 0
          %694 = vmatprep.mubr.bf16.mxu0 0
          %695 = vmatmul.mubr.bf16.gmra.mrb[0].mxu0 %v660
          %v696 = vpop.f32.mrb[0].mxu0
          %v697 = vadd.f32 %v645, %v696
          %v698 = vpop.f32.mrb[0].mxu0
          %v699 = vpop.f32.mrb[0].mxu0
          %v700 = vpop.f32.mrb[0].mxu0
          %701 = vdwg.mxu0
          %v702 = vpack.c.bf16 %v697, %v697
          %v703 = vld [vmem:[%s7] sm:$0xf]
          %v704 = vld [vmem:[%s7 + $0x4] sm:$0xf]
          %v705 = vld [vmem:[%s7 + $0x8] sm:$0xf]
          %v706 = vld [vmem:[%s7 + $0xc] sm:$0xf]
          %v707 = vld [vmem:[#allocation10] sm:$0x1]
          %v709 = vlaneseq
          %v710 = vshrl.u32 %v709, 7
          %v711 = vsub.s32 0, %v710
          %v712 = vrot.slane %v707, %v711
          %v718 = vunpack.c.l.b16 %v703
          %v719 = vunpack.c.l.b16 %v704
          %v720 = vunpack.c.l.b16 %v705
          %v721 = vunpack.c.l.b16 %v706
          %v722 = vpack.c.b16 %v719, %v718
          %v723 = vpack.c.b16 %v721, %v720
          %726 = vmatprep.subr.bf16.mxu0 0
          %727 = vmatpush1.bf16.msra.mxu0 %v722
          %728 = vmatprep.subr.bf16.mxu0 0
          %729 = vmatpush1.bf16.msra.mxu0 %v723
          %730 = vmatprep.subr.bf16.mxu0 0
          %731 = vmatpush1.bf16.msra.mxu0 0
          %732 = vmatprep.subr.bf16.mxu0 0
          %733 = vmatpush1.bf16.msra.mxu0 0
          %734 = vmatprep.subr.bf16.mxu0 0
          %735 = vmatpush1.bf16.msra.mxu0 0
          %736 = vmatprep.subr.bf16.mxu0 0
          %737 = vmatpush1.bf16.msra.mxu0 0
          %738 = vmatprep.subr.bf16.mxu0 0
          %739 = vmatpush1.bf16.msra.mxu0 0
          %740 = vmatprep.subr.bf16.mxu0 0
          %741 = vmatpush1.bf16.msra.mxu0 0
          %742 = vmatprep.subr.bf16.mxu0 0
          %743 = vmatpush1.bf16.msra.mxu0 0
          %744 = vmatprep.subr.bf16.mxu0 0
          %745 = vmatpush1.bf16.msra.mxu0 0
          %746 = vmatprep.subr.bf16.mxu0 0
          %747 = vmatpush1.bf16.msra.mxu0 0
          %748 = vmatprep.subr.bf16.mxu0 0
          %749 = vmatpush1.bf16.msra.mxu0 0
          %750 = vmatprep.subr.bf16.mxu0 0
          %751 = vmatpush1.bf16.msra.mxu0 0
          %752 = vmatprep.subr.bf16.mxu0 0
          %753 = vmatpush1.bf16.msra.mxu0 0
          %754 = vmatprep.subr.bf16.mxu0 0
          %755 = vmatpush1.bf16.msra.mxu0 0
          %756 = vmatprep.subr.bf16.mxu0 0
          %757 = vmatpush1.bf16.msra.mxu0 0
          %758 = vmatprep.mubr.bf16.mxu0 0
          %759 = vmatmul.mubr.bf16.gmra.mrb[0].mxu0 %v660
          %v760 = vpop.f32.mrb[0].mxu0
          %v761 = vadd.f32 %v712, %v760
          %v762 = vpop.f32.mrb[0].mxu0
          %v763 = vpop.f32.mrb[0].mxu0
          %v764 = vpop.f32.mrb[0].mxu0
          %765 = vdwg.mxu0
          %v766 = vpack.c.bf16 %v761, %v761
          %vm767 = vcmask 60416
          %768 = vst.msk [vmem:[#allocation3] sm:$0xf] %vm767, %v702
          %769 = vst.msk [vmem:[#allocation4] sm:$0xf] %vm767, %v766
          %v771 = vunpack.c.l.b16 %v702
          %v772 = vpack.c.b16 %v771, %v771
          %773 = vrot.lane.b32.xlu0 %v772, 120
          %v774 = vpop.permute.xlu0 %773
          %s776 = scalar_lea.vmem [#allocation3], 4
          %777 = vst.msk [vmem:[%s776] sm:$0xf] %vm767, %v774
          %v779 = vunpack.c.l.b16 %v766
          %v780 = vpack.c.b16 %v779, %v779
          %781 = vrot.lane.b32.xlu0 %v780, 120
          %v782 = vpop.permute.xlu0 %781
          %s784 = scalar_lea.vmem [#allocation4], 4
          %785 = vst.msk [vmem:[%s784] sm:$0xf] %vm767, %v782
          %786 = vrot.lane.b32.xlu0 %v772, 112
          %v787 = vpop.permute.xlu0 %786
          %s789 = scalar_lea.vmem [#allocation3], 8
          %790 = vst.msk [vmem:[%s789] sm:$0xf] %vm767, %v787
          %791 = vrot.lane.b32.xlu0 %v780, 112
          %v792 = vpop.permute.xlu0 %791
          %s794 = scalar_lea.vmem [#allocation4], 8
          %795 = vst.msk [vmem:[%s794] sm:$0xf] %vm767, %v792
          %796 = vrot.lane.b32.xlu0 %v772, 104
          %v797 = vpop.permute.xlu0 %796
          %s799 = scalar_lea.vmem [#allocation3], 12
          %800 = vst.msk [vmem:[%s799] sm:$0xf] %vm767, %v797
          %801 = vrot.lane.b32.xlu0 %v780, 104
          %v802 = vpop.permute.xlu0 %801
          %s804 = scalar_lea.vmem [#allocation4], 12
          %805 = vst.msk [vmem:[%s804] sm:$0xf] %vm767, %v802
        $region104: #{tpu_custom_call.1} parent=87 // pred_fallthru
          _
        %s806 = smul.u32 %s38, 8
        %s807 = scalar_lea.vmem %s595, %s806
        %v808 = vld [vmem:[%s807] sm:$0xff]
        %s809 = sshra.s32 %s806, 3
        %s810 = sand.u32 %s806, 7
        %s811 = smul.addr %s809, 4
        %s812 = scalar_lea.vmem [#allocation2], %s811
        %v813 = vld [vmem:[%s812] sm:$0xf]
        %v814 = vld [vmem:[%s3] sm:$0xf]
        %v815 = vld [vmem:[%s3 + $0x4] sm:$0xf]
        %v816 = vld [vmem:[%s3 + $0x8] sm:$0xf]
        %v817 = vld [vmem:[%s3 + $0xc] sm:$0xf]
        %v818 = vld [vmem:[#allocation5] sm:$0x1]
        %v820 = vlaneseq
        %v821 = vshrl.u32 %v820, 7
        %v822 = vsub.s32 0, %v821
        %v823 = vrot.slane %v818, %v822
        %v829 = vunpack.c.l.b16 %v814
        %v830 = vunpack.c.l.b16 %v815
        %v831 = vunpack.c.l.b16 %v816
        %v832 = vunpack.c.l.b16 %v817
        %v833 = vpack.c.b16 %v830, %v829
        %v834 = vpack.c.b16 %v832, %v831
        %vm837 = vcmask 261120
        %v839 = vsel %vm837, %v813, 0
        %841 = vmatprep.subr.bf16.mxu0 0
        %842 = vmatpush1.bf16.msra.mxu0 %v833
        %843 = vmatprep.subr.bf16.mxu0 0
        %844 = vmatpush1.bf16.msra.mxu0 %v834
        %845 = vmatprep.subr.bf16.mxu0 0
        %846 = vmatpush1.bf16.msra.mxu0 0
        %847 = vmatprep.subr.bf16.mxu0 0
        %848 = vmatpush1.bf16.msra.mxu0 0
        %849 = vmatprep.subr.bf16.mxu0 0
        %850 = vmatpush1.bf16.msra.mxu0 0
        %851 = vmatprep.subr.bf16.mxu0 0
        %852 = vmatpush1.bf16.msra.mxu0 0
        %853 = vmatprep.subr.bf16.mxu0 0
        %854 = vmatpush1.bf16.msra.mxu0 0
        %855 = vmatprep.subr.bf16.mxu0 0
        %856 = vmatpush1.bf16.msra.mxu0 0
        %857 = vmatprep.subr.bf16.mxu0 0
        %858 = vmatpush1.bf16.msra.mxu0 0
        %859 = vmatprep.subr.bf16.mxu0 0
        %860 = vmatpush1.bf16.msra.mxu0 0
        %861 = vmatprep.subr.bf16.mxu0 0
        %862 = vmatpush1.bf16.msra.mxu0 0
        %863 = vmatprep.subr.bf16.mxu0 0
        %864 = vmatpush1.bf16.msra.mxu0 0
        %865 = vmatprep.subr.bf16.mxu0 0
        %866 = vmatpush1.bf16.msra.mxu0 0
        %867 = vmatprep.subr.bf16.mxu0 0
        %868 = vmatpush1.bf16.msra.mxu0 0
        %869 = vmatprep.subr.bf16.mxu0 0
        %870 = vmatpush1.bf16.msra.mxu0 0
        %871 = vmatprep.subr.bf16.mxu0 0
        %872 = vmatpush1.bf16.msra.mxu0 0
        %873 = vmatprep.mubr.bf16.mxu0 0
        %874 = vmatmul.mubr.bf16.gmra.mrb[0].mxu0 %v839
        %v875 = vpop.f32.mrb[0].mxu0
        %v876 = vadd.f32 %v823, %v875
        %v877 = vpop.f32.mrb[0].mxu0
        %v878 = vpop.f32.mrb[0].mxu0
        %v879 = vpop.f32.mrb[0].mxu0
        %880 = vdwg.mxu0
        %v881 = vpack.c.bf16 %v876, %v876
        %v882 = vld [vmem:[#allocation3] sm:$0xf]
        %v883 = vld [vmem:[#allocation4] sm:$0xf]
        %vm884 = vcmask 64512
        %v886 = vsel %vm884, %v881, 0
        %v889 = vsel %vm884, %v882, 0
        %891 = vmatprep.subr.bf16.mxu0 0
        %892 = vmatpush1.bf16.xpose.msra.mxu0 %v889
        %893 = vmatprep.subr.bf16.mxu0 0
        %894 = vmatpush1.bf16.xpose.msra.mxu0 0
        %895 = vmatprep.subr.bf16.mxu0 0
        %896 = vmatpush1.bf16.xpose.msra.mxu0 0
        %897 = vmatprep.subr.bf16.mxu0 0
        %898 = vmatpush1.bf16.xpose.msra.mxu0 0
        %899 = vmatprep.subr.bf16.mxu0 0
        %900 = vmatpush1.bf16.xpose.msra.mxu0 0
        %901 = vmatprep.subr.bf16.mxu0 0
        %902 = vmatpush1.bf16.xpose.msra.mxu0 0
        %903 = vmatprep.subr.bf16.mxu0 0
        %904 = vmatpush1.bf16.xpose.msra.mxu0 0
        %905 = vmatprep.subr.bf16.mxu0 0
        %906 = vmatpush1.bf16.xpose.msra.mxu0 0
        %907 = vmatprep.subr.bf16.mxu0 0
        %908 = vmatpush1.bf16.xpose.msra.mxu0 0
        %909 = vmatprep.subr.bf16.mxu0 0
        %910 = vmatpush1.bf16.xpose.msra.mxu0 0
        %911 = vmatprep.subr.bf16.mxu0 0
        %912 = vmatpush1.bf16.xpose.msra.mxu0 0
        %913 = vmatprep.subr.bf16.mxu0 0
        %914 = vmatpush1.bf16.xpose.msra.mxu0 0
        %915 = vmatprep.subr.bf16.mxu0 0
        %916 = vmatpush1.bf16.xpose.msra.mxu0 0
        %917 = vmatprep.subr.bf16.mxu0 0
        %918 = vmatpush1.bf16.xpose.msra.mxu0 0
        %919 = vmatprep.subr.bf16.mxu0 0
        %920 = vmatpush1.bf16.xpose.msra.mxu0 0
        %921 = vmatprep.subr.bf16.mxu0 0
        %922 = vmatpush1.bf16.xpose.msra.mxu0 0
        %923 = vmatprep.mubr.bf16.mxu0 0
        %924 = vmatmul.mubr.bf16.gmra.mrb[0].mxu0 %v886
        %v925 = vpop.f32.mrb[0].mxu0
        %v926 = vadd.f32 0.0, %v925
        %v927 = vpop.f32.mrb[0].mxu0
        %v928 = vpop.f32.mrb[0].mxu0
        %v929 = vpop.f32.mrb[0].mxu0
        %930 = vdwg.mxu0
        %v931 = vsel %vm884, %v926, -inf
        %932 = vmax.xlane.f32.xlu0 %v931
        %v933 = vpop.xlane.xlu0 %932
        %v934 = vsub.f32 %v926, %v933
        %v935 = vmul.f32 %v934, 1.442695
        %v936 = vpow.pop %v935
        %v937 = vsel %vm884, %v936, 0.0
        %938 = vadd.xlane.f32.xlu0 %v937
        %v939 = vpop.xlane.xlu0 %938
        %v940 = vrcp.pop %v939
        %v941 = vmul.f32 %v936, %v940
        %v942 = vpack.c.bf16 %v941, %v941
        %v944 = vsel %vm884, %v942, 0
        %vm946 = vcmask 1043456
        %v948 = vsel %vm946, %v883, 0
        %950 = vmatprep.subr.bf16.mxu0 0
        %951 = vmatpush1.bf16.msra.mxu0 %v948
        %952 = vmatprep.subr.bf16.mxu0 0
        %953 = vmatpush1.bf16.msra.mxu0 0
        %954 = vmatprep.subr.bf16.mxu0 0
        %955 = vmatpush1.bf16.msra.mxu0 0
        %956 = vmatprep.subr.bf16.mxu0 0
        %957 = vmatpush1.bf16.msra.mxu0 0
        %958 = vmatprep.subr.bf16.mxu0 0
        %959 = vmatpush1.bf16.msra.mxu0 0
        %960 = vmatprep.subr.bf16.mxu0 0
        %961 = vmatpush1.bf16.msra.mxu0 0
        %962 = vmatprep.subr.bf16.mxu0 0
        %963 = vmatpush1.bf16.msra.mxu0 0
        %964 = vmatprep.subr.bf16.mxu0 0
        %965 = vmatpush1.bf16.msra.mxu0 0
        %966 = vmatprep.subr.bf16.mxu0 0
        %967 = vmatpush1.bf16.msra.mxu0 0
        %968 = vmatprep.subr.bf16.mxu0 0
        %969 = vmatpush1.bf16.msra.mxu0 0
        %970 = vmatprep.subr.bf16.mxu0 0
        %971 = vmatpush1.bf16.msra.mxu0 0
        %972 = vmatprep.subr.bf16.mxu0 0
        %973 = vmatpush1.bf16.msra.mxu0 0
        %974 = vmatprep.subr.bf16.mxu0 0
        %975 = vmatpush1.bf16.msra.mxu0 0
        %976 = vmatprep.subr.bf16.mxu0 0
        %977 = vmatpush1.bf16.msra.mxu0 0
        %978 = vmatprep.subr.bf16.mxu0 0
        %979 = vmatpush1.bf16.msra.mxu0 0
        %980 = vmatprep.subr.bf16.mxu0 0
        %981 = vmatpush1.bf16.msra.mxu0 0
        %982 = vmatprep.mubr.bf16.mxu0 0
        %983 = vmatmul.mubr.bf16.gmra.mrb[0].mxu0 %v944
        %v984 = vpop.f32.mrb[0].mxu0
        %v985 = vadd.f32 0.0, %v984
        %v986 = vpop.f32.mrb[0].mxu0
        %v987 = vpop.f32.mrb[0].mxu0
        %v988 = vpop.f32.mrb[0].mxu0
        %989 = vdwg.mxu0
        %s990 = scalar_lea.vmem [#allocation3], 4
        %v991 = vld [vmem:[%s990] sm:$0xf]
        %s992 = scalar_lea.vmem [#allocation4], 4
        %v993 = vld [vmem:[%s992] sm:$0xf]
        %995 = vrot.lane.b32.xlu0 %v881, 120
        %v996 = vpop.permute.xlu0 %995
        %v998 = vsel %vm884, %v996, 0
        %v1001 = vsel %vm884, %v991, 0
        %1003 = vmatprep.subr.bf16.mxu0 0
        %1004 = vmatpush1.bf16.xpose.msra.mxu0 %v1001
        %1005 = vmatprep.subr.bf16.mxu0 0
        %1006 = vmatpush1.bf16.xpose.msra.mxu0 0
        %1007 = vmatprep.subr.bf16.mxu0 0
        %1008 = vmatpush1.bf16.xpose.msra.mxu0 0
        %1009 = vmatprep.subr.bf16.mxu0 0
        %1010 = vmatpush1.bf16.xpose.msra.mxu0 0
        %1011 = vmatprep.subr.bf16.mxu0 0
        %1012 = vmatpush1.bf16.xpose.msra.mxu0 0
        %1013 = vmatprep.subr.bf16.mxu0 0
        %1014 = vmatpush1.bf16.xpose.msra.mxu0 0
        %1015 = vmatprep.subr.bf16.mxu0 0
        %1016 = vmatpush1.bf16.xpose.msra.mxu0 0
        %1017 = vmatprep.subr.bf16.mxu0 0
        %1018 = vmatpush1.bf16.xpose.msra.mxu0 0
        %1019 = vmatprep.subr.bf16.mxu0 0
        %1020 = vmatpush1.bf16.xpose.msra.mxu0 0
        %1021 = vmatprep.subr.bf16.mxu0 0
        %1022 = vmatpush1.bf16.xpose.msra.mxu0 0
        %1023 = vmatprep.subr.bf16.mxu0 0
        %1024 = vmatpush1.bf16.xpose.msra.mxu0 0
        %1025 = vmatprep.subr.bf16.mxu0 0
        %1026 = vmatpush1.bf16.xpose.msra.mxu0 0
        %1027 = vmatprep.subr.bf16.mxu0 0
        %1028 = vmatpush1.bf16.xpose.msra.mxu0 0
        %1029 = vmatprep.subr.bf16.mxu0 0
        %1030 = vmatpush1.bf16.xpose.msra.mxu0 0
        %1031 = vmatprep.subr.bf16.mxu0 0
        %1032 = vmatpush1.bf16.xpose.msra.mxu0 0
        %1033 = vmatprep.subr.bf16.mxu0 0
        %1034 = vmatpush1.bf16.xpose.msra.mxu0 0
        %1035 = vmatprep.mubr.bf16.mxu0 0
        %1036 = vmatmul.mubr.bf16.gmra.mrb[0].mxu0 %v998
        %v1037 = vpop.f32.mrb[0].mxu0
        %v1038 = vadd.f32 0.0, %v1037
        %v1039 = vpop.f32.mrb[0].mxu0
        %v1040 = vpop.f32.mrb[0].mxu0
        %v1041 = vpop.f32.mrb[0].mxu0
        %1042 = vdwg.mxu0
        %v1043 = vsel %vm884, %v1038, -inf
        %1044 = vmax.xlane.f32.xlu0 %v1043
        %v1045 = vpop.xlane.xlu0 %1044
        %v1046 = vsub.f32 %v1038, %v1045
        %v1047 = vmul.f32 %v1046, 1.442695
        %v1048 = vpow.pop %v1047
        %v1049 = vsel %vm884, %v1048, 0.0
        %1050 = vadd.xlane.f32.xlu0 %v1049
        %v1051 = vpop.xlane.xlu0 %1050
        %v1052 = vrcp.pop %v1051
        %v1053 = vmul.f32 %v1048, %v1052
        %v1054 = vpack.c.bf16 %v1053, %v1053
        %v1056 = vsel %vm884, %v1054, 0
        %v1059 = vsel %vm946, %v993, 0
        %1061 = vmatprep.subr.bf16.mxu0 0
        %1062 = vmatpush1.bf16.msra.mxu0 %v1059
        %1063 = vmatprep.subr.bf16.mxu0 0
        %1064 = vmatpush1.bf16.msra.mxu0 0
        %1065 = vmatprep.subr.bf16.mxu0 0
        %1066 = vmatpush1.bf16.msra.mxu0 0
        %1067 = vmatprep.subr.bf16.mxu0 0
        %1068 = vmatpush1.bf16.msra.mxu0 0
        %1069 = vmatprep.subr.bf16.mxu0 0
        %1070 = vmatpush1.bf16.msra.mxu0 0
        %1071 = vmatprep.subr.bf16.mxu0 0
        %1072 = vmatpush1.bf16.msra.mxu0 0
        %1073 = vmatprep.subr.bf16.mxu0 0
        %1074 = vmatpush1.bf16.msra.mxu0 0
        %1075 = vmatprep.subr.bf16.mxu0 0
        %1076 = vmatpush1.bf16.msra.mxu0 0
        %1077 = vmatprep.subr.bf16.mxu0 0
        %1078 = vmatpush1.bf16.msra.mxu0 0
        %1079 = vmatprep.subr.bf16.mxu0 0
        %1080 = vmatpush1.bf16.msra.mxu0 0
        %1081 = vmatprep.subr.bf16.mxu0 0
        %1082 = vmatpush1.bf16.msra.mxu0 0
        %1083 = vmatprep.subr.bf16.mxu0 0
        %1084 = vmatpush1.bf16.msra.mxu0 0
        %1085 = vmatprep.subr.bf16.mxu0 0
        %1086 = vmatpush1.bf16.msra.mxu0 0
        %1087 = vmatprep.subr.bf16.mxu0 0
        %1088 = vmatpush1.bf16.msra.mxu0 0
        %1089 = vmatprep.subr.bf16.mxu0 0
        %1090 = vmatpush1.bf16.msra.mxu0 0
        %1091 = vmatprep.subr.bf16.mxu0 0
        %1092 = vmatpush1.bf16.msra.mxu0 0
        %1093 = vmatprep.mubr.bf16.mxu0 0
        %1094 = vmatmul.mubr.bf16.gmra.mrb[0].mxu0 %v1056
        %v1095 = vpop.f32.mrb[0].mxu0
        %v1096 = vadd.f32 0.0, %v1095
        %v1097 = vpop.f32.mrb[0].mxu0
        %v1098 = vpop.f32.mrb[0].mxu0
        %v1099 = vpop.f32.mrb[0].mxu0
        %1100 = vdwg.mxu0
        %s1101 = scalar_lea.vmem [#allocation3], 8
        %v1102 = vld [vmem:[%s1101] sm:$0xf]
        %s1103 = scalar_lea.vmem [#allocation4], 8
        %v1104 = vld [vmem:[%s1103] sm:$0xf]
        %1105 = vrot.lane.b32.xlu0 %v881, 112
        %v1106 = vpop.permute.xlu0 %1105
        %v1108 = vsel %vm884, %v1106, 0
        %v1111 = vsel %vm884, %v1102, 0
        %1113 = vmatprep.subr.bf16.mxu0 0
        %1114 = vmatpush1.bf16.xpose.msra.mxu0 %v1111
        %1115 = vmatprep.subr.bf16.mxu0 0
        %1116 = vmatpush1.bf16.xpose.msra.mxu0 0
        %1117 = vmatprep.subr.bf16.mxu0 0
        %1118 = vmatpush1.bf16.xpose.msra.mxu0 0
        %1119 = vmatprep.subr.bf16.mxu0 0
        %1120 = vmatpush1.bf16.xpose.msra.mxu0 0
        %1121 = vmatprep.subr.bf16.mxu0 0
        %1122 = vmatpush1.bf16.xpose.msra.mxu0 0
        %1123 = vmatprep.subr.bf16.mxu0 0
        %1124 = vmatpush1.bf16.xpose.msra.mxu0 0
        %1125 = vmatprep.subr.bf16.mxu0 0
        %1126 = vmatpush1.bf16.xpose.msra.mxu0 0
        %1127 = vmatprep.subr.bf16.mxu0 0
        %1128 = vmatpush1.bf16.xpose.msra.mxu0 0
        %1129 = vmatprep.subr.bf16.mxu0 0
        %1130 = vmatpush1.bf16.xpose.msra.mxu0 0
        %1131 = vmatprep.subr.bf16.mxu0 0
        %1132 = vmatpush1.bf16.xpose.msra.mxu0 0
        %1133 = vmatprep.subr.bf16.mxu0 0
        %1134 = vmatpush1.bf16.xpose.msra.mxu0 0
        %1135 = vmatprep.subr.bf16.mxu0 0
        %1136 = vmatpush1.bf16.xpose.msra.mxu0 0
        %1137 = vmatprep.subr.bf16.mxu0 0
        %1138 = vmatpush1.bf16.xpose.msra.mxu0 0
        %1139 = vmatprep.subr.bf16.mxu0 0
        %1140 = vmatpush1.bf16.xpose.msra.mxu0 0
        %1141 = vmatprep.subr.bf16.mxu0 0
        %1142 = vmatpush1.bf16.xpose.msra.mxu0 0
        %1143 = vmatprep.subr.bf16.mxu0 0
        %1144 = vmatpush1.bf16.xpose.msra.mxu0 0
        %1145 = vmatprep.mubr.bf16.mxu0 0
        %1146 = vmatmul.mubr.bf16.gmra.mrb[0].mxu0 %v1108
        %v1147 = vpop.f32.mrb[0].mxu0
        %v1148 = vadd.f32 0.0, %v1147
        %v1149 = vpop.f32.mrb[0].mxu0
        %v1150 = vpop.f32.mrb[0].mxu0
        %v1151 = vpop.f32.mrb[0].mxu0
        %1152 = vdwg.mxu0
        %v1153 = vsel %vm884, %v1148, -inf
        %1154 = vmax.xlane.f32.xlu0 %v1153
        %v1155 = vpop.xlane.xlu0 %1154
        %v1156 = vsub.f32 %v1148, %v1155
        %v1157 = vmul.f32 %v1156, 1.442695
        %v1158 = vpow.pop %v1157
        %v1159 = vsel %vm884, %v1158, 0.0
        %1160 = vadd.xlane.f32.xlu0 %v1159
        %v1161 = vpop.xlane.xlu0 %1160
        %v1162 = vrcp.pop %v1161
        %v1163 = vmul.f32 %v1158, %v1162
        %v1164 = vpack.c.bf16 %v1163, %v1163
        %v1166 = vsel %vm884, %v1164, 0
        %v1169 = vsel %vm946, %v1104, 0
        %1171 = vmatprep.subr.bf16.mxu0 0
        %1172 = vmatpush1.bf16.msra.mxu0 %v1169
        %1173 = vmatprep.subr.bf16.mxu0 0
        %1174 = vmatpush1.bf16.msra.mxu0 0
        %1175 = vmatprep.subr.bf16.mxu0 0
        %1176 = vmatpush1.bf16.msra.mxu0 0
        %1177 = vmatprep.subr.bf16.mxu0 0
        %1178 = vmatpush1.bf16.msra.mxu0 0
        %1179 = vmatprep.subr.bf16.mxu0 0
        %1180 = vmatpush1.bf16.msra.mxu0 0
        %1181 = vmatprep.subr.bf16.mxu0 0
        %1182 = vmatpush1.bf16.msra.mxu0 0
        %1183 = vmatprep.subr.bf16.mxu0 0
        %1184 = vmatpush1.bf16.msra.mxu0 0
        %1185 = vmatprep.subr.bf16.mxu0 0
        %1186 = vmatpush1.bf16.msra.mxu0 0
        %1187 = vmatprep.subr.bf16.mxu0 0
        %1188 = vmatpush1.bf16.msra.mxu0 0
        %1189 = vmatprep.subr.bf16.mxu0 0
        %1190 = vmatpush1.bf16.msra.mxu0 0
        %1191 = vmatprep.subr.bf16.mxu0 0
        %1192 = vmatpush1.bf16.msra.mxu0 0
        %1193 = vmatprep.subr.bf16.mxu0 0
        %1194 = vmatpush1.bf16.msra.mxu0 0
        %1195 = vmatprep.subr.bf16.mxu0 0
        %1196 = vmatpush1.bf16.msra.mxu0 0
        %1197 = vmatprep.subr.bf16.mxu0 0
        %1198 = vmatpush1.bf16.msra.mxu0 0
        %1199 = vmatprep.subr.bf16.mxu0 0
        %1200 = vmatpush1.bf16.msra.mxu0 0
        %1201 = vmatprep.subr.bf16.mxu0 0
        %1202 = vmatpush1.bf16.msra.mxu0 0
        %1203 = vmatprep.mubr.bf16.mxu0 0
        %1204 = vmatmul.mubr.bf16.gmra.mrb[0].mxu0 %v1166
        %v1205 = vpop.f32.mrb[0].mxu0
        %v1206 = vadd.f32 0.0, %v1205
        %v1207 = vpop.f32.mrb[0].mxu0
        %v1208 = vpop.f32.mrb[0].mxu0
        %v1209 = vpop.f32.mrb[0].mxu0
        %1210 = vdwg.mxu0
        %s1211 = scalar_lea.vmem [#allocation3], 12
        %v1212 = vld [vmem:[%s1211] sm:$0xf]
        %s1213 = scalar_lea.vmem [#allocation4], 12
        %v1214 = vld [vmem:[%s1213] sm:$0xf]
        %1215 = vrot.lane.b32.xlu0 %v881, 104
        %v1216 = vpop.permute.xlu0 %1215
        %v1218 = vsel %vm884, %v1216, 0
        %v1221 = vsel %vm884, %v1212, 0
        %1223 = vmatprep.subr.bf16.mxu0 0
        %1224 = vmatpush1.bf16.xpose.msra.mxu0 %v1221
        %1225 = vmatprep.subr.bf16.mxu0 0
        %1226 = vmatpush1.bf16.xpose.msra.mxu0 0
        %1227 = vmatprep.subr.bf16.mxu0 0
        %1228 = vmatpush1.bf16.xpose.msra.mxu0 0
        %1229 = vmatprep.subr.bf16.mxu0 0
        %1230 = vmatpush1.bf16.xpose.msra.mxu0 0
        %1231 = vmatprep.subr.bf16.mxu0 0
        %1232 = vmatpush1.bf16.xpose.msra.mxu0 0
        %1233 = vmatprep.subr.bf16.mxu0 0
        %1234 = vmatpush1.bf16.xpose.msra.mxu0 0
        %1235 = vmatprep.subr.bf16.mxu0 0
        %1236 = vmatpush1.bf16.xpose.msra.mxu0 0
        %1237 = vmatprep.subr.bf16.mxu0 0
        %1238 = vmatpush1.bf16.xpose.msra.mxu0 0
        %1239 = vmatprep.subr.bf16.mxu0 0
        %1240 = vmatpush1.bf16.xpose.msra.mxu0 0
        %1241 = vmatprep.subr.bf16.mxu0 0
        %1242 = vmatpush1.bf16.xpose.msra.mxu0 0
        %1243 = vmatprep.subr.bf16.mxu0 0
        %1244 = vmatpush1.bf16.xpose.msra.mxu0 0
        %1245 = vmatprep.subr.bf16.mxu0 0
        %1246 = vmatpush1.bf16.xpose.msra.mxu0 0
        %1247 = vmatprep.subr.bf16.mxu0 0
        %1248 = vmatpush1.bf16.xpose.msra.mxu0 0
        %1249 = vmatprep.subr.bf16.mxu0 0
        %1250 = vmatpush1.bf16.xpose.msra.mxu0 0
        %1251 = vmatprep.subr.bf16.mxu0 0
        %1252 = vmatpush1.bf16.xpose.msra.mxu0 0
        %1253 = vmatprep.subr.bf16.mxu0 0
        %1254 = vmatpush1.bf16.xpose.msra.mxu0 0
        %1255 = vmatprep.mubr.bf16.mxu0 0
        %1256 = vmatmul.mubr.bf16.gmra.mrb[0].mxu0 %v1218
        %v1257 = vpop.f32.mrb[0].mxu0
        %v1258 = vadd.f32 0.0, %v1257
        %v1259 = vpop.f32.mrb[0].mxu0
        %v1260 = vpop.f32.mrb[0].mxu0
        %v1261 = vpop.f32.mrb[0].mxu0
        %1262 = vdwg.mxu0
        %v1263 = vsel %vm884, %v1258, -inf
        %1264 = vmax.xlane.f32.xlu0 %v1263
        %v1265 = vpop.xlane.xlu0 %1264
        %v1266 = vsub.f32 %v1258, %v1265
        %v1267 = vmul.f32 %v1266, 1.442695
        %v1268 = vpow.pop %v1267
        %v1269 = vsel %vm884, %v1268, 0.0
        %1270 = vadd.xlane.f32.xlu0 %v1269
        %v1271 = vpop.xlane.xlu0 %1270
        %v1272 = vrcp.pop %v1271
        %v1273 = vmul.f32 %v1268, %v1272
        %v1274 = vpack.c.bf16 %v1273, %v1273
        %v1276 = vsel %vm884, %v1274, 0
        %v1279 = vsel %vm946, %v1214, 0
        %1281 = vmatprep.subr.bf16.mxu0 0
        %1282 = vmatpush1.bf16.msra.mxu0 %v1279
        %1283 = vmatprep.subr.bf16.mxu0 0
        %1284 = vmatpush1.bf16.msra.mxu0 0
        %1285 = vmatprep.subr.bf16.mxu0 0
        %1286 = vmatpush1.bf16.msra.mxu0 0
        %1287 = vmatprep.subr.bf16.mxu0 0
        %1288 = vmatpush1.bf16.msra.mxu0 0
        %1289 = vmatprep.subr.bf16.mxu0 0
        %1290 = vmatpush1.bf16.msra.mxu0 0
        %1291 = vmatprep.subr.bf16.mxu0 0
        %1292 = vmatpush1.bf16.msra.mxu0 0
        %1293 = vmatprep.subr.bf16.mxu0 0
        %1294 = vmatpush1.bf16.msra.mxu0 0
        %1295 = vmatprep.subr.bf16.mxu0 0
        %1296 = vmatpush1.bf16.msra.mxu0 0
        %1297 = vmatprep.subr.bf16.mxu0 0
        %1298 = vmatpush1.bf16.msra.mxu0 0
        %1299 = vmatprep.subr.bf16.mxu0 0
        %1300 = vmatpush1.bf16.msra.mxu0 0
        %1301 = vmatprep.subr.bf16.mxu0 0
        %1302 = vmatpush1.bf16.msra.mxu0 0
        %1303 = vmatprep.subr.bf16.mxu0 0
        %1304 = vmatpush1.bf16.msra.mxu0 0
        %1305 = vmatprep.subr.bf16.mxu0 0
        %1306 = vmatpush1.bf16.msra.mxu0 0
        %1307 = vmatprep.subr.bf16.mxu0 0
        %1308 = vmatpush1.bf16.msra.mxu0 0
        %1309 = vmatprep.subr.bf16.mxu0 0
        %1310 = vmatpush1.bf16.msra.mxu0 0
        %1311 = vmatprep.subr.bf16.mxu0 0
        %1312 = vmatpush1.bf16.msra.mxu0 0
        %1313 = vmatprep.mubr.bf16.mxu0 0
        %1314 = vmatmul.mubr.bf16.gmra.mrb[0].mxu0 %v1276
        %v1315 = vpop.f32.mrb[0].mxu0
        %v1316 = vadd.f32 0.0, %v1315
        %v1317 = vpop.f32.mrb[0].mxu0
        %v1318 = vpop.f32.mrb[0].mxu0
        %v1319 = vpop.f32.mrb[0].mxu0
        %1320 = vdwg.mxu0
        %1322 = vrot.lane.b32.xlu0 %v1096, 8
        %v1323 = vpop.permute.xlu0 %1322
        %1326 = vrot.lane.b32.xlu0 %v1206, 16
        %v1327 = vpop.permute.xlu0 %1326
        %1330 = vrot.lane.b32.xlu0 %v1316, 24
        %v1331 = vpop.permute.xlu0 %1330
        %v1333 = vsel %vm884, %v985, %v1323
        %vm1334 = vcmask 130048
        %v1335 = vsel %vm1334, %v1333, %v1327
        %vm1336 = vcmask 195584
        %v1337 = vsel %vm1336, %v1335, %v1331
        %v1338 = vpack.c.bf16 %v1337, %v1337
        %v1339 = vld [vmem:[%s9] sm:$0xf]
        %v1340 = vld [vmem:[%s9 + $0x4] sm:$0xf]
        %v1341 = vld [vmem:[%s9 + $0x8] sm:$0xf]
        %v1342 = vld [vmem:[%s9 + $0xc] sm:$0xf]
        %v1347 = vunpack.c.l.b16 %v1339
        %v1348 = vunpack.c.l.b16 %v1340
        %v1349 = vunpack.c.l.b16 %v1341
        %v1350 = vunpack.c.l.b16 %v1342
        %v1351 = vpack.c.b16 %v1348, %v1347
        %v1352 = vpack.c.b16 %v1350, %v1349
        %v1356 = vsel %vm837, %v1338, 0
        %1358 = vmatprep.subr.bf16.mxu0 0
        %1359 = vmatpush1.bf16.msra.mxu0 %v1351
        %1360 = vmatprep.subr.bf16.mxu0 0
        %1361 = vmatpush1.bf16.msra.mxu0 %v1352
        %1362 = vmatprep.subr.bf16.mxu0 0
        %1363 = vmatpush1.bf16.msra.mxu0 0
        %1364 = vmatprep.subr.bf16.mxu0 0
        %1365 = vmatpush1.bf16.msra.mxu0 0
        %1366 = vmatprep.subr.bf16.mxu0 0
        %1367 = vmatpush1.bf16.msra.mxu0 0
        %1368 = vmatprep.subr.bf16.mxu0 0
        %1369 = vmatpush1.bf16.msra.mxu0 0
        %1370 = vmatprep.subr.bf16.mxu0 0
        %1371 = vmatpush1.bf16.msra.mxu0 0
        %1372 = vmatprep.subr.bf16.mxu0 0
        %1373 = vmatpush1.bf16.msra.mxu0 0
        %1374 = vmatprep.subr.bf16.mxu0 0
        %1375 = vmatpush1.bf16.msra.mxu0 0
        %1376 = vmatprep.subr.bf16.mxu0 0
        %1377 = vmatpush1.bf16.msra.mxu0 0
        %1378 = vmatprep.subr.bf16.mxu0 0
        %1379 = vmatpush1.bf16.msra.mxu0 0
        %1380 = vmatprep.subr.bf16.mxu0 0
        %1381 = vmatpush1.bf16.msra.mxu0 0
        %1382 = vmatprep.subr.bf16.mxu0 0
        %1383 = vmatpush1.bf16.msra.mxu0 0
        %1384 = vmatprep.subr.bf16.mxu0 0
        %1385 = vmatpush1.bf16.msra.mxu0 0
        %1386 = vmatprep.subr.bf16.mxu0 0
        %1387 = vmatpush1.bf16.msra.mxu0 0
        %1388 = vmatprep.subr.bf16.mxu0 0
        %1389 = vmatpush1.bf16.msra.mxu0 0
        %1390 = vmatprep.mubr.bf16.mxu0 0
        %1391 = vmatmul.mubr.bf16.gmra.mrb[0].mxu0 %v1356
        %v1392 = vpop.f32.mrb[0].mxu0
        %v1393 = vadd.f32 0.0, %v1392
        %v1394 = vpop.f32.mrb[0].mxu0
        %v1395 = vpop.f32.mrb[0].mxu0
        %v1396 = vpop.f32.mrb[0].mxu0
        %1397 = vdwg.mxu0
        %v1398 = vadd.f32 %v808, %v1393
        %v1399 = vld [vmem:[%s10] sm:$0x1]
        %v1401 = vlaneseq
        %v1402 = vshrl.u32 %v1401, 7
        %v1403 = vsub.s32 0, %v1402
        %v1404 = vrot.slane %v1399, %v1403
        %v1406 = vadd.f32 %v1398, %v1404
        %v1407 = vld [vmem:[%s11] sm:$0x1]
        %v1408 = vld [vmem:[%s12] sm:$0x1]
        %v1409 = vsel %vm837, %v1406, 0.0
        %1410 = vadd.xlane.f32.xlu0 %v1409
        %v1411 = vpop.xlane.xlu0 %1410
        %v1412 = vrcp.pop 32.0
        %v1413 = vmul.f32 %v1411, %v1412
        %v1414 = vsub.f32 %v1406, %v1413
        %v1415 = vmul.f32 %v1414, %v1414
        %v1416 = vsel %vm837, %v1415, 0.0
        %1417 = vadd.xlane.f32.xlu0 %v1416
        %v1418 = vpop.xlane.xlu0 %1417
        %v1419 = vmul.f32 %v1418, %v1412
        %v1420 = vadd.f32 %v1419, 1e-05
        %v1421 = vrsqrt.pop %v1420
        %v1422 = vmul.f32 %v1414, %v1421
        %v1424 = vlaneseq
        %v1425 = vshrl.u32 %v1424, 7
        %v1426 = vsub.s32 0, %v1425
        %v1427 = vrot.slane %v1407, %v1426
        %v1429 = vmul.f32 %v1422, %v1427
        %v1431 = vlaneseq
        %v1432 = vshrl.u32 %v1431, 7
        %v1433 = vsub.s32 0, %v1432
        %v1434 = vrot.slane %v1408, %v1433
        %v1436 = vadd.f32 %v1429, %v1434
        %v1437 = vpack.c.bf16 %v1436, %v1436
        %v1438 = vld [vmem:[%s13] sm:$0xf]
        %v1439 = vld [vmem:[%s13 + $0x4] sm:$0xf]
        %v1440 = vld [vmem:[%s13 + $0x8] sm:$0xf]
        %v1441 = vld [vmem:[%s13 + $0xc] sm:$0xf]
        %v1442 = vld [vmem:[%s14] sm:$0x1]
        %v1444 = vlaneseq
        %v1445 = vshrl.u32 %v1444, 7
        %v1446 = vsub.s32 0, %v1445
        %v1447 = vrot.slane %v1442, %v1446
        %v1453 = vunpack.c.l.b16 %v1438
        %v1454 = vunpack.c.l.b16 %v1439
        %v1455 = vunpack.c.l.b16 %v1440
        %v1456 = vunpack.c.l.b16 %v1441
        %v1457 = vpack.c.b16 %v1454, %v1453
        %v1458 = vpack.c.b16 %v1456, %v1455
        %v1462 = vsel %vm837, %v1437, 0
        %1464 = vmatprep.subr.bf16.mxu0 0
        %1465 = vmatpush1.bf16.msra.mxu0 %v1457
        %1466 = vmatprep.subr.bf16.mxu0 0
        %1467 = vmatpush1.bf16.msra.mxu0 %v1458
        %1468 = vmatprep.subr.bf16.mxu0 0
        %1469 = vmatpush1.bf16.msra.mxu0 0
        %1470 = vmatprep.subr.bf16.mxu0 0
        %1471 = vmatpush1.bf16.msra.mxu0 0
        %1472 = vmatprep.subr.bf16.mxu0 0
        %1473 = vmatpush1.bf16.msra.mxu0 0
        %1474 = vmatprep.subr.bf16.mxu0 0
        %1475 = vmatpush1.bf16.msra.mxu0 0
        %1476 = vmatprep.subr.bf16.mxu0 0
        %1477 = vmatpush1.bf16.msra.mxu0 0
        %1478 = vmatprep.subr.bf16.mxu0 0
        %1479 = vmatpush1.bf16.msra.mxu0 0
        %1480 = vmatprep.subr.bf16.mxu0 0
        %1481 = vmatpush1.bf16.msra.mxu0 0
        %1482 = vmatprep.subr.bf16.mxu0 0
        %1483 = vmatpush1.bf16.msra.mxu0 0
        %1484 = vmatprep.subr.bf16.mxu0 0
        %1485 = vmatpush1.bf16.msra.mxu0 0
        %1486 = vmatprep.subr.bf16.mxu0 0
        %1487 = vmatpush1.bf16.msra.mxu0 0
        %1488 = vmatprep.subr.bf16.mxu0 0
        %1489 = vmatpush1.bf16.msra.mxu0 0
        %1490 = vmatprep.subr.bf16.mxu0 0
        %1491 = vmatpush1.bf16.msra.mxu0 0
        %1492 = vmatprep.subr.bf16.mxu0 0
        %1493 = vmatpush1.bf16.msra.mxu0 0
        %1494 = vmatprep.subr.bf16.mxu0 0
        %1495 = vmatpush1.bf16.msra.mxu0 0
        %1496 = vmatprep.mubr.bf16.mxu0 0
        %1497 = vmatmul.mubr.bf16.gmra.mrb[0].mxu0 %v1462
        %v1498 = vpop.f32.mrb[0].mxu0
        %v1499 = vadd.f32 %v1447, %v1498
        %v1500 = vpop.f32.mrb[0].mxu0
        %v1501 = vpop.f32.mrb[0].mxu0
        %v1502 = vpop.f32.mrb[0].mxu0
        %1503 = vdwg.mxu0
        %v1504 = vmul.f32 %v1499, 0.5
        %v1505 = vmul.f32 %v1499, %v1499
        %v1506 = vmul.f32 %v1505, %v1499
        %v1507 = vmul.f32 %v1506, 0.044715
        %v1508 = vadd.f32 %v1499, %v1507
        %v1509 = vmul.f32 %v1508, 0.7978846
        %v1510 = vtanh.pop %v1509
        %v1511 = vadd.f32 %v1510, 1.0
        %v1512 = vmul.f32 %v1504, %v1511
        %v1513 = vpack.c.bf16 %v1512, %v1512
        %v1514 = vld [vmem:[%s15] sm:$0xf]
        %v1515 = vld [vmem:[%s15 + $0x4] sm:$0xf]
        %v1516 = vld [vmem:[%s15 + $0x8] sm:$0xf]
        %v1517 = vld [vmem:[%s15 + $0xc] sm:$0xf]
        %v1518 = vld [vmem:[%s15 + $0x10] sm:$0xf]
        %v1519 = vld [vmem:[%s15 + $0x14] sm:$0xf]
        %v1520 = vld [vmem:[%s15 + $0x18] sm:$0xf]
        %v1521 = vld [vmem:[%s15 + $0x1c] sm:$0xf]
        %v1522 = vld [vmem:[%s15 + $0x20] sm:$0xf]
        %v1523 = vld [vmem:[%s15 + $0x24] sm:$0xf]
        %v1524 = vld [vmem:[%s15 + $0x28] sm:$0xf]
        %v1525 = vld [vmem:[%s15 + $0x2c] sm:$0xf]
        %v1526 = vld [vmem:[%s15 + $0x30] sm:$0xf]
        %v1527 = vld [vmem:[%s15 + $0x34] sm:$0xf]
        %v1528 = vld [vmem:[%s15 + $0x38] sm:$0xf]
        %v1529 = vld [vmem:[%s15 + $0x3c] sm:$0xf]
        %v1530 = vld [vmem:[%s16] sm:$0x1]
        %v1532 = vlaneseq
        %v1533 = vshrl.u32 %v1532, 7
        %v1534 = vsub.s32 0, %v1533
        %v1535 = vrot.slane %v1530, %v1534
        %v1553 = vunpack.c.l.b16 %v1514
        %v1554 = vunpack.c.l.b16 %v1515
        %v1555 = vunpack.c.l.b16 %v1516
        %v1556 = vunpack.c.l.b16 %v1517
        %v1557 = vunpack.c.l.b16 %v1518
        %v1558 = vunpack.c.l.b16 %v1519
        %v1559 = vunpack.c.l.b16 %v1520
        %v1560 = vunpack.c.l.b16 %v1521
        %v1561 = vunpack.c.l.b16 %v1522
        %v1562 = vunpack.c.l.b16 %v1523
        %v1563 = vunpack.c.l.b16 %v1524
        %v1564 = vunpack.c.l.b16 %v1525
        %v1565 = vunpack.c.l.b16 %v1526
        %v1566 = vunpack.c.l.b16 %v1527
        %v1567 = vunpack.c.l.b16 %v1528
        %v1568 = vunpack.c.l.b16 %v1529
        %v1569 = vpack.c.b16 %v1554, %v1553
        %v1570 = vpack.c.b16 %v1556, %v1555
        %v1571 = vpack.c.b16 %v1558, %v1557
        %v1572 = vpack.c.b16 %v1560, %v1559
        %v1573 = vpack.c.b16 %v1562, %v1561
        %v1574 = vpack.c.b16 %v1564, %v1563
        %v1575 = vpack.c.b16 %v1566, %v1565
        %v1576 = vpack.c.b16 %v1568, %v1567
        %1585 = vmatprep.subr.bf16.mxu0 0
        %1586 = vmatpush1.bf16.msra.mxu0 %v1569
        %1587 = vmatprep.subr.bf16.mxu0 0
        %1588 = vmatpush1.bf16.msra.mxu0 %v1570
        %1589 = vmatprep.subr.bf16.mxu0 0
        %1590 = vmatpush1.bf16.msra.mxu0 %v1571
        %1591 = vmatprep.subr.bf16.mxu0 0
        %1592 = vmatpush1.bf16.msra.mxu0 %v1572
        %1593 = vmatprep.subr.bf16.mxu0 0
        %1594 = vmatpush1.bf16.msra.mxu0 %v1573
        %1595 = vmatprep.subr.bf16.mxu0 0
        %1596 = vmatpush1.bf16.msra.mxu0 %v1574
        %1597 = vmatprep.subr.bf16.mxu0 0
        %1598 = vmatpush1.bf16.msra.mxu0 %v1575
        %1599 = vmatprep.subr.bf16.mxu0 0
        %1600 = vmatpush1.bf16.msra.mxu0 %v1576
        %1601 = vmatprep.subr.bf16.mxu0 0
        %1602 = vmatpush1.bf16.msra.mxu0 0
        %1603 = vmatprep.subr.bf16.mxu0 0
        %1604 = vmatpush1.bf16.msra.mxu0 0
        %1605 = vmatprep.subr.bf16.mxu0 0
        %1606 = vmatpush1.bf16.msra.mxu0 0
        %1607 = vmatprep.subr.bf16.mxu0 0
        %1608 = vmatpush1.bf16.msra.mxu0 0
        %1609 = vmatprep.subr.bf16.mxu0 0
        %1610 = vmatpush1.bf16.msra.mxu0 0
        %1611 = vmatprep.subr.bf16.mxu0 0
        %1612 = vmatpush1.bf16.msra.mxu0 0
        %1613 = vmatprep.subr.bf16.mxu0 0
        %1614 = vmatpush1.bf16.msra.mxu0 0
        %1615 = vmatprep.subr.bf16.mxu0 0
        %1616 = vmatpush1.bf16.msra.mxu0 0
        %1617 = vmatprep.mubr.bf16.mxu0 0
        %1618 = vmatmul.mubr.bf16.gmra.mrb[0].mxu0 %v1513
        %v1619 = vpop.f32.mrb[0].mxu0
        %v1620 = vadd.f32 %v1535, %v1619
        %v1621 = vpop.f32.mrb[0].mxu0
        %v1622 = vpop.f32.mrb[0].mxu0
        %v1623 = vpop.f32.mrb[0].mxu0
        %1624 = vdwg.mxu0
        %v1625 = vadd.f32 %v1406, %v1620
        %1626 = vst.msk [vmem:[%s591] sm:$0xff] %vm837, %v1625
        %s1627 = sand.u32 %s417, 1
        %s1628 = scalar_lea.sflag [#allocation7], %s1627
        %s1629 = sand.u32 %s417, 1
        %s1630 = smul.addr %s1629, 8
        %s1631 = scalar_lea.vmem [#allocation11], %s1630
        // Predicated region
        $region105: #{tpu_custom_call.1} parent=87 // pred_check
          %p1632 = pneg %p427
        $region106: #{tpu_custom_call.1} parent=87 // pred_check_branch
          %1634 = sbr.rel (%p1632) target = $region108
        $region107: #{tpu_custom_call.1} parent=87 // pred_region
          %s1636 = ssub.s32 128, 128
          %1637 = vsyncadd %s1628, %s1636
          %s1638 = sadd.s32 %s38, %s37
          %s1639 = smul.addr %s1638, 128
          %s1640 = scalar_lea.hbm %s17, %s1639
          %s1642 = sshll.u32 %s1631, 4
          %s1643 = int_to_ptr.vmem [resolvable:$true] %s1642
          %1645 = dma.vmem_to_hbm [thread:$0]  %s1643, 128, %s1640, %s1628
        $region108: #{tpu_custom_call.1} parent=87 // pred_fallthru
          _
      $region88: #{tpu_custom_call.1} parent=5 // pred_fallthru
        _
      %p1646 = scmp.le.s32.totalorder 2, %s28
      // Predicated region
      $region109: #{tpu_custom_call.1} parent=5 // pred_check
        %p1647 = pneg %p1646
      $region110: #{tpu_custom_call.1} parent=5 // pred_check_branch
        %1649 = sbr.rel (%p1647) target = $region112
      $region111: #{tpu_custom_call.1} parent=5 // pred_region
        %s1650 = ssub.s32 %s28, 2
        // Predicated region
        $region113: #{tpu_custom_call.1} parent=111 // pred_check
          %p1651 = pneg %p433
        $region114: #{tpu_custom_call.1} parent=111 // pred_check_branch
          %1653 = sbr.rel (%p1651) target = $region116
        $region115: #{tpu_custom_call.1} parent=111 // pred_region
          %s1654 = sand.u32 %s418, 1
          %s1655 = scalar_lea.sflag [#allocation7], %s1654
          %s1656 = sand.u32 %s418, 1
          %s1657 = smul.addr %s1656, 8
          %s1658 = scalar_lea.vmem [#allocation11], %s1657
          %1659 = dma.done %s1655, 128
        $region116: #{tpu_custom_call.1} parent=111 // pred_fallthru
          _
      $region112: #{tpu_custom_call.1} parent=5 // pred_fallthru
        _
    $region6: #{tpu_custom_call.1} parent=1 // loop_footer
      %s32 = sadd.s32 1, %s28
    $region7: #{tpu_custom_call.1} parent=1 // loop_footer_branch
      %27 = sbr.rel target = $region3
    $region8: #{tpu_custom_call.1} parent=1 // loop_exit
      _
    %1660 = vsyncpa [#allocation6], 1
    %s1661 = scalar_lea.sflag [#allocation6], 1
    %1662 = vsyncpa %s1661, 1
    %1663 = vsyncpa [#allocation9], 1
    %1664 = vsyncpa [#allocation7], 1
    %s1665 = scalar_lea.sflag [#allocation7], 1
    %1666 = vsyncpa %s1665, 1

// kernel: tpu_custom_call.1
$region0: #{tpu_custom_call.1}
  #allocation0 [shape = 'u32[]', space=smem, size = 0x4, offset = 0x4, fixed_abs, tag = 'smem constant byte address 0x4 - core index']
  #allocation1 [shape = 'u32[144,128]{1,0:T(1,128)}', space=vmem, size = 0x12000, scoped, tag = 'internal scratch']
  #allocation2 [shape = 'bf16[8,32]{1,0:T(8,128)(2,1)}', space=vmem, size = 0x800, scoped, tag = 'scratch operand']
  #allocation3 [shape = 'bf16[4,8,8]{2,1,0:T(8,128)(2,1)}', space=vmem, size = 0x2000, scoped, tag = 'scratch operand']
  #allocation4 [shape = 'bf16[4,8,8]{2,1,0:T(8,128)(2,1)}', space=vmem, size = 0x2000, scoped, tag = 'scratch operand']
  %s0 = inlined_call_operand.vmem [shape: f32[2,8,32], index: 0, kind: input, shape index: {}]
  %s1 = inlined_call_operand.vmem [shape: f32[1,32], index: 1, kind: input, shape index: {}]
  %s2 = inlined_call_operand.vmem [shape: f32[1,32], index: 2, kind: input, shape index: {}]
  %s3 = inlined_call_operand.vmem [shape: bf16[1,32,32], index: 3, kind: input, shape index: {}]
  %s4 = inlined_call_operand.hbm [shape: f32[1,1,32], index: 4, kind: input, shape index: {}]
  %s5 = inlined_call_operand.vmem [shape: bf16[1,32,32], index: 5, kind: input, shape index: {}]
  %s6 = inlined_call_operand.hbm [shape: f32[1,1,32], index: 6, kind: input, shape index: {}]
  %s7 = inlined_call_operand.vmem [shape: bf16[1,32,32], index: 7, kind: input, shape index: {}]
  %s8 = inlined_call_operand.hbm [shape: f32[1,1,32], index: 8, kind: input, shape index: {}]
  %s9 = inlined_call_operand.vmem [shape: bf16[1,32,32], index: 9, kind: input, shape index: {}]
  %s10 = inlined_call_operand.vmem [shape: f32[1,32], index: 10, kind: input, shape index: {}]
  %s11 = inlined_call_operand.vmem [shape: f32[1,32], index: 11, kind: input, shape index: {}]
  %s12 = inlined_call_operand.vmem [shape: f32[1,32], index: 12, kind: input, shape index: {}]
  %s13 = inlined_call_operand.vmem [shape: bf16[32,128], index: 13, kind: input, shape index: {}]
  %s14 = inlined_call_operand.vmem [shape: f32[1,128], index: 14, kind: input, shape index: {}]
  %s15 = inlined_call_operand.vmem [shape: bf16[128,32], index: 15, kind: input, shape index: {}]
  %s16 = inlined_call_operand.vmem [shape: f32[1,32], index: 16, kind: input, shape index: {}]
  %s17 = inlined_call_operand.hbm [shape: f32[2,8,32], index: 17, kind: output, shape index: {}]
  %s18 = sld [smem:[#allocation0]]
  $region117: #{tpu_custom_call.1} parent=0
    _
  %s20 = ssub.s32 1, %s18
  %s21 = scalar_select 0, %s20, %s18
  $region1: #{tpu_custom_call.1} parent=0
    #allocation5 [shape = 'u8[512]{0}', space=vmem, size = 0x400, scoped, tag = 'input window, operand 4, single buffered']
    #allocation6 [shape = 's32[2]{0}', space=sflag, size = 0x8, scoped, tag = 'scoped memory for tpu_custom_call.1']
    #allocation7 [shape = 's32[2]{0}', space=sflag, size = 0x8, scoped, tag = 'scoped memory for tpu_custom_call.1']
    #allocation8 [shape = 'u8[512]{0}', space=vmem, size = 0x400, scoped, tag = 'input window, operand 6, single buffered']
    #allocation9 [shape = 's32[1]{0}', space=sflag, size = 0x4, scoped, tag = 'scoped memory for tpu_custom_call.1']
    #allocation10 [shape = 'u8[512]{0}', space=vmem, size = 0x400, scoped, tag = 'input window, operand 8, single buffered']
    #allocation11 [shape = 'u8[8192]{0}', space=vmem, size = 0x2000, scoped, tag = 'output window, operand 0']
    %22 = vsyncpa [#allocation6], 0
    %23 = vsyncpa [#allocation9], 0
    %24 = vsyncpa [#allocation7], 0
    %s25 = scalar_lea.sflag [#allocation7], 1
    %26 = vsyncpa %s25, 0
    loop: start=0, step=1, limit=4
    $region2: #{tpu_custom_call.1} parent=1 // loop_pre_header
      _
    $region3: #{tpu_custom_call.1} parent=1 // loop_header
      %s28 = sphi 0, %s32
      %p29 = scmp.ge.s32.totalorder %s28, 4
      %s35 = sphi 0, %s47
      %s36 = sphi 0, %s43
      %s37 = sphi 0, %s35
      %s38 = sphi 0, %s36
      %s39 = sphi 0, %s37
      %s40 = sphi 0, %s38
      %s50 = sphi 0, %s52
      %s53 = sphi 0, %s50
      %s54 = sphi 0, %s53
      %s70 = sphi 0, %s54
      %s74 = sphi 0, %s74
      %s76 = sphi 0, %s74
      %s77 = sphi 0, %s76
      %s91 = sphi 0, %s77
      %s95 = sphi 0, %s95
      %s97 = sphi 0, %s95
      %s98 = sphi 0, %s97
      %s112 = sphi 0, %s98
      %s116 = sphi 0, %s116
      %s118 = sphi 0, %s116
      %s119 = sphi 0, %s118
      %s133 = sphi 0, %s119
      %s137 = sphi 0, %s137
      %s139 = sphi 0, %s137
      %s140 = sphi 0, %s139
      %s154 = sphi 0, %s140
      %s158 = sphi 0, %s158
      %s160 = sphi 0, %s158
      %s161 = sphi 0, %s160
      %s175 = sphi 0, %s161
      %s179 = sphi 0, %s179
      %s181 = sphi 0, %s179
      %s182 = sphi 0, %s181
      %s196 = sphi 0, %s182
      %s200 = sphi 0, %s200
      %s202 = sphi 0, %s200
      %s203 = sphi 0, %s202
      %s217 = sphi 0, %s203
      %s221 = sphi 0, %s221
      %s223 = sphi 0, %s221
      %s224 = sphi 0, %s223
      %s238 = sphi 0, %s224
      %s242 = sphi 0, %s242
      %s244 = sphi 0, %s242
      %s245 = sphi 0, %s244
      %s259 = sphi 0, %s245
      %s263 = sphi 0, %s263
      %s265 = sphi 0, %s263
      %s266 = sphi 0, %s265
      %s280 = sphi 0, %s266
      %s284 = sphi 0, %s284
      %s286 = sphi 0, %s284
      %s287 = sphi 0, %s286
      %s301 = sphi 0, %s287
      %s305 = sphi 0, %s305
      %s307 = sphi 0, %s305
      %s308 = sphi 0, %s307
      %s322 = sphi 0, %s308
      %s326 = sphi 0, %s326
      %s328 = sphi 0, %s326
      %s329 = sphi 0, %s328
      %s343 = sphi 0, %s329
      %s347 = sphi 0, %s347
      %s349 = sphi 0, %s347
      %s350 = sphi 0, %s349
      %s364 = sphi 0, %s350
      %s368 = sphi 0, %s368
      %s370 = sphi 0, %s368
      %s371 = sphi 0, %s370
      %s385 = sphi 0, %s371
      %s389 = sphi 0, %s389
      %s391 = sphi 0, %s389
      %s392 = sphi 0, %s391
      %s406 = sphi 0, %s392
      %s414 = sphi 0, %s416
      %s417 = sphi 0, %s414
      %s418 = sphi 0, %s417
      %s434 = sphi 0, %s418
    $region4: #{tpu_custom_call.1} parent=1 // loop_header_branch
      %31 = sbr.rel (%p29) target = $region8
    $region5: #{tpu_custom_call.1} parent=1 // loop_body
      %s33 = ssub.s32 %s28, 1
      %s34 = ssub.s32 %s28, 2
      %s41 = sadd.s32 1, %s36
      %p42 = scmp.ge.s32.totalorder %s41, 1
      %s43 = scalar_select %p42, 0, %s41
      %s44 = sadd.s32 1, %s35
      %s45 = scalar_select %p42, %s44, %s35
      %p46 = scmp.ge.s32.totalorder %s45, 2
      %s47 = scalar_select %p46, 0, %s45
      %s48 = ssub.s32 %s35, %s47
      %p49 = scmp.eq.s32.totalorder %s48, 0
      %s51 = sadd.s32 %s50, 1
      %s52 = scalar_select %p49, %s50, %s51
      %p55 = pneg %p49
      %p56 = scmp.eq.s32.totalorder %s28, 1
      %p57 = por %p55, %p56
      %p58 = scmp.ne.s32.totalorder %s50, %s53
      %p59 = scmp.eq.s32.totalorder %s28, 0
      %p60 = por %p58, %p59
      %p61 = scmp.ne.s32.totalorder %s50, %s53
      %p62 = scmp.eq.s32.totalorder %s33, 1
      %p63 = por %p61, %p62
      %p64 = scmp.ne.s32.totalorder %s53, %s54
      %p65 = scmp.eq.s32.totalorder %s33, 0
      %p66 = por %p64, %p65
      %p67 = scmp.ne.s32.totalorder %s53, %s54
      %p68 = scmp.eq.s32.totalorder %s34, 1
      %p69 = por %p67, %p68
      %p71 = scmp.ne.s32.totalorder %s54, %s70
      %p72 = scmp.eq.s32.totalorder %s34, 0
      %p73 = por %p71, %p72
      %s75 = sadd.s32 %s74, 1
      %p78 = scmp.eq.s32.totalorder %s28, 1
      %p79 = scmp.ne.s32.totalorder %s74, %s76
      %p80 = scmp.eq.s32.totalorder %s28, 0
      %p81 = por %p79, %p80
      %p82 = scmp.ne.s32.totalorder %s74, %s76
      %p83 = scmp.eq.s32.totalorder %s33, 1
      %p84 = por %p82, %p83
      %p85 = scmp.ne.s32.totalorder %s76, %s77
      %p86 = scmp.eq.s32.totalorder %s33, 0
      %p87 = por %p85, %p86
      %p88 = scmp.ne.s32.totalorder %s76, %s77
      %p89 = scmp.eq.s32.totalorder %s34, 1
      %p90 = por %p88, %p89
      %p92 = scmp.ne.s32.totalorder %s77, %s91
      %p93 = scmp.eq.s32.totalorder %s34, 0
      %p94 = por %p92, %p93
      %s96 = sadd.s32 %s95, 1
      %p99 = scmp.eq.s32.totalorder %s28, 1
      %p100 = scmp.ne.s32.totalorder %s95, %s97
      %p101 = scmp.eq.s32.totalorder %s28, 0
      %p102 = por %p100, %p101
      %p103 = scmp.ne.s32.totalorder %s95, %s97
      %p104 = scmp.eq.s32.totalorder %s33, 1
      %p105 = por %p103, %p104
      %p106 = scmp.ne.s32.totalorder %s97, %s98
      %p107 = scmp.eq.s32.totalorder %s33, 0
      %p108 = por %p106, %p107
      %p109 = scmp.ne.s32.totalorder %s97, %s98
      %p110 = scmp.eq.s32.totalorder %s34, 1
      %p111 = por %p109, %p110
      %p113 = scmp.ne.s32.totalorder %s98, %s112
      %p114 = scmp.eq.s32.totalorder %s34, 0
      %p115 = por %p113, %p114
      %s117 = sadd.s32 %s116, 1
      %p120 = scmp.eq.s32.totalorder %s28, 1
      %p121 = scmp.ne.s32.totalorder %s116, %s118
      %p122 = scmp.eq.s32.totalorder %s28, 0
      %p123 = por %p121, %p122
      %p124 = scmp.ne.s32.totalorder %s116, %s118
      %p125 = scmp.eq.s32.totalorder %s33, 1
      %p126 = por %p124, %p125
      %p127 = scmp.ne.s32.totalorder %s118, %s119
      %p128 = scmp.eq.s32.totalorder %s33, 0
      %p129 = por %p127, %p128
      %p130 = scmp.ne.s32.totalorder %s118, %s119
      %p131 = scmp.eq.s32.totalorder %s34, 1
      %p132 = por %p130, %p131
      %p134 = scmp.ne.s32.totalorder %s119, %s133
      %p135 = scmp.eq.s32.totalorder %s34, 0
      %p136 = por %p134, %p135
      %s138 = sadd.s32 %s137, 1
      %p141 = scmp.eq.s32.totalorder %s28, 1
      %p142 = scmp.ne.s32.totalorder %s137, %s139
      %p143 = scmp.eq.s32.totalorder %s28, 0
      %p144 = por %p142, %p143
      %p145 = scmp.ne.s32.totalorder %s137, %s139
      %p146 = scmp.eq.s32.totalorder %s33, 1
      %p147 = por %p145, %p146
      %p148 = scmp.ne.s32.totalorder %s139, %s140
      %p149 = scmp.eq.s32.totalorder %s33, 0
      %p150 = por %p148, %p149
      %p151 = scmp.ne.s32.totalorder %s139, %s140
      %p152 = scmp.eq.s32.totalorder %s34, 1
      %p153 = por %p151, %p152
      %p155 = scmp.ne.s32.totalorder %s140, %s154
      %p156 = scmp.eq.s32.totalorder %s34, 0
      %p157 = por %p155, %p156
      %s159 = sadd.s32 %s158, 1
      %p162 = scmp.eq.s32.totalorder %s28, 1
      %p163 = scmp.ne.s32.totalorder %s158, %s160
      %p164 = scmp.eq.s32.totalorder %s28, 0
      %p165 = por %p163, %p164
      %p166 = scmp.ne.s32.totalorder %s158, %s160
      %p167 = scmp.eq.s32.totalorder %s33, 1
      %p168 = por %p166, %p167
      %p169 = scmp.ne.s32.totalorder %s160, %s161
      %p170 = scmp.eq.s32.totalorder %s33, 0
      %p171 = por %p169, %p170
      %p172 = scmp.ne.s32.totalorder %s160, %s161
      %p173 = scmp.eq.s32.totalorder %s34, 1
      %p174 = por %p172, %p173
      %p176 = scmp.ne.s32.totalorder %s161, %s175
      %p177 = scmp.eq.s32.totalorder %s34, 0
      %p178 = por %p176, %p177
      %s180 = sadd.s32 %s179, 1
      %p183 = scmp.eq.s32.totalorder %s28, 1
      %p184 = scmp.ne.s32.totalorder %s179, %s181
      %p185 = scmp.eq.s32.totalorder %s28, 0
      %p186 = por %p184, %p185
      %p187 = scmp.ne.s32.totalorder %s179, %s181
      %p188 = scmp.eq.s32.totalorder %s33, 1
      %p189 = por %p187, %p188
      %p190 = scmp.ne.s32.totalorder %s181, %s182
      %p191 = scmp.eq.s32.totalorder %s33, 0
      %p192 = por %p190, %p191
      %p193 = scmp.ne.s32.totalorder %s181, %s182
      %p194 = scmp.eq.s32.totalorder %s34, 1
      %p195 = por %p193, %p194
      %p197 = scmp.ne.s32.totalorder %s182, %s196
      %p198 = scmp.eq.s32.totalorder %s34, 0
      %p199 = por %p197, %p198
      %s201 = sadd.s32 %s200, 1
      %p204 = scmp.eq.s32.totalorder %s28, 1
      %p205 = scmp.ne.s32.totalorder %s200, %s202
      %p206 = scmp.eq.s32.totalorder %s28, 0
      %p207 = por %p205, %p206
      %p208 = scmp.ne.s32.totalorder %s200, %s202
      %p209 = scmp.eq.s32.totalorder %s33, 1
      %p210 = por %p208, %p209
      %p211 = scmp.ne.s32.totalorder %s202, %s203
      %p212 = scmp.eq.s32.totalorder %s33, 0
      %p213 = por %p211, %p212
      %p214 = scmp.ne.s32.totalorder %s202, %s203
      %p215 = scmp.eq.s32.totalorder %s34, 1
      %p216 = por %p214, %p215
      %p218 = scmp.ne.s32.totalorder %s203, %s217
      %p219 = scmp.eq.s32.totalorder %s34, 0
      %p220 = por %p218, %p219
      %s222 = sadd.s32 %s221, 1
      %p225 = scmp.eq.s32.totalorder %s28, 1
      %p226 = scmp.ne.s32.totalorder %s221, %s223
      %p227 = scmp.eq.s32.totalorder %s28, 0
      %p228 = por %p226, %p227
      %p229 = scmp.ne.s32.totalorder %s221, %s223
      %p230 = scmp.eq.s32.totalorder %s33, 1
      %p231 = por %p229, %p230
      %p232 = scmp.ne.s32.totalorder %s223, %s224
      %p233 = scmp.eq.s32.totalorder %s33, 0
      %p234 = por %p232, %p233
      %p235 = scmp.ne.s32.totalorder %s223, %s224
      %p236 = scmp.eq.s32.totalorder %s34, 1
      %p237 = por %p235, %p236
      %p239 = scmp.ne.s32.totalorder %s224, %s238
      %p240 = scmp.eq.s32.totalorder %s34, 0
      %p241 = por %p239, %p240
      %s243 = sadd.s32 %s242, 1
      %p246 = scmp.eq.s32.totalorder %s28, 1
      %p247 = scmp.ne.s32.totalorder %s242, %s244
      %p248 = scmp.eq.s32.totalorder %s28, 0
      %p249 = por %p247, %p248
      %p250 = scmp.ne.s32.totalorder %s242, %s244
      %p251 = scmp.eq.s32.totalorder %s33, 1
      %p252 = por %p250, %p251
      %p253 = scmp.ne.s32.totalorder %s244, %s245
      %p254 = scmp.eq.s32.totalorder %s33, 0
      %p255 = por %p253, %p254
      %p256 = scmp.ne.s32.totalorder %s244, %s245
      %p257 = scmp.eq.s32.totalorder %s34, 1
      %p258 = por %p256, %p257
      %p260 = scmp.ne.s32.totalorder %s245, %s259
      %p261 = scmp.eq.s32.totalorder %s34, 0
      %p262 = por %p260, %p261
      %s264 = sadd.s32 %s263, 1
      %p267 = scmp.eq.s32.totalorder %s28, 1
      %p268 = scmp.ne.s32.totalorder %s263, %s265
      %p269 = scmp.eq.s32.totalorder %s28, 0
      %p270 = por %p268, %p269
      %p271 = scmp.ne.s32.totalorder %s263, %s265
      %p272 = scmp.eq.s32.totalorder %s33, 1
      %p273 = por %p271, %p272
      %p274 = scmp.ne.s32.totalorder %s265, %s266
      %p275 = scmp.eq.s32.totalorder %s33, 0
      %p276 = por %p274, %p275
      %p277 = scmp.ne.s32.totalorder %s265, %s266
      %p278 = scmp.eq.s32.totalorder %s34, 1
      %p279 = por %p277, %p278
      %p281 = scmp.ne.s32.totalorder %s266, %s280
      %p282 = scmp.eq.s32.totalorder %s34, 0
      %p283 = por %p281, %p282
      %s285 = sadd.s32 %s284, 1
      %p288 = scmp.eq.s32.totalorder %s28, 1
      %p289 = scmp.ne.s32.totalorder %s284, %s286
      %p290 = scmp.eq.s32.totalorder %s28, 0
      %p291 = por %p289, %p290
      %p292 = scmp.ne.s32.totalorder %s284, %s286
      %p293 = scmp.eq.s32.totalorder %s33, 1
      %p294 = por %p292, %p293
      %p295 = scmp.ne.s32.totalorder %s286, %s287
      %p296 = scmp.eq.s32.totalorder %s33, 0
      %p297 = por %p295, %p296
      %p298 = scmp.ne.s32.totalorder %s286, %s287
      %p299 = scmp.eq.s32.totalorder %s34, 1
      %p300 = por %p298, %p299
      %p302 = scmp.ne.s32.totalorder %s287, %s301
      %p303 = scmp.eq.s32.totalorder %s34, 0
      %p304 = por %p302, %p303
      %s306 = sadd.s32 %s305, 1
      %p309 = scmp.eq.s32.totalorder %s28, 1
      %p310 = scmp.ne.s32.totalorder %s305, %s307
      %p311 = scmp.eq.s32.totalorder %s28, 0
      %p312 = por %p310, %p311
      %p313 = scmp.ne.s32.totalorder %s305, %s307
      %p314 = scmp.eq.s32.totalorder %s33, 1
      %p315 = por %p313, %p314
      %p316 = scmp.ne.s32.totalorder %s307, %s308
      %p317 = scmp.eq.s32.totalorder %s33, 0
      %p318 = por %p316, %p317
      %p319 = scmp.ne.s32.totalorder %s307, %s308
      %p320 = scmp.eq.s32.totalorder %s34, 1
      %p321 = por %p319, %p320
      %p323 = scmp.ne.s32.totalorder %s308, %s322
      %p324 = scmp.eq.s32.totalorder %s34, 0
      %p325 = por %p323, %p324
      %s327 = sadd.s32 %s326, 1
      %p330 = scmp.eq.s32.totalorder %s28, 1
      %p331 = scmp.ne.s32.totalorder %s326, %s328
      %p332 = scmp.eq.s32.totalorder %s28, 0
      %p333 = por %p331, %p332
      %p334 = scmp.ne.s32.totalorder %s326, %s328
      %p335 = scmp.eq.s32.totalorder %s33, 1
      %p336 = por %p334, %p335
      %p337 = scmp.ne.s32.totalorder %s328, %s329
      %p338 = scmp.eq.s32.totalorder %s33, 0
      %p339 = por %p337, %p338
      %p340 = scmp.ne.s32.totalorder %s328, %s329
      %p341 = scmp.eq.s32.totalorder %s34, 1
      %p342 = por %p340, %p341
      %p344 = scmp.ne.s32.totalorder %s329, %s343
      %p345 = scmp.eq.s32.totalorder %s34, 0
      %p346 = por %p344, %p345
      %s348 = sadd.s32 %s347, 1
      %p351 = scmp.eq.s32.totalorder %s28, 1
      %p352 = scmp.ne.s32.totalorder %s347, %s349
      %p353 = scmp.eq.s32.totalorder %s28, 0
      %p354 = por %p352, %p353
      %p355 = scmp.ne.s32.totalorder %s347, %s349
      %p356 = scmp.eq.s32.totalorder %s33, 1
      %p357 = por %p355, %p356
      %p358 = scmp.ne.s32.totalorder %s349, %s350
      %p359 = scmp.eq.s32.totalorder %s33, 0
      %p360 = por %p358, %p359
      %p361 = scmp.ne.s32.totalorder %s349, %s350
      %p362 = scmp.eq.s32.totalorder %s34, 1
      %p363 = por %p361, %p362
      %p365 = scmp.ne.s32.totalorder %s350, %s364
      %p366 = scmp.eq.s32.totalorder %s34, 0
      %p367 = por %p365, %p366
      %s369 = sadd.s32 %s368, 1
      %p372 = scmp.eq.s32.totalorder %s28, 1
      %p373 = scmp.ne.s32.totalorder %s368, %s370
      %p374 = scmp.eq.s32.totalorder %s28, 0
      %p375 = por %p373, %p374
      %p376 = scmp.ne.s32.totalorder %s368, %s370
      %p377 = scmp.eq.s32.totalorder %s33, 1
      %p378 = por %p376, %p377
      %p379 = scmp.ne.s32.totalorder %s370, %s371
      %p380 = scmp.eq.s32.totalorder %s33, 0
      %p381 = por %p379, %p380
      %p382 = scmp.ne.s32.totalorder %s370, %s371
      %p383 = scmp.eq.s32.totalorder %s34, 1
      %p384 = por %p382, %p383
      %p386 = scmp.ne.s32.totalorder %s371, %s385
      %p387 = scmp.eq.s32.totalorder %s34, 0
      %p388 = por %p386, %p387
      %s390 = sadd.s32 %s389, 1
      %p393 = scmp.eq.s32.totalorder %s28, 1
      %p394 = scmp.ne.s32.totalorder %s389, %s391
      %p395 = scmp.eq.s32.totalorder %s28, 0
      %p396 = por %p394, %p395
      %p397 = scmp.ne.s32.totalorder %s389, %s391
      %p398 = scmp.eq.s32.totalorder %s33, 1
      %p399 = por %p397, %p398
      %p400 = scmp.ne.s32.totalorder %s391, %s392
      %p401 = scmp.eq.s32.totalorder %s33, 0
      %p402 = por %p400, %p401
      %p403 = scmp.ne.s32.totalorder %s391, %s392
      %p404 = scmp.eq.s32.totalorder %s34, 1
      %p405 = por %p403, %p404
      %p407 = scmp.ne.s32.totalorder %s392, %s406
      %p408 = scmp.eq.s32.totalorder %s34, 0
      %p409 = por %p407, %p408
      %s410 = ssub.s32 %s35, %s47
      %s411 = ssub.s32 %s36, %s43
      %s412 = sor.u32 %s410, %s411
      %p413 = scmp.eq.s32.totalorder %s412, 0
      %s415 = sadd.s32 %s414, 1
      %s416 = scalar_select %p413, %s414, %s415
      %p419 = pneg %p413
      %p420 = scmp.eq.s32.totalorder %s28, 1
      %p421 = por %p419, %p420
      %p422 = scmp.ne.s32.totalorder %s414, %s417
      %p423 = scmp.eq.s32.totalorder %s28, 0
      %p424 = por %p422, %p423
      %p425 = scmp.ne.s32.totalorder %s414, %s417
      %p426 = scmp.eq.s32.totalorder %s33, 1
      %p427 = por %p425, %p426
      %p428 = scmp.ne.s32.totalorder %s417, %s418
      %p429 = scmp.eq.s32.totalorder %s33, 0
      %p430 = por %p428, %p429
      %p431 = scmp.ne.s32.totalorder %s417, %s418
      %p432 = scmp.eq.s32.totalorder %s34, 1
      %p433 = por %p431, %p432
      %p435 = scmp.ne.s32.totalorder %s418, %s434
      %p436 = scmp.eq.s32.totalorder %s34, 0
      %p437 = por %p435, %p436
      %p438 = scmp.le.s32.totalorder 1, %s28
      %p439 = scmp.lt.s32.totalorder %s28, 3
      %p440 = pnand %p438, %p439
      %p441 = pneg %p440
      // Predicated region
      $region9: #{tpu_custom_call.1} parent=5 // pred_check
        _
      $region10: #{tpu_custom_call.1} parent=5 // pred_check_branch
        %443 = sbr.rel (%p440) target = $region12
      $region11: #{tpu_custom_call.1} parent=5 // pred_region
        %s444 = ssub.s32 %s28, 1
        // Predicated region
        $region13: #{tpu_custom_call.1} parent=11 // pred_check
          %p445 = pneg %p87
        $region14: #{tpu_custom_call.1} parent=11 // pred_check_branch
          %447 = sbr.rel (%p445) target = $region16
        $region15: #{tpu_custom_call.1} parent=11 // pred_region
          _
        $region16: #{tpu_custom_call.1} parent=11 // pred_fallthru
          _
        // Predicated region
        $region17: #{tpu_custom_call.1} parent=11 // pred_check
          %p448 = pneg %p108
        $region18: #{tpu_custom_call.1} parent=11 // pred_check_branch
          %450 = sbr.rel (%p448) target = $region20
        $region19: #{tpu_custom_call.1} parent=11 // pred_region
          _
        $region20: #{tpu_custom_call.1} parent=11 // pred_fallthru
          _
        // Predicated region
        $region21: #{tpu_custom_call.1} parent=11 // pred_check
          %p451 = pneg %p129
        $region22: #{tpu_custom_call.1} parent=11 // pred_check_branch
          %453 = sbr.rel (%p451) target = $region24
        $region23: #{tpu_custom_call.1} parent=11 // pred_region
          _
        $region24: #{tpu_custom_call.1} parent=11 // pred_fallthru
          _
        // Predicated region
        $region25: #{tpu_custom_call.1} parent=11 // pred_check
          %p454 = pneg %p150
        $region26: #{tpu_custom_call.1} parent=11 // pred_check_branch
          %456 = sbr.rel (%p454) target = $region28
        $region27: #{tpu_custom_call.1} parent=11 // pred_region
          %s458 = ssub.s32 16, 16
          %459 = vsyncadd [#allocation6], %s458
          %s461 = sshll.u32 [#allocation5], 4
          %s462 = int_to_ptr.vmem [resolvable:$true] %s461
          %464 = dma.hbm_to_vmem [thread:$0]  %s4, 16, %s462, [#allocation6]
        $region28: #{tpu_custom_call.1} parent=11 // pred_fallthru
          _
        // Predicated region
        $region29: #{tpu_custom_call.1} parent=11 // pred_check
          %p465 = pneg %p171
        $region30: #{tpu_custom_call.1} parent=11 // pred_check_branch
          %467 = sbr.rel (%p465) target = $region32
        $region31: #{tpu_custom_call.1} parent=11 // pred_region
          _
        $region32: #{tpu_custom_call.1} parent=11 // pred_fallthru
          _
        // Predicated region
        $region33: #{tpu_custom_call.1} parent=11 // pred_check
          %p468 = pneg %p192
        $region34: #{tpu_custom_call.1} parent=11 // pred_check_branch
          %470 = sbr.rel (%p468) target = $region36
        $region35: #{tpu_custom_call.1} parent=11 // pred_region
          %s472 = ssub.s32 16, 16
          %473 = vsyncadd [#allocation9], %s472
          %s475 = sshll.u32 [#allocation8], 4
          %s476 = int_to_ptr.vmem [resolvable:$true] %s475
          %478 = dma.hbm_to_vmem [thread:$0]  %s6, 16, %s476, [#allocation9]
        $region36: #{tpu_custom_call.1} parent=11 // pred_fallthru
          _
        // Predicated region
        $region37: #{tpu_custom_call.1} parent=11 // pred_check
          %p479 = pneg %p213
        $region38: #{tpu_custom_call.1} parent=11 // pred_check_branch
          %481 = sbr.rel (%p479) target = $region40
        $region39: #{tpu_custom_call.1} parent=11 // pred_region
          _
        $region40: #{tpu_custom_call.1} parent=11 // pred_fallthru
          _
        // Predicated region
        $region41: #{tpu_custom_call.1} parent=11 // pred_check
          %p482 = pneg %p234
        $region42: #{tpu_custom_call.1} parent=11 // pred_check_branch
          %484 = sbr.rel (%p482) target = $region44
        $region43: #{tpu_custom_call.1} parent=11 // pred_region
          %s486 = ssub.s32 16, 16
          %487 = vsyncadd [#allocation9], %s486
          %s489 = sshll.u32 [#allocation10], 4
          %s490 = int_to_ptr.vmem [resolvable:$true] %s489
          %492 = dma.hbm_to_vmem [thread:$0]  %s8, 16, %s490, [#allocation9]
        $region44: #{tpu_custom_call.1} parent=11 // pred_fallthru
          _
        // Predicated region
        $region45: #{tpu_custom_call.1} parent=11 // pred_check
          %p493 = pneg %p255
        $region46: #{tpu_custom_call.1} parent=11 // pred_check_branch
          %495 = sbr.rel (%p493) target = $region48
        $region47: #{tpu_custom_call.1} parent=11 // pred_region
          _
        $region48: #{tpu_custom_call.1} parent=11 // pred_fallthru
          _
        // Predicated region
        $region49: #{tpu_custom_call.1} parent=11 // pred_check
          %p496 = pneg %p276
        $region50: #{tpu_custom_call.1} parent=11 // pred_check_branch
          %498 = sbr.rel (%p496) target = $region52
        $region51: #{tpu_custom_call.1} parent=11 // pred_region
          _
        $region52: #{tpu_custom_call.1} parent=11 // pred_fallthru
          _
        // Predicated region
        $region53: #{tpu_custom_call.1} parent=11 // pred_check
          %p499 = pneg %p297
        $region54: #{tpu_custom_call.1} parent=11 // pred_check_branch
          %501 = sbr.rel (%p499) target = $region56
        $region55: #{tpu_custom_call.1} parent=11 // pred_region
          _
        $region56: #{tpu_custom_call.1} parent=11 // pred_fallthru
          _
        // Predicated region
        $region57: #{tpu_custom_call.1} parent=11 // pred_check
          %p502 = pneg %p318
        $region58: #{tpu_custom_call.1} parent=11 // pred_check_branch
          %504 = sbr.rel (%p502) target = $region60
        $region59: #{tpu_custom_call.1} parent=11 // pred_region
          _
        $region60: #{tpu_custom_call.1} parent=11 // pred_fallthru
          _
        // Predicated region
        $region61: #{tpu_custom_call.1} parent=11 // pred_check
          %p505 = pneg %p339
        $region62: #{tpu_custom_call.1} parent=11 // pred_check_branch
          %507 = sbr.rel (%p505) target = $region64
        $region63: #{tpu_custom_call.1} parent=11 // pred_region
          _
        $region64: #{tpu_custom_call.1} parent=11 // pred_fallthru
          _
        // Predicated region
        $region65: #{tpu_custom_call.1} parent=11 // pred_check
          %p508 = pneg %p360
        $region66: #{tpu_custom_call.1} parent=11 // pred_check_branch
          %510 = sbr.rel (%p508) target = $region68
        $region67: #{tpu_custom_call.1} parent=11 // pred_region
          _
        $region68: #{tpu_custom_call.1} parent=11 // pred_fallthru
          _
        // Predicated region
        $region69: #{tpu_custom_call.1} parent=11 // pred_check
          %p511 = pneg %p381
        $region70: #{tpu_custom_call.1} parent=11 // pred_check_branch
          %513 = sbr.rel (%p511) target = $region72
        $region71: #{tpu_custom_call.1} parent=11 // pred_region
          _
        $region72: #{tpu_custom_call.1} parent=11 // pred_fallthru
          _
        // Predicated region
        $region73: #{tpu_custom_call.1} parent=11 // pred_check
          %p514 = pneg %p402
        $region74: #{tpu_custom_call.1} parent=11 // pred_check_branch
          %516 = sbr.rel (%p514) target = $region76
        $region75: #{tpu_custom_call.1} parent=11 // pred_region
          _
        $region76: #{tpu_custom_call.1} parent=11 // pred_fallthru
          _
      $region12: #{tpu_custom_call.1} parent=5 // pred_fallthru
        _
      %p517 = scmp.lt.s32.totalorder %s28, 2
      // Predicated region
      $region77: #{tpu_custom_call.1} parent=5 // pred_check
        %p518 = pneg %p517
      $region78: #{tpu_custom_call.1} parent=5 // pred_check_branch
        %520 = sbr.rel (%p518) target = $region80
      $region79: #{tpu_custom_call.1} parent=5 // pred_region
        // Predicated region
        $region81: #{tpu_custom_call.1} parent=79 // pred_check
          %p521 = pneg %p60
        $region82: #{tpu_custom_call.1} parent=79 // pred_check_branch
          %523 = sbr.rel (%p521) target = $region84
        $region83: #{tpu_custom_call.1} parent=79 // pred_region
          %p524 = scmp.lt.s32.totalorder %s35, 1
          %s525 = scalar_select %p524, %s35, 1
          %s526 = smul.addr %s525, 8
          %s527 = scalar_lea.vmem %s0, %s526
        $region84: #{tpu_custom_call.1} parent=79 // pred_fallthru
          _
      $region80: #{tpu_custom_call.1} parent=5 // pred_fallthru
        _
      %p528 = scmp.le.s32.totalorder 1, %s28
      %p529 = scmp.lt.s32.totalorder %s28, 3
      %p530 = pnand %p528, %p529
      %p531 = pneg %p530
      // Predicated region
      $region85: #{tpu_custom_call.1} parent=5 // pred_check
        _
      $region86: #{tpu_custom_call.1} parent=5 // pred_check_branch
        %533 = sbr.rel (%p530) target = $region88
      $region87: #{tpu_custom_call.1} parent=5 // pred_region
        %s534 = ssub.s32 %s28, 1
        // Predicated region
        $region89: #{tpu_custom_call.1} parent=87 // pred_check
          %p535 = pneg %p150
        $region90: #{tpu_custom_call.1} parent=87 // pred_check_branch
          %537 = sbr.rel (%p535) target = $region92
        $region91: #{tpu_custom_call.1} parent=87 // pred_region
          %538 = dma.done [#allocation6], 16
        $region92: #{tpu_custom_call.1} parent=87 // pred_fallthru
          _
        // Predicated region
        $region93: #{tpu_custom_call.1} parent=87 // pred_check
          %p539 = pneg %p192
        $region94: #{tpu_custom_call.1} parent=87 // pred_check_branch
          %541 = sbr.rel (%p539) target = $region96
        $region95: #{tpu_custom_call.1} parent=87 // pred_region
          %542 = dma.done [#allocation9], 16
        $region96: #{tpu_custom_call.1} parent=87 // pred_fallthru
          _
        // Predicated region
        $region97: #{tpu_custom_call.1} parent=87 // pred_check
          %p543 = pneg %p234
        $region98: #{tpu_custom_call.1} parent=87 // pred_check_branch
          %545 = sbr.rel (%p543) target = $region100
        $region99: #{tpu_custom_call.1} parent=87 // pred_region
          %546 = dma.done [#allocation9], 16
        $region100: #{tpu_custom_call.1} parent=87 // pred_fallthru
          _
        %p547 = scmp.lt.s32.totalorder %s37, 1
        %s548 = scalar_select %p547, %s37, 1
        %s549 = smul.addr %s548, 8
        %s550 = scalar_lea.vmem %s0, %s549
        %p551 = pneg %p66
        %p552 = pneg %p63
        %p553 = pneg %p87
        %p554 = pneg %p84
        %p555 = pneg %p108
        %p556 = pneg %p105
        %p557 = pneg %p129
        %p558 = pneg %p126
        %p559 = pneg %p150
        %p560 = pneg %p147
        %p561 = pneg %p171
        %p562 = pneg %p168
        %p563 = pneg %p192
        %p564 = pneg %p189
        %p565 = pneg %p213
        %p566 = pneg %p210
        %p567 = pneg %p234
        %p568 = pneg %p231
        %p569 = pneg %p255
        %p570 = pneg %p252
        %p571 = pneg %p276
        %p572 = pneg %p273
        %p573 = pneg %p297
        %p574 = pneg %p294
        %p575 = pneg %p318
        %p576 = pneg %p315
        %p577 = pneg %p339
        %p578 = pneg %p336
        %p579 = pneg %p360
        %p580 = pneg %p357
        %p581 = pneg %p381
        %p582 = pneg %p378
        %p583 = pneg %p402
        %p584 = pneg %p399
        %p585 = pneg %p430
        %p586 = pneg %p427
        %s587 = sand.u32 %s417, 1
        %s588 = scalar_lea.sflag [#allocation7], %s587
        %s589 = sand.u32 %s417, 1
        %s590 = smul.addr %s589, 8
        %s591 = scalar_lea.vmem [#allocation11], %s590
        %p592 = scmp.lt.s32.totalorder %s37, 1
        %s593 = scalar_select %p592, %s37, 1
        %s594 = smul.addr %s593, 8
        %s595 = scalar_lea.vmem %s0, %s594
        %p597 = scmp.eq.s32.totalorder %s38, 0
        // Predicated region
        $region101: #{tpu_custom_call.1} parent=87 // pred_check
          %p598 = pneg %p597
        $region102: #{tpu_custom_call.1} parent=87 // pred_check_branch
          %600 = sbr.rel (%p598) target = $region104
        $region103: #{tpu_custom_call.1} parent=87 // pred_region
          %v601 = vld [vmem:[%s595] sm:$0xff]
          %v602 = vld [vmem:[%s1] sm:$0x1]
          %v603 = vld [vmem:[%s2] sm:$0x1]
          %vm604 = vcmask 261120
          %v605 = vsel %vm604, %v601, 0.0
          %606 = vadd.xlane.f32.xlu0 %v605
          %v607 = vpop.xlane.xlu0 %606
          %v608 = vrcp.pop 32.0
          %v609 = vmul.f32 %v607, %v608
          %v610 = vsub.f32 %v601, %v609
          %v611 = vmul.f32 %v610, %v610
          %v612 = vsel %vm604, %v611, 0.0
          %613 = vadd.xlane.f32.xlu0 %v612
          %v614 = vpop.xlane.xlu0 %613
          %v615 = vmul.f32 %v614, %v608
          %v616 = vadd.f32 %v615, 1e-05
          %v617 = vrsqrt.pop %v616
          %v618 = vmul.f32 %v610, %v617
          %v620 = vlaneseq
          %v621 = vshrl.u32 %v620, 7
          %v622 = vsub.s32 0, %v621
          %v623 = vrot.slane %v602, %v622
          %v625 = vmul.f32 %v618, %v623
          %v627 = vlaneseq
          %v628 = vshrl.u32 %v627, 7
          %v629 = vsub.s32 0, %v628
          %v630 = vrot.slane %v603, %v629
          %v632 = vadd.f32 %v625, %v630
          %v633 = vpack.c.bf16 %v632, %v632
          %vm634 = vcmask 257024
          %635 = vst.msk [vmem:[#allocation2] sm:$0xf] %vm634, %v633
          %v636 = vld [vmem:[%s5] sm:$0xf]
          %v637 = vld [vmem:[%s5 + $0x4] sm:$0xf]
          %v638 = vld [vmem:[%s5 + $0x8] sm:$0xf]
          %v639 = vld [vmem:[%s5 + $0xc] sm:$0xf]
          %v640 = vld [vmem:[#allocation8] sm:$0x1]
          %v642 = vlaneseq
          %v643 = vshrl.u32 %v642, 7
          %v644 = vsub.s32 0, %v643
          %v645 = vrot.slane %v640, %v644
          %v651 = vunpack.c.l.b16 %v636
          %v652 = vunpack.c.l.b16 %v637
          %v653 = vunpack.c.l.b16 %v638
          %v654 = vunpack.c.l.b16 %v639
          %v655 = vpack.c.b16 %v652, %v651
          %v656 = vpack.c.b16 %v654, %v653
          %v660 = vsel %vm604, %v633, 0
          %662 = vmatprep.subr.bf16.mxu0 0
          %663 = vmatpush1.bf16.msra.mxu0 %v655
          %664 = vmatprep.subr.bf16.mxu0 0
          %665 = vmatpush1.bf16.msra.mxu0 %v656
          %666 = vmatprep.subr.bf16.mxu0 0
          %667 = vmatpush1.bf16.msra.mxu0 0
          %668 = vmatprep.subr.bf16.mxu0 0
          %669 = vmatpush1.bf16.msra.mxu0 0
          %670 = vmatprep.subr.bf16.mxu0 0
          %671 = vmatpush1.bf16.msra.mxu0 0
          %672 = vmatprep.subr.bf16.mxu0 0
          %673 = vmatpush1.bf16.msra.mxu0 0
          %674 = vmatprep.subr.bf16.mxu0 0
          %675 = vmatpush1.bf16.msra.mxu0 0
          %676 = vmatprep.subr.bf16.mxu0 0
          %677 = vmatpush1.bf16.msra.mxu0 0
          %678 = vmatprep.subr.bf16.mxu0 0
          %679 = vmatpush1.bf16.msra.mxu0 0
          %680 = vmatprep.subr.bf16.mxu0 0
          %681 = vmatpush1.bf16.msra.mxu0 0
          %682 = vmatprep.subr.bf16.mxu0 0
          %683 = vmatpush1.bf16.msra.mxu0 0
          %684 = vmatprep.subr.bf16.mxu0 0
          %685 = vmatpush1.bf16.msra.mxu0 0
          %686 = vmatprep.subr.bf16.mxu0 0
          %687 = vmatpush1.bf16.msra.mxu0 0
          %688 = vmatprep.subr.bf16.mxu0 0
          %689 = vmatpush1.bf16.msra.mxu0 0
          %690 = vmatprep.subr.bf16.mxu0 0
          %691 = vmatpush1.bf16.msra.mxu0 0
          %692 = vmatprep.subr.bf16.mxu0 0
          %693 = vmatpush1.bf16.msra.mxu0 0
          %694 = vmatprep.mubr.bf16.mxu0 0
          %695 = vmatmul.mubr.bf16.gmra.mrb[0].mxu0 %v660
          %v696 = vpop.f32.mrb[0].mxu0
          %v697 = vadd.f32 %v645, %v696
          %v698 = vpop.f32.mrb[0].mxu0
          %v699 = vpop.f32.mrb[0].mxu0
          %v700 = vpop.f32.mrb[0].mxu0
          %701 = vdwg.mxu0
          %v702 = vpack.c.bf16 %v697, %v697
          %v703 = vld [vmem:[%s7] sm:$0xf]
          %v704 = vld [vmem:[%s7 + $0x4] sm:$0xf]
          %v705 = vld [vmem:[%s7 + $0x8] sm:$0xf]
          %v706 = vld [vmem:[%s7 + $0xc] sm:$0xf]
          %v707 = vld [vmem:[#allocation10] sm:$0x1]
          %v709 = vlaneseq
          %v710 = vshrl.u32 %v709, 7
          %v711 = vsub.s32 0, %v710
          %v712 = vrot.slane %v707, %v711
          %v718 = vunpack.c.l.b16 %v703
          %v719 = vunpack.c.l.b16 %v704
          %v720 = vunpack.c.l.b16 %v705
          %v721 = vunpack.c.l.b16 %v706
          %v722 = vpack.c.b16 %v719, %v718
          %v723 = vpack.c.b16 %v721, %v720
          %726 = vmatprep.subr.bf16.mxu0 0
          %727 = vmatpush1.bf16.msra.mxu0 %v722
          %728 = vmatprep.subr.bf16.mxu0 0
          %729 = vmatpush1.bf16.msra.mxu0 %v723
          %730 = vmatprep.subr.bf16.mxu0 0
          %731 = vmatpush1.bf16.msra.mxu0 0
          %732 = vmatprep.subr.bf16.mxu0 0
          %733 = vmatpush1.bf16.msra.mxu0 0
          %734 = vmatprep.subr.bf16.mxu0 0
          %735 = vmatpush1.bf16.msra.mxu0 0
          %736 = vmatprep.subr.bf16.mxu0 0
          %737 = vmatpush1.bf16.msra.mxu0 0
          %738 = vmatprep.subr.bf16.mxu0 0
          %739 = vmatpush1.bf16.msra.mxu0 0
          %740 = vmatprep.subr.bf16.mxu0 0
          %741 = vmatpush1.bf16.msra.mxu0 0
          %742 = vmatprep.subr.bf16.mxu0 0
          %743 = vmatpush1.bf16.msra.mxu0 0
          %744 = vmatprep.subr.bf16.mxu0 0
          %745 = vmatpush1.bf16.msra.mxu0 0
          %746 = vmatprep.subr.bf16.mxu0 0
          %747 = vmatpush1.bf16.msra.mxu0 0
          %748 = vmatprep.subr.bf16.mxu0 0
          %749 = vmatpush1.bf16.msra.mxu0 0
          %750 = vmatprep.subr.bf16.mxu0 0
          %751 = vmatpush1.bf16.msra.mxu0 0
          %752 = vmatprep.subr.bf16.mxu0 0
          %753 = vmatpush1.bf16.msra.mxu0 0
          %754 = vmatprep.subr.bf16.mxu0 0
          %755 = vmatpush1.bf16.msra.mxu0 0
          %756 = vmatprep.subr.bf16.mxu0 0
          %757 = vmatpush1.bf16.msra.mxu0 0
          %758 = vmatprep.mubr.bf16.mxu0 0
          %759 = vmatmul.mubr.bf16.gmra.mrb[0].mxu0 %v660
          %v760 = vpop.f32.mrb[0].mxu0
          %v761 = vadd.f32 %v712, %v760
          %v762 = vpop.f32.mrb[0].mxu0
          %v763 = vpop.f32.mrb[0].mxu0
          %v764 = vpop.f32.mrb[0].mxu0
          %765 = vdwg.mxu0
          %v766 = vpack.c.bf16 %v761, %v761
          %vm767 = vcmask 60416
          %768 = vst.msk [vmem:[#allocation3] sm:$0xf] %vm767, %v702
          %769 = vst.msk [vmem:[#allocation4] sm:$0xf] %vm767, %v766
          %v771 = vunpack.c.l.b16 %v702
          %v772 = vpack.c.b16 %v771, %v771
          %773 = vrot.lane.b32.xlu0 %v772, 120
          %v774 = vpop.permute.xlu0 %773
          %s776 = scalar_lea.vmem [#allocation3], 4
          %777 = vst.msk [vmem:[%s776] sm:$0xf] %vm767, %v774
          %v779 = vunpack.c.l.b16 %v766
          %v780 = vpack.c.b16 %v779, %v779
          %781 = vrot.lane.b32.xlu0 %v780, 120
          %v782 = vpop.permute.xlu0 %781
          %s784 = scalar_lea.vmem [#allocation4], 4
          %785 = vst.msk [vmem:[%s784] sm:$0xf] %vm767, %v782
          %786 = vrot.lane.b32.xlu0 %v772, 112
          %v787 = vpop.permute.xlu0 %786
          %s789 = scalar_lea.vmem [#allocation3], 8
          %790 = vst.msk [vmem:[%s789] sm:$0xf] %vm767, %v787
          %791 = vrot.lane.b32.xlu0 %v780, 112
          %v792 = vpop.permute.xlu0 %791
          %s794 = scalar_lea.vmem [#allocation4], 8
          %795 = vst.msk [vmem:[%s794] sm:$0xf] %vm767, %v792
          %796 = vrot.lane.b32.xlu0 %v772, 104
          %v797 = vpop.permute.xlu0 %796
          %s799 = scalar_lea.vmem [#allocation3], 12
          %800 = vst.msk [vmem:[%s799] sm:$0xf] %vm767, %v797
          %801 = vrot.lane.b32.xlu0 %v780, 104
          %v802 = vpop.permute.xlu0 %801
          %s804 = scalar_lea.vmem [#allocation4], 12
          %805 = vst.msk [vmem:[%s804] sm:$0xf] %vm767, %v802
        $region104: #{tpu_custom_call.1} parent=87 // pred_fallthru
          _
        %s806 = smul.u32 %s38, 8
        %s807 = scalar_lea.vmem %s595, %s806
        %v808 = vld [vmem:[%s807] sm:$0xff]
        %s809 = sshra.s32 %s806, 3
        %s810 = sand.u32 %s806, 7
        %s811 = smul.addr %s809, 4
        %s812 = scalar_lea.vmem [#allocation2], %s811
        %v813 = vld [vmem:[%s812] sm:$0xf]
        %v814 = vld [vmem:[%s3] sm:$0xf]
        %v815 = vld [vmem:[%s3 + $0x4] sm:$0xf]
        %v816 = vld [vmem:[%s3 + $0x8] sm:$0xf]
        %v817 = vld [vmem:[%s3 + $0xc] sm:$0xf]
        %v818 = vld [vmem:[#allocation5] sm:$0x1]
        %v820 = vlaneseq
        %v821 = vshrl.u32 %v820, 7
        %v822 = vsub.s32 0, %v821
        %v823 = vrot.slane %v818, %v822
        %v829 = vunpack.c.l.b16 %v814
        %v830 = vunpack.c.l.b16 %v815
        %v831 = vunpack.c.l.b16 %v816
        %v832 = vunpack.c.l.b16 %v817
        %v833 = vpack.c.b16 %v830, %v829
        %v834 = vpack.c.b16 %v832, %v831
        %vm837 = vcmask 261120
        %v839 = vsel %vm837, %v813, 0
        %841 = vmatprep.subr.bf16.mxu0 0
        %842 = vmatpush1.bf16.msra.mxu0 %v833
        %843 = vmatprep.subr.bf16.mxu0 0
        %844 = vmatpush1.bf16.msra.mxu0 %v834
        %845 = vmatprep.subr.bf16.mxu0 0
        %846 = vmatpush1.bf16.msra.mxu0 0
        %847 = vmatprep.subr.bf16.mxu0 0
        %848 = vmatpush1.bf16.msra.mxu0 0
        %849 = vmatprep.subr.bf16.mxu0 0
        %850 = vmatpush1.bf16.msra.mxu0 0
        %851 = vmatprep.subr.bf16.mxu0 0
        %852 = vmatpush1.bf16.msra.mxu0 0
        %853 = vmatprep.subr.bf16.mxu0 0
        %854 = vmatpush1.bf16.msra.mxu0 0
        %855 = vmatprep.subr.bf16.mxu0 0
        %856 = vmatpush1.bf16.msra.mxu0 0
        %857 = vmatprep.subr.bf16.mxu0 0
        %858 = vmatpush1.bf16.msra.mxu0 0
        %859 = vmatprep.subr.bf16.mxu0 0
        %860 = vmatpush1.bf16.msra.mxu0 0
        %861 = vmatprep.subr.bf16.mxu0 0
        %862 = vmatpush1.bf16.msra.mxu0 0
        %863 = vmatprep.subr.bf16.mxu0 0
        %864 = vmatpush1.bf16.msra.mxu0 0
        %865 = vmatprep.subr.bf16.mxu0 0
        %866 = vmatpush1.bf16.msra.mxu0 0
        %867 = vmatprep.subr.bf16.mxu0 0
        %868 = vmatpush1.bf16.msra.mxu0 0
        %869 = vmatprep.subr.bf16.mxu0 0
        %870 = vmatpush1.bf16.msra.mxu0 0
        %871 = vmatprep.subr.bf16.mxu0 0
        %872 = vmatpush1.bf16.msra.mxu0 0
        %873 = vmatprep.mubr.bf16.mxu0 0
        %874 = vmatmul.mubr.bf16.gmra.mrb[0].mxu0 %v839
        %v875 = vpop.f32.mrb[0].mxu0
        %v876 = vadd.f32 %v823, %v875
        %v877 = vpop.f32.mrb[0].mxu0
        %v878 = vpop.f32.mrb[0].mxu0
        %v879 = vpop.f32.mrb[0].mxu0
        %880 = vdwg.mxu0
        %v881 = vpack.c.bf16 %v876, %v876
        %v882 = vld [vmem:[#allocation3] sm:$0xf]
        %v883 = vld [vmem:[#allocation4] sm:$0xf]
        %vm884 = vcmask 64512
        %v886 = vsel %vm884, %v881, 0
        %v889 = vsel %vm884, %v882, 0
        %891 = vmatprep.subr.bf16.mxu0 0
        %892 = vmatpush1.bf16.xpose.msra.mxu0 %v889
        %893 = vmatprep.subr.bf16.mxu0 0
        %894 = vmatpush1.bf16.xpose.msra.mxu0 0
        %895 = vmatprep.subr.bf16.mxu0 0
        %896 = vmatpush1.bf16.xpose.msra.mxu0 0
        %897 = vmatprep.subr.bf16.mxu0 0
        %898 = vmatpush1.bf16.xpose.msra.mxu0 0
        %899 = vmatprep.subr.bf16.mxu0 0
        %900 = vmatpush1.bf16.xpose.msra.mxu0 0
        %901 = vmatprep.subr.bf16.mxu0 0
        %902 = vmatpush1.bf16.xpose.msra.mxu0 0
        %903 = vmatprep.subr.bf16.mxu0 0
        %904 = vmatpush1.bf16.xpose.msra.mxu0 0
        %905 = vmatprep.subr.bf16.mxu0 0
        %906 = vmatpush1.bf16.xpose.msra.mxu0 0
        %907 = vmatprep.subr.bf16.mxu0 0
        %908 = vmatpush1.bf16.xpose.msra.mxu0 0
        %909 = vmatprep.subr.bf16.mxu0 0
        %910 = vmatpush1.bf16.xpose.msra.mxu0 0
        %911 = vmatprep.subr.bf16.mxu0 0
        %912 = vmatpush1.bf16.xpose.msra.mxu0 0
        %913 = vmatprep.subr.bf16.mxu0 0
        %914 = vmatpush1.bf16.xpose.msra.mxu0 0
        %915 = vmatprep.subr.bf16.mxu0 0
        %916 = vmatpush1.bf16.xpose.msra.mxu0 0
        %917 = vmatprep.subr.bf16.mxu0 0
        %918 = vmatpush1.bf16.xpose.msra.mxu0 0
        %919 = vmatprep.subr.bf16.mxu0 0
        %920 = vmatpush1.bf16.xpose.msra.mxu0 0
        %921 = vmatprep.subr.bf16.mxu0 0
        %922 = vmatpush1.bf16.xpose.msra.mxu0 0
        %923 = vmatprep.mubr.bf16.mxu0 0
        %924 = vmatmul.mubr.bf16.gmra.mrb[0].mxu0 %v886
        %v925 = vpop.f32.mrb[0].mxu0
        %v926 = vadd.f32 0.0, %v925
        %v927 = vpop.f32.mrb[0].mxu0
        %v928 = vpop.f32.mrb[0].mxu0
        %v929 = vpop.f32.mrb[0].mxu0
        %930 = vdwg.mxu0
        %v931 = vsel %vm884, %v926, -inf
        %932 = vmax.xlane.f32.xlu0 %v931
        %v933 = vpop.xlane.xlu0 %932
        %v934 = vsub.f32 %v926, %v933
        %v935 = vmul.f32 %v934, 1.442695
        %v936 = vpow.pop %v935
        %v937 = vsel %vm884, %v936, 0.0
        %938 = vadd.xlane.f32.xlu0 %v937
        %v939 = vpop.xlane.xlu0 %938
        %v940 = vrcp.pop %v939
        %v941 = vmul.f32 %v936, %v940
        %v942 = vpack.c.bf16 %v941, %v941
        %v944 = vsel %vm884, %v942, 0
        %vm946 = vcmask 1043456
        %v948 = vsel %vm946, %v883, 0
        %950 = vmatprep.subr.bf16.mxu0 0
        %951 = vmatpush1.bf16.msra.mxu0 %v948
        %952 = vmatprep.subr.bf16.mxu0 0
        %953 = vmatpush1.bf16.msra.mxu0 0
        %954 = vmatprep.subr.bf16.mxu0 0
        %955 = vmatpush1.bf16.msra.mxu0 0
        %956 = vmatprep.subr.bf16.mxu0 0
        %957 = vmatpush1.bf16.msra.mxu0 0
        %958 = vmatprep.subr.bf16.mxu0 0
        %959 = vmatpush1.bf16.msra.mxu0 0
        %960 = vmatprep.subr.bf16.mxu0 0
        %961 = vmatpush1.bf16.msra.mxu0 0
        %962 = vmatprep.subr.bf16.mxu0 0
        %963 = vmatpush1.bf16.msra.mxu0 0
        %964 = vmatprep.subr.bf16.mxu0 0
        %965 = vmatpush1.bf16.msra.mxu0 0
        %966 = vmatprep.subr.bf16.mxu0 0
        %967 = vmatpush1.bf16.msra.mxu0 0
        %968 = vmatprep.subr.bf16.mxu0 0
        %969 = vmatpush1.bf16.msra.mxu0 0
        %970 = vmatprep.subr.bf16.mxu0 0
        %971 = vmatpush1.bf16.msra.mxu0 0
        %972 = vmatprep.subr.bf16.mxu0 0
        %973 = vmatpush1.bf16.msra.mxu0 0
        %974 = vmatprep.subr.bf16.mxu0 0
        %975 = vmatpush1.bf16.msra.mxu0 0
        %976 = vmatprep.subr.bf16.mxu0 0
        %977 = vmatpush1.bf16.msra.mxu0 0
        %978 = vmatprep.subr.bf16.mxu0 0
        %979 = vmatpush1.bf16.msra.mxu0 0
        %980 = vmatprep.subr.bf16.mxu0 0
        %981 = vmatpush1.bf16.msra.mxu0 0
        %982 = vmatprep.mubr.bf16.mxu0 0
        %983 = vmatmul.mubr.bf16.gmra.mrb[0].mxu0 %v944
        %v984 = vpop.f32.mrb[0].mxu0
        %v985 = vadd.f32 0.0, %v984
        %v986 = vpop.f32.mrb[0].mxu0
        %v987 = vpop.f32.mrb[0].mxu0
        %v988 = vpop.f32.mrb[0].mxu0
        %989 = vdwg.mxu0
        %s990 = scalar_lea.vmem [#allocation3], 4
        %v991 = vld [vmem:[%s990] sm:$0xf]
        %s992 = scalar_lea.vmem [#allocation4], 4
        %v993 = vld [vmem:[%s992] sm:$0xf]
        %995 = vrot.lane.b32.xlu0 %v881, 120
        %v996 = vpop.permute.xlu0 %995
        %v998 = vsel %vm884, %v996, 0
        %v1001 = vsel %vm884, %v991, 0
        %1003 = vmatprep.subr.bf16.mxu0 0
        %1004 = vmatpush1.bf16.xpose.msra.mxu0 %v1001
        %1005 = vmatprep.subr.bf16.mxu0 0
        %1006 = vmatpush1.bf16.xpose.msra.mxu0 0
        %1007 = vmatprep.subr.bf16.mxu0 0
        %1008 = vmatpush1.bf16.xpose.msra.mxu0 0
        %1009 = vmatprep.subr.bf16.mxu0 0
        %1010 = vmatpush1.bf16.xpose.msra.mxu0 0
        %1011 = vmatprep.subr.bf16.mxu0 0
        %1012 = vmatpush1.bf16.xpose.msra.mxu0 0
        %1013 = vmatprep.subr.bf16.mxu0 0
        %1014 = vmatpush1.bf16.xpose.msra.mxu0 0
        %1015 = vmatprep.subr.bf16.mxu0 0
        %1016 = vmatpush1.bf16.xpose.msra.mxu0 0
        %1017 = vmatprep.subr.bf16.mxu0 0
        %1018 = vmatpush1.bf16.xpose.msra.mxu0 0
        %1019 = vmatprep.subr.bf16.mxu0 0
        %1020 = vmatpush1.bf16.xpose.msra.mxu0 0
        %1021 = vmatprep.subr.bf16.mxu0 0
        %1022 = vmatpush1.bf16.xpose.msra.mxu0 0
        %1023 = vmatprep.subr.bf16.mxu0 0
        %1024 = vmatpush1.bf16.xpose.msra.mxu0 0
        %1025 = vmatprep.subr.bf16.mxu0 0
        %1026 = vmatpush1.bf16.xpose.msra.mxu0 0
        %1027 = vmatprep.subr.bf16.mxu0 0
        %1028 = vmatpush1.bf16.xpose.msra.mxu0 0
        %1029 = vmatprep.subr.bf16.mxu0 0
        %1030 = vmatpush1.bf16.xpose.msra.mxu0 0
        %1031 = vmatprep.subr.bf16.mxu0 0
        %1032 = vmatpush1.bf16.xpose.msra.mxu0 0
        %1033 = vmatprep.subr.bf16.mxu0 0
        %1034 = vmatpush1.bf16.xpose.msra.mxu0 0
        %1035 = vmatprep.mubr.bf16.mxu0 0
        %1036 = vmatmul.mubr.bf16.gmra.mrb[0].mxu0 %v998
        %v1037 = vpop.f32.mrb[0].mxu0
        %v1038 = vadd.f32 0.0, %v1037
        %v1039 = vpop.f32.mrb[0].mxu0
        %v1040 = vpop.f32.mrb[0].mxu0
        %v1041 = vpop.f32.mrb[0].mxu0
        %1042 = vdwg.mxu0
        %v1043 = vsel %vm884, %v1038, -inf
        %1044 = vmax.xlane.f32.xlu0 %v1043
        %v1045 = vpop.xlane.xlu0 %1044
        %v1046 = vsub.f32 %v1038, %v1045
        %v1047 = vmul.f32 %v1046, 1.442695
        %v1048 = vpow.pop %v1047
        %v1049 = vsel %vm884, %v1048, 0.0
        %1050 = vadd.xlane.f32.xlu0 %v1049
        %v1051 = vpop.xlane.xlu0 %1050
        %v1052 = vrcp.pop %v1051
        %v1053 = vmul.f32 %v1048, %v1052
        %v1054 = vpack.c.bf16 %v1053, %v1053
        %v1056 = vsel %vm884, %v1054, 0
        %v1059 = vsel %vm946, %v993, 0
        %1061 = vmatprep.subr.bf16.mxu0 0
        %1062 = vmatpush1.bf16.msra.mxu0 %v1059
        %1063 = vmatprep.subr.bf16.mxu0 0
        %1064 = vmatpush1.bf16.msra.mxu0 0
        %1065 = vmatprep.subr.bf16.mxu0 0
        %1066 = vmatpush1.bf16.msra.mxu0 0
        %1067 = vmatprep.subr.bf16.mxu0 0
        %1068 = vmatpush1.bf16.msra.mxu0 0
        %1069 = vmatprep.subr.bf16.mxu0 0
        %1070 = vmatpush1.bf16.msra.mxu0 0
        %1071 = vmatprep.subr.bf16.mxu0 0
        %1072 = vmatpush1.bf16.msra.mxu0 0
        %1073 = vmatprep.subr.bf16.mxu0 0
        %1074 = vmatpush1.bf16.msra.mxu0 0
        %1075 = vmatprep.subr.bf16.mxu0 0
        %1076 = vmatpush1.bf16.msra.mxu0 0
        %1077 = vmatprep.subr.bf16.mxu0 0
        %1078 = vmatpush1.bf16.msra.mxu0 0
        %1079 = vmatprep.subr.bf16.mxu0 0
        %1080 = vmatpush1.bf16.msra.mxu0 0
        %1081 = vmatprep.subr.bf16.mxu0 0
        %1082 = vmatpush1.bf16.msra.mxu0 0
        %1083 = vmatprep.subr.bf16.mxu0 0
        %1084 = vmatpush1.bf16.msra.mxu0 0
        %1085 = vmatprep.subr.bf16.mxu0 0
        %1086 = vmatpush1.bf16.msra.mxu0 0
        %1087 = vmatprep.subr.bf16.mxu0 0
        %1088 = vmatpush1.bf16.msra.mxu0 0
        %1089 = vmatprep.subr.bf16.mxu0 0
        %1090 = vmatpush1.bf16.msra.mxu0 0
        %1091 = vmatprep.subr.bf16.mxu0 0
        %1092 = vmatpush1.bf16.msra.mxu0 0
        %1093 = vmatprep.mubr.bf16.mxu0 0
        %1094 = vmatmul.mubr.bf16.gmra.mrb[0].mxu0 %v1056
        %v1095 = vpop.f32.mrb[0].mxu0
        %v1096 = vadd.f32 0.0, %v1095
        %v1097 = vpop.f32.mrb[0].mxu0
        %v1098 = vpop.f32.mrb[0].mxu0
        %v1099 = vpop.f32.mrb[0].mxu0
        %1100 = vdwg.mxu0
        %s1101 = scalar_lea.vmem [#allocation3], 8
        %v1102 = vld [vmem:[%s1101] sm:$0xf]
        %s1103 = scalar_lea.vmem [#allocation4], 8
        %v1104 = vld [vmem:[%s1103] sm:$0xf]
        %1105 = vrot.lane.b32.xlu0 %v881, 112
        %v1106 = vpop.permute.xlu0 %1105
        %v1108 = vsel %vm884, %v1106, 0
        %v1111 = vsel %vm884, %v1102, 0
        %1113 = vmatprep.subr.bf16.mxu0 0
        %1114 = vmatpush1.bf16.xpose.msra.mxu0 %v1111
        %1115 = vmatprep.subr.bf16.mxu0 0
        %1116 = vmatpush1.bf16.xpose.msra.mxu0 0
        %1117 = vmatprep.subr.bf16.mxu0 0
        %1118 = vmatpush1.bf16.xpose.msra.mxu0 0
        %1119 = vmatprep.subr.bf16.mxu0 0
        %1120 = vmatpush1.bf16.xpose.msra.mxu0 0
        %1121 = vmatprep.subr.bf16.mxu0 0
        %1122 = vmatpush1.bf16.xpose.msra.mxu0 0
        %1123 = vmatprep.subr.bf16.mxu0 0
        %1124 = vmatpush1.bf16.xpose.msra.mxu0 0
        %1125 = vmatprep.subr.bf16.mxu0 0
        %1126 = vmatpush1.bf16.xpose.msra.mxu0 0
        %1127 = vmatprep.subr.bf16.mxu0 0
        %1128 = vmatpush1.bf16.xpose.msra.mxu0 0
        %1129 = vmatprep.subr.bf16.mxu0 0
        %1130 = vmatpush1.bf16.xpose.msra.mxu0 0
        %1131 = vmatprep.subr.bf16.mxu0 0
        %1132 = vmatpush1.bf16.xpose.msra.mxu0 0
        %1133 = vmatprep.subr.bf16.mxu0 0
        %1134 = vmatpush1.bf16.xpose.msra.mxu0 0
        %1135 = vmatprep.subr.bf16.mxu0 0
        %1136 = vmatpush1.bf16.xpose.msra.mxu0 0
        %1137 = vmatprep.subr.bf16.mxu0 0
        %1138 = vmatpush1.bf16.xpose.msra.mxu0 0
        %1139 = vmatprep.subr.bf16.mxu0 0
        %1140 = vmatpush1.bf16.xpose.msra.mxu0 0
        %1141 = vmatprep.subr.bf16.mxu0 0
        %1142 = vmatpush1.bf16.xpose.msra.mxu0 0
        %1143 = vmatprep.subr.bf16.mxu0 0
        %1144 = vmatpush1.bf16.xpose.msra.mxu0 0
        %1145 = vmatprep.mubr.bf16.mxu0 0
        %1146 = vmatmul.mubr.bf16.gmra.mrb[0].mxu0 %v1108
        %v1147 = vpop.f32.mrb[0].mxu0
        %v1148 = vadd.f32 0.0, %v1147
        %v1149 = vpop.f32.mrb[0].mxu0
        %v1150 = vpop.f32.mrb[0].mxu0
        %v1151 = vpop.f32.mrb[0].mxu0
        %1152 = vdwg.mxu0
        %v1153 = vsel %vm884, %v1148, -inf
        %1154 = vmax.xlane.f32.xlu0 %v1153
        %v1155 = vpop.xlane.xlu0 %1154
        %v1156 = vsub.f32 %v1148, %v1155
        %v1157 = vmul.f32 %v1156, 1.442695
        %v1158 = vpow.pop %v1157
        %v1159 = vsel %vm884, %v1158, 0.0
        %1160 = vadd.xlane.f32.xlu0 %v1159
        %v1161 = vpop.xlane.xlu0 %1160
        %v1162 = vrcp.pop %v1161
        %v1163 = vmul.f32 %v1158, %v1162
        %v1164 = vpack.c.bf16 %v1163, %v1163
        %v1166 = vsel %vm884, %v1164, 0
        %v1169 = vsel %vm946, %v1104, 0
        %1171 = vmatprep.subr.bf16.mxu0 0
        %1172 = vmatpush1.bf16.msra.mxu0 %v1169
        %1173 = vmatprep.subr.bf16.mxu0 0
        %1174 = vmatpush1.bf16.msra.mxu0 0
        %1175 = vmatprep.subr.bf16.mxu0 0
        %1176 = vmatpush1.bf16.msra.mxu0 0
        %1177 = vmatprep.subr.bf16.mxu0 0
        %1178 = vmatpush1.bf16.msra.mxu0 0
        %1179 = vmatprep.subr.bf16.mxu0 0
        %1180 = vmatpush1.bf16.msra.mxu0 0
        %1181 = vmatprep.subr.bf16.mxu0 0
        %1182 = vmatpush1.bf16.msra.mxu0 0
        %1183 = vmatprep.subr.bf16.mxu0 0
        %1184 = vmatpush1.bf16.msra.mxu0 0
        %1185 = vmatprep.subr.bf16.mxu0 0
        %1186 = vmatpush1.bf16.msra.mxu0 0
        %1187 = vmatprep.subr.bf16.mxu0 0
        %1188 = vmatpush1.bf16.msra.mxu0 0
        %1189 = vmatprep.subr.bf16.mxu0 0
        %1190 = vmatpush1.bf16.msra.mxu0 0
        %1191 = vmatprep.subr.bf16.mxu0 0
        %1192 = vmatpush1.bf16.msra.mxu0 0
        %1193 = vmatprep.subr.bf16.mxu0 0
        %1194 = vmatpush1.bf16.msra.mxu0 0
        %1195 = vmatprep.subr.bf16.mxu0 0
        %1196 = vmatpush1.bf16.msra.mxu0 0
        %1197 = vmatprep.subr.bf16.mxu0 0
        %1198 = vmatpush1.bf16.msra.mxu0 0
        %1199 = vmatprep.subr.bf16.mxu0 0
        %1200 = vmatpush1.bf16.msra.mxu0 0
        %1201 = vmatprep.subr.bf16.mxu0 0
        %1202 = vmatpush1.bf16.msra.mxu0 0
        %1203 = vmatprep.mubr.bf16.mxu0 0
        %1204 = vmatmul.mubr.bf16.gmra.mrb[0].mxu0 %v1166
        %v1205 = vpop.f32.mrb[0].mxu0
        %v1206 = vadd.f32 0.0, %v1205
        %v1207 = vpop.f32.mrb[0].mxu0
        %v1208 = vpop.f32.mrb[0].mxu0
        %v1209 = vpop.f32.mrb[0].mxu0
        %1210 = vdwg.mxu0
        %s1211 = scalar_lea.vmem [#allocation3], 12
        %v1212 = vld [vmem:[%s1211] sm:$0xf]
        %s1213 = scalar_lea.vmem [#allocation4], 12
        %v1214 = vld [vmem:[%s1213] sm:$0xf]
        %1215 = vrot.lane.b32.xlu0 %v881, 104
        %v1216 = vpop.permute.xlu0 %1215
        %v1218 = vsel %vm884, %v1216, 0
        %v1221 = vsel %vm884, %v1212, 0
        %1223 = vmatprep.subr.bf16.mxu0 0
        %1224 = vmatpush1.bf16.xpose.msra.mxu0 %v1221
        %1225 = vmatprep.subr.bf16.mxu0 0
        %1226 = vmatpush1.bf16.xpose.msra.mxu0 0
        %1227 = vmatprep.subr.bf16.mxu0 0
        %1228 = vmatpush1.bf16.xpose.msra.mxu0 0
        %1229 = vmatprep.subr.bf16.mxu0 0
        %1230 = vmatpush1.bf16.xpose.msra.mxu0 0
        %1231 = vmatprep.subr.bf16.mxu0 0
        %1232 = vmatpush1.bf16.xpose.msra.mxu0 0
        %1233 = vmatprep.subr.bf16.mxu0 0
        %1234 = vmatpush1.bf16.xpose.msra.mxu0 0
        %1235 = vmatprep.subr.bf16.mxu0 0
        %1236 = vmatpush1.bf16.xpose.msra.mxu0 0
        %1237 = vmatprep.subr.bf16.mxu0 0
        %1238 = vmatpush1.bf16.xpose.msra.mxu0 0
        %1239 = vmatprep.subr.bf16.mxu0 0
        %1240 = vmatpush1.bf16.xpose.msra.mxu0 0
        %1241 = vmatprep.subr.bf16.mxu0 0
        %1242 = vmatpush1.bf16.xpose.msra.mxu0 0
        %1243 = vmatprep.subr.bf16.mxu0 0
        %1244 = vmatpush1.bf16.xpose.msra.mxu0 0
        %1245 = vmatprep.subr.bf16.mxu0 0
        %1246 = vmatpush1.bf16.xpose.msra.mxu0 0
        %1247 = vmatprep.subr.bf16.mxu0 0
        %1248 = vmatpush1.bf16.xpose.msra.mxu0 0
        %1249 = vmatprep.subr.bf16.mxu0 0
        %1250 = vmatpush1.bf16.xpose.msra.mxu0 0
        %1251 = vmatprep.subr.bf16.mxu0 0
        %1252 = vmatpush1.bf16.xpose.msra.mxu0 0
        %1253 = vmatprep.subr.bf16.mxu0 0
        %1254 = vmatpush1.bf16.xpose.msra.mxu0 0
        %1255 = vmatprep.mubr.bf16.mxu0 0
        %1256 = vmatmul.mubr.bf16.gmra.mrb[0].mxu0 %v1218
        %v1257 = vpop.f32.mrb[0].mxu0
        %v1258 = vadd.f32 0.0, %v1257
        %v1259 = vpop.f32.mrb[0].mxu0
        %v1260 = vpop.f32.mrb[0].mxu0
        %v1261 = vpop.f32.mrb[0].mxu0
        %1262 = vdwg.mxu0
        %v1263 = vsel %vm884, %v1258, -inf
        %1264 = vmax.xlane.f32.xlu0 %v1263
        %v1265 = vpop.xlane.xlu0 %1264
        %v1266 = vsub.f32 %v1258, %v1265
        %v1267 = vmul.f32 %v1266, 1.442695
        %v1268 = vpow.pop %v1267
        %v1269 = vsel %vm884, %v1268, 0.0
        %1270 = vadd.xlane.f32.xlu0 %v1269
        %v1271 = vpop.xlane.xlu0 %1270
        %v1272 = vrcp.pop %v1271
        %v1273 = vmul.f32 %v1268, %v1272
        %v1274 = vpack.c.bf16 %v1273, %v1273
        %v1276 = vsel %vm884, %v1274, 0
        %v1279 = vsel %vm946, %v1214, 0
        %1281 = vmatprep.subr.bf16.mxu0 0
        %1282 = vmatpush1.bf16.msra.mxu0 %v1279
        %1283 = vmatprep.subr.bf16.mxu0 0
        %1284 = vmatpush1.bf16.msra.mxu0 0
        %1285 = vmatprep.subr.bf16.mxu0 0
        %1286 = vmatpush1.bf16.msra.mxu0 0
        %1287 = vmatprep.subr.bf16.mxu0 0
        %1288 = vmatpush1.bf16.msra.mxu0 0
        %1289 = vmatprep.subr.bf16.mxu0 0
        %1290 = vmatpush1.bf16.msra.mxu0 0
        %1291 = vmatprep.subr.bf16.mxu0 0
        %1292 = vmatpush1.bf16.msra.mxu0 0
        %1293 = vmatprep.subr.bf16.mxu0 0
        %1294 = vmatpush1.bf16.msra.mxu0 0
        %1295 = vmatprep.subr.bf16.mxu0 0
        %1296 = vmatpush1.bf16.msra.mxu0 0
        %1297 = vmatprep.subr.bf16.mxu0 0
        %1298 = vmatpush1.bf16.msra.mxu0 0
        %1299 = vmatprep.subr.bf16.mxu0 0
        %1300 = vmatpush1.bf16.msra.mxu0 0
        %1301 = vmatprep.subr.bf16.mxu0 0
        %1302 = vmatpush1.bf16.msra.mxu0 0
        %1303 = vmatprep.subr.bf16.mxu0 0
        %1304 = vmatpush1.bf16.msra.mxu0 0
        %1305 = vmatprep.subr.bf16.mxu0 0
        %1306 = vmatpush1.bf16.msra.mxu0 0
        %1307 = vmatprep.subr.bf16.mxu0 0
        %1308 = vmatpush1.bf16.msra.mxu0 0
        %1309 = vmatprep.subr.bf16.mxu0 0
        %1310 = vmatpush1.bf16.msra.mxu0 0
        %1311 = vmatprep.subr.bf16.mxu0 0
        %1312 = vmatpush1.bf16.msra.mxu0 0
        %1313 = vmatprep.mubr.bf16.mxu0 0
        %1314 = vmatmul.mubr.bf16.gmra.mrb[0].mxu0 %v1276
        %v1315 = vpop.f32.mrb[0].mxu0
        %v1316 = vadd.f32 0.0, %v1315
        %v1317 = vpop.f32.mrb[0].mxu0
        %v1318 = vpop.f32.mrb[0].mxu0
        %v1319 = vpop.f32.mrb[0].mxu0
        %1320 = vdwg.mxu0
        %1322 = vrot.lane.b32.xlu0 %v1096, 8
        %v1323 = vpop.permute.xlu0 %1322
        %1326 = vrot.lane.b32.xlu0 %v1206, 16
        %v1327 = vpop.permute.xlu0 %1326
        %1330 = vrot.lane.b32.xlu0 %v1316, 24
        %v1331 = vpop.permute.xlu0 %1330
        %v1333 = vsel %vm884, %v985, %v1323
        %vm1334 = vcmask 130048
        %v1335 = vsel %vm1334, %v1333, %v1327
        %vm1336 = vcmask 195584
        %v1337 = vsel %vm1336, %v1335, %v1331
        %v1338 = vpack.c.bf16 %v1337, %v1337
        %v1339 = vld [vmem:[%s9] sm:$0xf]
        %v1340 = vld [vmem:[%s9 + $0x4] sm:$0xf]
        %v1341 = vld [vmem:[%s9 + $0x8] sm:$0xf]
        %v1342 = vld [vmem:[%s9 + $0xc] sm:$0xf]
        %v1347 = vunpack.c.l.b16 %v1339
        %v1348 = vunpack.c.l.b16 %v1340
        %v1349 = vunpack.c.l.b16 %v1341
        %v1350 = vunpack.c.l.b16 %v1342
        %v1351 = vpack.c.b16 %v1348, %v1347
        %v1352 = vpack.c.b16 %v1350, %v1349
        %v1356 = vsel %vm837, %v1338, 0
        %1358 = vmatprep.subr.bf16.mxu0 0
        %1359 = vmatpush1.bf16.msra.mxu0 %v1351
        %1360 = vmatprep.subr.bf16.mxu0 0
        %1361 = vmatpush1.bf16.msra.mxu0 %v1352
        %1362 = vmatprep.subr.bf16.mxu0 0
        %1363 = vmatpush1.bf16.msra.mxu0 0
        %1364 = vmatprep.subr.bf16.mxu0 0
        %1365 = vmatpush1.bf16.msra.mxu0 0
        %1366 = vmatprep.subr.bf16.mxu0 0
        %1367 = vmatpush1.bf16.msra.mxu0 0
        %1368 = vmatprep.subr.bf16.mxu0 0
        %1369 = vmatpush1.bf16.msra.mxu0 0
        %1370 = vmatprep.subr.bf16.mxu0 0
        %1371 = vmatpush1.bf16.msra.mxu0 0
        %1372 = vmatprep.subr.bf16.mxu0 0
        %1373 = vmatpush1.bf16.msra.mxu0 0
        %1374 = vmatprep.subr.bf16.mxu0 0
        %1375 = vmatpush1.bf16.msra.mxu0 0
        %1376 = vmatprep.subr.bf16.mxu0 0
        %1377 = vmatpush1.bf16.msra.mxu0 0
        %1378 = vmatprep.subr.bf16.mxu0 0
        %1379 = vmatpush1.bf16.msra.mxu0 0
        %1380 = vmatprep.subr.bf16.mxu0 0
        %1381 = vmatpush1.bf16.msra.mxu0 0
        %1382 = vmatprep.subr.bf16.mxu0 0
        %1383 = vmatpush1.bf16.msra.mxu0 0
        %1384 = vmatprep.subr.bf16.mxu0 0
        %1385 = vmatpush1.bf16.msra.mxu0 0
        %1386 = vmatprep.subr.bf16.mxu0 0
        %1387 = vmatpush1.bf16.msra.mxu0 0
        %1388 = vmatprep.subr.bf16.mxu0 0
        %1389 = vmatpush1.bf16.msra.mxu0 0
        %1390 = vmatprep.mubr.bf16.mxu0 0
        %1391 = vmatmul.mubr.bf16.gmra.mrb[0].mxu0 %v1356
        %v1392 = vpop.f32.mrb[0].mxu0
        %v1393 = vadd.f32 0.0, %v1392
        %v1394 = vpop.f32.mrb[0].mxu0
        %v1395 = vpop.f32.mrb[0].mxu0
        %v1396 = vpop.f32.mrb[0].mxu0
        %1397 = vdwg.mxu0
        %v1398 = vadd.f32 %v808, %v1393
        %v1399 = vld [vmem:[%s10] sm:$0x1]
        %v1401 = vlaneseq
        %v1402 = vshrl.u32 %v1401, 7
        %v1403 = vsub.s32 0, %v1402
        %v1404 = vrot.slane %v1399, %v1403
        %v1406 = vadd.f32 %v1398, %v1404
        %v1407 = vld [vmem:[%s11] sm:$0x1]
        %v1408 = vld [vmem:[%s12] sm:$0x1]
        %v1409 = vsel %vm837, %v1406, 0.0
        %1410 = vadd.xlane.f32.xlu0 %v1409
        %v1411 = vpop.xlane.xlu0 %1410
        %v1412 = vrcp.pop 32.0
        %v1413 = vmul.f32 %v1411, %v1412
        %v1414 = vsub.f32 %v1406, %v1413
        %v1415 = vmul.f32 %v1414, %v1414
        %v1416 = vsel %vm837, %v1415, 0.0
        %1417 = vadd.xlane.f32.xlu0 %v1416
        %v1418 = vpop.xlane.xlu0 %1417
        %v1419 = vmul.f32 %v1418, %v1412
        %v1420 = vadd.f32 %v1419, 1e-05
        %v1421 = vrsqrt.pop %v1420
        %v1422 = vmul.f32 %v1414, %v1421
        %v1424 = vlaneseq
        %v1425 = vshrl.u32 %v1424, 7
        %v1426 = vsub.s32 0, %v1425
        %v1427 = vrot.slane %v1407, %v1426
        %v1429 = vmul.f32 %v1422, %v1427
        %v1431 = vlaneseq
        %v1432 = vshrl.u32 %v1431, 7
        %v1433 = vsub.s32 0, %v1432
        %v1434 = vrot.slane %v1408, %v1433
        %v1436 = vadd.f32 %v1429, %v1434
        %v1437 = vpack.c.bf16 %v1436, %v1436
        %v1438 = vld [vmem:[%s13] sm:$0xf]
        %v1439 = vld [vmem:[%s13 + $0x4] sm:$0xf]
        %v1440 = vld [vmem:[%s13 + $0x8] sm:$0xf]
        %v1441 = vld [vmem:[%s13 + $0xc] sm:$0xf]
        %v1442 = vld [vmem:[%s14] sm:$0x1]
        %v1444 = vlaneseq
        %v1445 = vshrl.u32 %v1444, 7
        %v1446 = vsub.s32 0, %v1445
        %v1447 = vrot.slane %v1442, %v1446
        %v1453 = vunpack.c.l.b16 %v1438
        %v1454 = vunpack.c.l.b16 %v1439
        %v1455 = vunpack.c.l.b16 %v1440
        %v1456 = vunpack.c.l.b16 %v1441
        %v1457 = vpack.c.b16 %v1454, %v1453
        %v1458 = vpack.c.b16 %v1456, %v1455
        %v1462 = vsel %vm837, %v1437, 0
        %1464 = vmatprep.subr.bf16.mxu0 0
        %1465 = vmatpush1.bf16.msra.mxu0 %v1457
        %1466 = vmatprep.subr.bf16.mxu0 0
        %1467 = vmatpush1.bf16.msra.mxu0 %v1458
        %1468 = vmatprep.subr.bf16.mxu0 0
        %1469 = vmatpush1.bf16.msra.mxu0 0
        %1470 = vmatprep.subr.bf16.mxu0 0
        %1471 = vmatpush1.bf16.msra.mxu0 0
        %1472 = vmatprep.subr.bf16.mxu0 0
        %1473 = vmatpush1.bf16.msra.mxu0 0
        %1474 = vmatprep.subr.bf16.mxu0 0
        %1475 = vmatpush1.bf16.msra.mxu0 0
        %1476 = vmatprep.subr.bf16.mxu0 0
        %1477 = vmatpush1.bf16.msra.mxu0 0
        %1478 = vmatprep.subr.bf16.mxu0 0
        %1479 = vmatpush1.bf16.msra.mxu0 0
        %1480 = vmatprep.subr.bf16.mxu0 0
        %1481 = vmatpush1.bf16.msra.mxu0 0
        %1482 = vmatprep.subr.bf16.mxu0 0
        %1483 = vmatpush1.bf16.msra.mxu0 0
        %1484 = vmatprep.subr.bf16.mxu0 0
        %1485 = vmatpush1.bf16.msra.mxu0 0
        %1486 = vmatprep.subr.bf16.mxu0 0
        %1487 = vmatpush1.bf16.msra.mxu0 0
        %1488 = vmatprep.subr.bf16.mxu0 0
        %1489 = vmatpush1.bf16.msra.mxu0 0
        %1490 = vmatprep.subr.bf16.mxu0 0
        %1491 = vmatpush1.bf16.msra.mxu0 0
        %1492 = vmatprep.subr.bf16.mxu0 0
        %1493 = vmatpush1.bf16.msra.mxu0 0
        %1494 = vmatprep.subr.bf16.mxu0 0
        %1495 = vmatpush1.bf16.msra.mxu0 0
        %1496 = vmatprep.mubr.bf16.mxu0 0
        %1497 = vmatmul.mubr.bf16.gmra.mrb[0].mxu0 %v1462
        %v1498 = vpop.f32.mrb[0].mxu0
        %v1499 = vadd.f32 %v1447, %v1498
        %v1500 = vpop.f32.mrb[0].mxu0
        %v1501 = vpop.f32.mrb[0].mxu0
        %v1502 = vpop.f32.mrb[0].mxu0
        %1503 = vdwg.mxu0
        %v1504 = vmul.f32 %v1499, 0.5
        %v1505 = vmul.f32 %v1499, %v1499
        %v1506 = vmul.f32 %v1505, %v1499
        %v1507 = vmul.f32 %v1506, 0.044715
        %v1508 = vadd.f32 %v1499, %v1507
        %v1509 = vmul.f32 %v1508, 0.7978846
        %v1510 = vtanh.pop %v1509
        %v1511 = vadd.f32 %v1510, 1.0
        %v1512 = vmul.f32 %v1504, %v1511
        %v1513 = vpack.c.bf16 %v1512, %v1512
        %v1514 = vld [vmem:[%s15] sm:$0xf]
        %v1515 = vld [vmem:[%s15 + $0x4] sm:$0xf]
        %v1516 = vld [vmem:[%s15 + $0x8] sm:$0xf]
        %v1517 = vld [vmem:[%s15 + $0xc] sm:$0xf]
        %v1518 = vld [vmem:[%s15 + $0x10] sm:$0xf]
        %v1519 = vld [vmem:[%s15 + $0x14] sm:$0xf]
        %v1520 = vld [vmem:[%s15 + $0x18] sm:$0xf]
        %v1521 = vld [vmem:[%s15 + $0x1c] sm:$0xf]
        %v1522 = vld [vmem:[%s15 + $0x20] sm:$0xf]
        %v1523 = vld [vmem:[%s15 + $0x24] sm:$0xf]
        %v1524 = vld [vmem:[%s15 + $0x28] sm:$0xf]
        %v1525 = vld [vmem:[%s15 + $0x2c] sm:$0xf]
        %v1526 = vld [vmem:[%s15 + $0x30] sm:$0xf]
        %v1527 = vld [vmem:[%s15 + $0x34] sm:$0xf]
        %v1528 = vld [vmem:[%s15 + $0x38] sm:$0xf]
        %v1529 = vld [vmem:[%s15 + $0x3c] sm:$0xf]
        %v1530 = vld [vmem:[%s16] sm:$0x1]
        %v1532 = vlaneseq
        %v1533 = vshrl.u32 %v1532, 7
        %v1534 = vsub.s32 0, %v1533
        %v1535 = vrot.slane %v1530, %v1534
        %v1553 = vunpack.c.l.b16 %v1514
        %v1554 = vunpack.c.l.b16 %v1515
        %v1555 = vunpack.c.l.b16 %v1516
        %v1556 = vunpack.c.l.b16 %v1517
        %v1557 = vunpack.c.l.b16 %v1518
        %v1558 = vunpack.c.l.b16 %v1519
        %v1559 = vunpack.c.l.b16 %v1520
        %v1560 = vunpack.c.l.b16 %v1521
        %v1561 = vunpack.c.l.b16 %v1522
        %v1562 = vunpack.c.l.b16 %v1523
        %v1563 = vunpack.c.l.b16 %v1524
        %v1564 = vunpack.c.l.b16 %v1525
        %v1565 = vunpack.c.l.b16 %v1526
        %v1566 = vunpack.c.l.b16 %v1527
        %v1567 = vunpack.c.l.b16 %v1528
        %v1568 = vunpack.c.l.b16 %v1529
        %v1569 = vpack.c.b16 %v1554, %v1553
        %v1570 = vpack.c.b16 %v1556, %v1555
        %v1571 = vpack.c.b16 %v1558, %v1557
        %v1572 = vpack.c.b16 %v1560, %v1559
        %v1573 = vpack.c.b16 %v1562, %v1561
        %v1574 = vpack.c.b16 %v1564, %v1563
        %v1575 = vpack.c.b16 %v1566, %v1565
        %v1576 = vpack.c.b16 %v1568, %v1567
        %1585 = vmatprep.subr.bf16.mxu0 0
        %1586 = vmatpush1.bf16.msra.mxu0 %v1569
        %1587 = vmatprep.subr.bf16.mxu0 0
        %1588 = vmatpush1.bf16.msra.mxu0 %v1570
        %1589 = vmatprep.subr.bf16.mxu0 0
        %1590 = vmatpush1.bf16.msra.mxu0 %v1571
        %1591 = vmatprep.subr.bf16.mxu0 0
        %1592 = vmatpush1.bf16.msra.mxu0 %v1572
        %1593 = vmatprep.subr.bf16.mxu0 0
        %1594 = vmatpush1.bf16.msra.mxu0 %v1573
        %1595 = vmatprep.subr.bf16.mxu0 0
        %1596 = vmatpush1.bf16.msra.mxu0 %v1574
        %1597 = vmatprep.subr.bf16.mxu0 0
        %1598 = vmatpush1.bf16.msra.mxu0 %v1575
        %1599 = vmatprep.subr.bf16.mxu0 0
        %1600 = vmatpush1.bf16.msra.mxu0 %v1576
        %1601 = vmatprep.subr.bf16.mxu0 0
        %1602 = vmatpush1.bf16.msra.mxu0 0
        %1603 = vmatprep.subr.bf16.mxu0 0
        %1604 = vmatpush1.bf16.msra.mxu0 0
        %1605 = vmatprep.subr.bf16.mxu0 0
        %1606 = vmatpush1.bf16.msra.mxu0 0
        %1607 = vmatprep.subr.bf16.mxu0 0
        %1608 = vmatpush1.bf16.msra.mxu0 0
        %1609 = vmatprep.subr.bf16.mxu0 0
        %1610 = vmatpush1.bf16.msra.mxu0 0
        %1611 = vmatprep.subr.bf16.mxu0 0
        %1612 = vmatpush1.bf16.msra.mxu0 0
        %1613 = vmatprep.subr.bf16.mxu0 0
        %1614 = vmatpush1.bf16.msra.mxu0 0
        %1615 = vmatprep.subr.bf16.mxu0 0
        %1616 = vmatpush1.bf16.msra.mxu0 0
        %1617 = vmatprep.mubr.bf16.mxu0 0
        %1618 = vmatmul.mubr.bf16.gmra.mrb[0].mxu0 %v1513
        %v1619 = vpop.f32.mrb[0].mxu0
        %v1620 = vadd.f32 %v1535, %v1619
        %v1621 = vpop.f32.mrb[0].mxu0
        %v1622 = vpop.f32.mrb[0].mxu0
        %v1623 = vpop.f32.mrb[0].mxu0
        %1624 = vdwg.mxu0
        %v1625 = vadd.f32 %v1406, %v1620
        %1626 = vst.msk [vmem:[%s591] sm:$0xff] %vm837, %v1625
        %s1627 = sand.u32 %s417, 1
        %s1628 = scalar_lea.sflag [#allocation7], %s1627
        %s1629 = sand.u32 %s417, 1
        %s1630 = smul.addr %s1629, 8
        %s1631 = scalar_lea.vmem [#allocation11], %s1630
        // Predicated region
        $region105: #{tpu_custom_call.1} parent=87 // pred_check
          %p1632 = pneg %p427
        $region106: #{tpu_custom_call.1} parent=87 // pred_check_branch
          %1634 = sbr.rel (%p1632) target = $region108
        $region107: #{tpu_custom_call.1} parent=87 // pred_region
          %s1636 = ssub.s32 128, 128
          %1637 = vsyncadd %s1628, %s1636
          %s1638 = sadd.s32 %s38, %s37
          %s1639 = smul.addr %s1638, 128
          %s1640 = scalar_lea.hbm %s17, %s1639
          %s1642 = sshll.u32 %s1631, 4
          %s1643 = int_to_ptr.vmem [resolvable:$true] %s1642
          %1645 = dma.vmem_to_hbm [thread:$0]  %s1643, 128, %s1640, %s1628
        $region108: #{tpu_custom_call.1} parent=87 // pred_fallthru
          _
      $region88: #{tpu_custom_call.1} parent=5 // pred_fallthru
        _
      %p1646 = scmp.le.s32.totalorder 2, %s28
      // Predicated region
      $region109: #{tpu_custom_call.1} parent=5 // pred_check
        %p1647 = pneg %p1646
      $region110: #{tpu_custom_call.1} parent=5 // pred_check_branch
        %1649 = sbr.rel (%p1647) target = $region112
      $region111: #{tpu_custom_call.1} parent=5 // pred_region
        %s1650 = ssub.s32 %s28, 2
        // Predicated region
        $region113: #{tpu_custom_call.1} parent=111 // pred_check
          %p1651 = pneg %p433
        $region114: #{tpu_custom_call.1} parent=111 // pred_check_branch
          %1653 = sbr.rel (%p1651) target = $region116
        $region115: #{tpu_custom_call.1} parent=111 // pred_region
          %s1654 = sand.u32 %s418, 1
          %s1655 = scalar_lea.sflag [#allocation7], %s1654
          %s1656 = sand.u32 %s418, 1
          %s1657 = smul.addr %s1656, 8
          %s1658 = scalar_lea.vmem [#allocation11], %s1657
          %1659 = dma.done %s1655, 128
        $region116: #{tpu_custom_call.1} parent=111 // pred_fallthru
          _
      $region112: #{tpu_custom_call.1} parent=5 // pred_fallthru
        _
    $region6: #{tpu_custom_call.1} parent=1 // loop_footer
      %s32 = sadd.s32 1, %s28
    $region7: #{tpu_custom_call.1} parent=1 // loop_footer_branch
      %27 = sbr.rel target = $region3
    $region8: #{tpu_custom_call.1} parent=1 // loop_exit
      _
    %1660 = vsyncpa [#allocation6], 1
    %s1661 = scalar_lea.sflag [#allocation6], 1
    %1662 = vsyncpa %s1661, 1
    %1663 = vsyncpa [#allocation9], 1
    %1664 = vsyncpa [#allocation7], 1
    %s1665 = scalar_lea.sflag [#allocation7], 1
    %1666 = vsyncpa %s1665, 1

</llo_original>
